<compile_context>
chip_gen: v7x
topology: tpu7x:2x2x1
jax: 0.10.0
libtpu: 0.0.40
codegen_flags: <defaults>
</compile_context>

<pallas_src>
import functools
import math

import jax
import jax.numpy as jnp
from jax.experimental import pallas as pl
from jax.experimental.pallas import tpu as pltpu


def _round_up(x, m):
    return (x + m - 1) // m * m


# ----------------------------------------------------------------------------
# Fused matmul + BN-fold + SiLU kernel (stem / blocks / head)
# ----------------------------------------------------------------------------
def _matmul_scale_bias_act_kernel(a_ref, b_ref, scale_ref, bias_ref, o_ref, *, act):
    """o = act((a @ b) * scale + bias); act is SiLU when requested."""
    acc = jnp.dot(a_ref[...], b_ref[...], preferred_element_type=jnp.float32)
    y = acc * scale_ref[...] + bias_ref[...]
    if act:
        y = y * jax.nn.sigmoid(y)  # SiLU
    o_ref[...] = y.astype(o_ref.dtype)


def matmul_scale_bias_act(a, b, scale, bias, act, *, bm=128,
                          compute_dtype=jnp.bfloat16, out_dtype=jnp.float32):
    """(M,K) @ (K,N) with fused per-channel scale/bias (folded BN) and SiLU.

    M is tiled with a cdiv grid (rows zero-padded to a multiple of the tile),
    K and N are zero-padded to multiples of 128 so loads/stores are lane-dense
    and the MXU contraction is unmasked. bf16 in, fp32 accumulation.
    """
    m, k = a.shape
    kb, n = b.shape
    assert k == kb
    kp = _round_up(k, 128)
    np_ = _round_up(n, 128)
    bm_eff = min(bm, _round_up(m, 8))
    mp = _round_up(m, bm_eff)

    a_p = a.astype(compute_dtype)
    if (mp, kp) != (m, k):
        a_p = jnp.pad(a_p, ((0, mp - m), (0, kp - k)))
    b_p = b.astype(compute_dtype)
    if (kp, np_) != (k, n):
        b_p = jnp.pad(b_p, ((0, kp - k), (0, np_ - n)))
    scale_p = jnp.pad(scale.astype(jnp.float32), (0, np_ - n)).reshape(1, np_)
    bias_p = jnp.pad(bias.astype(jnp.float32), (0, np_ - n)).reshape(1, np_)

    grid = (mp // bm_eff,)
    kern = functools.partial(_matmul_scale_bias_act_kernel, act=act)
    out = pl.pallas_call(
        kern,
        out_shape=jax.ShapeDtypeStruct((mp, np_), out_dtype),
        grid=grid,
        in_specs=[
            pl.BlockSpec((bm_eff, kp), lambda i: (i, 0)),
            pl.BlockSpec((kp, np_), lambda i: (0, 0)),
            pl.BlockSpec((1, np_), lambda i: (0, 0)),
            pl.BlockSpec((1, np_), lambda i: (0, 0)),
        ],
        out_specs=pl.BlockSpec((bm_eff, np_), lambda i: (i, 0)),
        compiler_params=pltpu.CompilerParams(dimension_semantics=("parallel",)),
    )(a_p, b_p, scale_p, bias_p)
    return out[:m, :n]


# ----------------------------------------------------------------------------
# Fused conv_head (1x1) + bn2 (+SiLU) + AdaptiveAvgPool2d(1) kernel
# ----------------------------------------------------------------------------
def _conv1x1_bn_silu_pool_kernel(x_ref, w_ref, scale_ref, bias_ref, o_ref):
    """x:(bI,L,C) bf16, w:(C,F) bf16 -> o:(bI,1,F) f32 = mean_L SiLU(BN(x@w))."""
    b_img, l, c = x_ref.shape
    x = x_ref[...].reshape(b_img * l, c)
    y = jnp.dot(x, w_ref[...], preferred_element_type=jnp.float32)
    y = y * scale_ref[...] + bias_ref[...]
    y = y * jax.nn.sigmoid(y)                                   # SiLU
    o_ref[...] = jnp.mean(y.reshape(b_img, l, -1), axis=1,
                          keepdims=True).astype(o_ref.dtype)


def conv_head_bn_pool(feat_nhwc, p):
    """(N, OH, OW, C) -> (N, F): 1x1 conv_head + folded bn2 + SiLU + avgpool."""
    n, oh, ow, c = feat_nhwc.shape
    l = oh * ow
    fdim = p["w"].shape[1]
    x = feat_nhwc.reshape(n, l, c).astype(jnp.bfloat16)
    bn = n // 2 if n % 2 == 0 else n          # >=2 grid steps when possible
    scale = p["scale"].reshape(1, fdim).astype(jnp.float32)
    shift = p["shift"].reshape(1, fdim).astype(jnp.float32)
    out = pl.pallas_call(
        _conv1x1_bn_silu_pool_kernel,
        out_shape=jax.ShapeDtypeStruct((n, 1, fdim), jnp.float32),
        grid=(n // bn,),
        in_specs=[
            pl.BlockSpec((bn, l, c), lambda i: (i, 0, 0)),
            pl.BlockSpec((c, fdim), lambda i: (0, 0)),
            pl.BlockSpec((1, fdim), lambda i: (0, 0)),
            pl.BlockSpec((1, fdim), lambda i: (0, 0)),
        ],
        out_specs=pl.BlockSpec((bn, 1, fdim), lambda i: (i, 0, 0)),
        compiler_params=pltpu.CompilerParams(dimension_semantics=("parallel",)),
    )(x, p["w"], scale, shift)
    return out[:, 0, :]


# ----------------------------------------------------------------------------
# Fused bidirectional LSTM (+ time-mean) kernel
# ----------------------------------------------------------------------------
def _bilstm_mean_kernel(x_ref, wih_ref, whh_ref, b_ref, out_ref,
                        h_sc, c_sc, acc_sc, *, hp, t_total):
    """grid = (direction, time). h/c/time-sum carried in VMEM scratch.

    Hidden is padded to hp=128 per gate so gate slices are 128-lane aligned;
    padded lanes of h/c stay exactly zero (zero-padded weights & bias).
    The per-direction mean over time of h is the only output.
    """
    t = pl.program_id(1)

    @pl.when(t == 0)
    def _init():
        h_sc[...] = jnp.zeros_like(h_sc)
        c_sc[...] = jnp.zeros_like(c_sc)
        acc_sc[...] = jnp.zeros_like(acc_sc)

    x = x_ref[0]                                   # (B, C) bf16
    h = h_sc[...]                                  # (B, HP) f32
    gates = (jnp.dot(x, wih_ref[0], preferred_element_type=jnp.float32)
             + jnp.dot(h.astype(jnp.bfloat16), whh_ref[0],
                       preferred_element_type=jnp.float32)
             + b_ref[0])                           # (B, 4*HP) f32

    i = jax.nn.sigmoid(gates[:, 0 * hp:1 * hp])    # PyTorch gate order i,f,g,o
    f = jax.nn.sigmoid(gates[:, 1 * hp:2 * hp])
    g = jnp.tanh(gates[:, 2 * hp:3 * hp])
    o = jax.nn.sigmoid(gates[:, 3 * hp:4 * hp])

    c_new = f * c_sc[...] + i * g
    h_new = o * jnp.tanh(c_new)
    c_sc[...] = c_new
    h_sc[...] = h_new
    acc_sc[...] = acc_sc[...] + h_new

    @pl.when(t == t_total - 1)
    def _finalize():
        out_ref[0] = (acc_sc[...] * (1.0 / t_total)).astype(out_ref.dtype)


def bilstm_time_mean(x_seq, p):
    """x_seq: (B, T, C) -> per-direction time-mean hidden, shape (2, B, HP)."""
    b6, seq_len, c = x_seq.shape
    hp = p["hp"]
    x_t = jnp.transpose(x_seq, (1, 0, 2)).astype(jnp.bfloat16)   # (T, B, C)

    kern = functools.partial(_bilstm_mean_kernel, hp=hp, t_total=seq_len)
    out = pl.pallas_call(
        kern,
        out_shape=jax.ShapeDtypeStruct((2, b6, hp), jnp.float32),
        grid=(2, seq_len),
        in_specs=[
            # forward reads t, backward reads T-1-t
            pl.BlockSpec((1, b6, c),
                         lambda d, s: (d * (seq_len - 1) + (1 - 2 * d) * s, 0, 0)),
            pl.BlockSpec((1, c, 4 * hp), lambda d, s: (d, 0, 0)),
            pl.BlockSpec((1, hp, 4 * hp), lambda d, s: (d, 0, 0)),
            pl.BlockSpec((1, 1, 4 * hp), lambda d, s: (d, 0, 0)),
        ],
        out_specs=pl.BlockSpec((1, b6, hp), lambda d, s: (d, 0, 0)),
        scratch_shapes=[
            pltpu.VMEM((b6, hp), jnp.float32),    # h
            pltpu.VMEM((b6, hp), jnp.float32),    # c
            pltpu.VMEM((b6, hp), jnp.float32),    # sum_t h
        ],
        compiler_params=pltpu.CompilerParams(
            dimension_semantics=("arbitrary", "arbitrary")),
    )(x_t, p["wih"], p["whh"], p["b"])
    return out


# ----------------------------------------------------------------------------
# Glue: im2col, conv block
# ----------------------------------------------------------------------------
def im2col(x_nhwc, k, stride, pad):
    x_p = jnp.pad(x_nhwc, ((0, 0), (pad, pad), (pad, pad), (0, 0)))
    n, hp_, wp_, c = x_p.shape
    oh = (hp_ - k) // stride + 1
    ow = (wp_ - k) // stride + 1
    patches = []
    for i in range(k):
        for j in range(k):
            patches.append(
                x_p[:, i:i + stride * oh:stride, j:j + stride * ow:stride, :])
    cols = jnp.concatenate(patches, axis=-1)          # (N, OH, OW, k*k*C)
    return cols.reshape(n * oh * ow, k * k * c), (n, oh, ow)


def conv_bn_silu(x_nhwc, p, stride):
    cols, (n, oh, ow) = im2col(x_nhwc, p["k"], stride, p["pad"])
    y = matmul_scale_bias_act(cols, p["w"], p["scale"], p["shift"], act=True,
                              out_dtype=jnp.bfloat16)
    return y.reshape(n, oh, ow, -1)


# ----------------------------------------------------------------------------
# Parameter construction (deterministic, eval-mode BN folded into scale/shift)
# ----------------------------------------------------------------------------
def make_conv_bn(key, cin, cout, k, pad, cin_pad=None, cout_pad=None):
    """Conv weights stored as (k*k*cin_pad, cout_pad), lane-dense padded."""
    cin_p = cin_pad or cin
    cout_p = cout_pad or cout
    k1, k2, k3, k4, k5 = jax.random.split(key, 5)
    fan_in = k * k * cin
    w = jax.random.normal(k1, (k * k, cin, cout), jnp.float32) / math.sqrt(fan_in)
    w = jnp.pad(w, ((0, 0), (0, cin_p - cin), (0, cout_p - cout)))
    w = w.reshape(k * k * cin_p, cout_p)

    gamma = 1.0 + 0.1 * jax.random.normal(k2, (cout,), jnp.float32)
    beta = 0.1 * jax.random.normal(k3, (cout,), jnp.float32)
    rmean = 0.1 * jax.random.normal(k4, (cout,), jnp.float32)
    rvar = 1.0 + 0.1 * jnp.abs(jax.random.normal(k5, (cout,), jnp.float32))
    eps = 1e-5
    scale = gamma / jnp.sqrt(rvar + eps)
    shift = beta - rmean * scale
    scale = jnp.pad(scale, (0, cout_p - cout), constant_values=1.0)
    shift = jnp.pad(shift, (0, cout_p - cout))   # 0 -> padded channels stay 0
    return {"w": w.astype(jnp.bfloat16), "scale": scale, "shift": shift,
            "k": k, "pad": pad}


def _pad_gate_cols(m, h, hp):
    """(..., 4*h) -> (..., 4*hp): zero-pad each gate block to hp lanes."""
    parts = []
    for g in range(4):
        blk = m[..., g * h:(g + 1) * h]
        parts.append(jnp.pad(blk, [(0, 0)] * (m.ndim - 1) + [(0, hp - h)]))
    return jnp.concatenate(parts, axis=-1)


def init_lstm(key, feats, hidden, hp):
    ks = jax.random.split(key, 6)

    def w(k_, shape, fan):
        return jax.random.normal(k_, shape, jnp.float32) / math.sqrt(fan)

    wih_f = w(ks[0], (feats, 4 * hidden), feats)
    whh_f = w(ks[1], (hidden, 4 * hidden), hidden)
    b_f = 0.05 * jax.random.normal(ks[2], (4 * hidden,), jnp.float32)
    wih_b = w(ks[3], (feats, 4 * hidden), feats)
    whh_b = w(ks[4], (hidden, 4 * hidden), hidden)
    b_b = 0.05 * jax.random.normal(ks[5], (4 * hidden,), jnp.float32)

    def prep_wih(m):
        return _pad_gate_cols(m, hidden, hp)                       # (C, 4hp)

    def prep_whh(m):
        m = jnp.pad(m, ((0, hp - hidden), (0, 0)))                 # (hp, 4h)
        return _pad_gate_cols(m, hidden, hp)                       # (hp, 4hp)

    def prep_b(v):
        return _pad_gate_cols(v.reshape(1, -1), hidden, hp)        # (1, 4hp)

    return {
        "wih": jnp.stack([prep_wih(wih_f), prep_wih(wih_b)]).astype(jnp.bfloat16),
        "whh": jnp.stack([prep_whh(whh_f), prep_whh(whh_b)]).astype(jnp.bfloat16),
        "b": jnp.stack([prep_b(b_f), prep_b(b_b)]).astype(jnp.float32),
        "hidden": hidden,
        "hp": hp,
    }


def init_params(key, feats, n_classes):
    assert feats % 128 == 0, "surrogate assumes 128-lane-aligned feature width"
    CP = 128
    ks = jax.random.split(key, 4)
    params = {
        # surrogate encoder (stands in for the timm EfficientNet features);
        # all cout padded to 128 lanes, padded channels are exact zeros.
        "stem":   make_conv_bn(ks[0], 3, 32, k=3, pad=1, cout_pad=CP),
        "block1": make_conv_bn(ks[1], 32, 64, k=3, pad=1, cin_pad=CP, cout_pad=CP),
        "block2": make_conv_bn(ks[2], 64, 64, k=3, pad=1, cin_pad=CP, cout_pad=CP),
        # conv_head (1x1) + bn2 (BatchNormAct2d -> BN + SiLU)
        "conv_head": make_conv_bn(ks[3], 64, feats, k=1, pad=0,
                                  cin_pad=CP, cout_pad=feats),
        "feats": feats,
    }
    hdim = feats // 2
    params["lstm"] = init_lstm(jax.random.fold_in(key, 7), feats, hdim, hp=128)

    kh1, kh2 = jax.random.split(jax.random.fold_in(key, 123), 2)
    params["head_w"] = jax.random.normal(
        kh1, (3 * feats, n_classes), jnp.float32) / math.sqrt(3 * feats)
    params["head_b"] = 0.05 * jax.random.normal(kh2, (n_classes,), jnp.float32)
    return params


# ----------------------------------------------------------------------------
# Forward pass (mirrors EfficientNet3D.forward)
# ----------------------------------------------------------------------------
def efficientnet3d_forward(x, params):
    bs, n_slice_per_c, img, _ = x.shape
    in_chans = 3
    n_slice = n_slice_per_c // in_chans
    feats = params["feats"]

    # x.view(-1, 3, img, img): group slice triplets into RGB images (NCHW)
    x = x.reshape(bs * n_slice, in_chans, img, img)
    x = jnp.transpose(x, (0, 2, 3, 1))                 # NCHW -> NHWC

    # encoder (surrogate backbone); activations stay 128-lane padded bf16
    feat = conv_bn_silu(x, params["stem"], stride=2)        # (N,  8, 8, 128)
    feat = conv_bn_silu(feat, params["block1"], stride=2)   # (N,  4, 4, 128)
    feat = conv_bn_silu(feat, params["block2"], stride=1)   # (N,  4, 4, 128)

    # conv_head + bn2 (+SiLU) + AdaptiveAvgPool2d(1), fused in one kernel
    pooled = conv_head_bn_pool(feat, params["conv_head"])   # (N, F) f32

    # reshape to sequences; bidirectional LSTM + mean over time fused in one call
    seq = pooled.reshape(bs * 3, n_slice // 3, feats)          # (bs*3, T, F)
    hmean = bilstm_time_mean(seq, params["lstm"])              # (2, bs*3, HP)

    hdim = params["lstm"]["hidden"]
    lstm_feat = jnp.concatenate(
        [hmean[0, :, :hdim], hmean[1, :, :hdim]], axis=-1)     # (bs*3, 2*hdim)
    flat = lstm_feat.reshape(bs, 3 * feats)                    # (bs, 3*F)

    # head (Dropout(0.1) is identity in eval mode); N padded to 128 and sliced
    ones = jnp.ones((params["head_w"].shape[1],), jnp.float32)
    logits = matmul_scale_bias_act(flat, params["head_w"], ones,
                                   params["head_b"], act=False)
    return logits


if __name__ == "__main__":
    bs, n_slice_per_c, img = 2, 18, 16     # 18 slices -> 6 RGB images / sample
    feats, n_classes = 128, 75

    params = init_params(jax.random.PRNGKey(1), feats=feats, n_classes=n_classes)
    x = jax.random.normal(jax.random.PRNGKey(0),
                          (bs, n_slice_per_c, img, img), jnp.float32)

    fwd = jax.jit(lambda inp: efficientnet3d_forward(inp, params))
    out = fwd(x)
    jax.block_until_ready(out)
    assert out.shape == (bs, n_classes), out.shape
    assert bool(jnp.all(jnp.isfinite(out)))
    print("KERNEL_OK")
</pallas_src>

<mosaic_0001>
module attributes {stable_mosaic.version = 11 : i64} {
  func.func @_matmul_scale_bias_act_kernel(%arg0: i32, %arg1: memref<128x128xbf16, #tpu.memory_space<vmem>>, %arg2: memref<128x128xbf16, #tpu.memory_space<vmem>>, %arg3: memref<1x128xf32, #tpu.memory_space<vmem>>, %arg4: memref<1x128xf32, #tpu.memory_space<vmem>>, %arg5: memref<128x128xbf16, #tpu.memory_space<vmem>>) attributes {dimension_semantics = [#tpu.dimension_semantics<parallel>], iteration_bounds = array<i64: 6>, scalar_prefetch = 0 : i64, scratch_operands = 0 : i64, tpu.core_type = #tpu.core_type<tc>, window_params = [{transform_indices = @transform_0, window_bounds = array<i64: 128, 128>}, {pipeline_mode = #tpu.pipeline_mode<synchronous>, transform_indices = @transform_1, window_bounds = array<i64: 128, 128>}, {pipeline_mode = #tpu.pipeline_mode<synchronous>, transform_indices = @transform_2, window_bounds = array<i64: 1, 128>}, {pipeline_mode = #tpu.pipeline_mode<synchronous>, transform_indices = @transform_3, window_bounds = array<i64: 1, 128>}, {transform_indices = @transform_4, window_bounds = array<i64: 128, 128>}]} {
    %c0 = arith.constant 0 : index
    %c0_0 = arith.constant 0 : index
    %0 = vector.load %arg1[%c0, %c0_0] : memref<128x128xbf16, #tpu.memory_space<vmem>>, vector<128x128xbf16>
    %c0_1 = arith.constant 0 : index
    %c0_2 = arith.constant 0 : index
    %1 = vector.load %arg2[%c0_1, %c0_2] : memref<128x128xbf16, #tpu.memory_space<vmem>>, vector<128x128xbf16>
    %cst = arith.constant dense<0.000000e+00> : vector<128x128xf32>
    %2 = tpu.matmul %0, %1, %cst {dimension_numbers = #tpu.dot_dimension_numbers<[1], [0], [0], [1], [0, 0, 1, 1], [], []>} : vector<128x128xbf16>, vector<128x128xbf16>, vector<128x128xf32> -> vector<128x128xf32>
    %c0_3 = arith.constant 0 : index
    %c0_4 = arith.constant 0 : index
    %3 = vector.load %arg3[%c0_3, %c0_4] : memref<1x128xf32, #tpu.memory_space<vmem>>, vector<1x128xf32>
    %4 = vector.broadcast %3 : vector<1x128xf32> to vector<128x128xf32>
    %5 = arith.mulf %2, %4 : vector<128x128xf32>
    %c0_5 = arith.constant 0 : index
    %c0_6 = arith.constant 0 : index
    %6 = vector.load %arg4[%c0_5, %c0_6] : memref<1x128xf32, #tpu.memory_space<vmem>>, vector<1x128xf32>
    %7 = vector.broadcast %6 : vector<1x128xf32> to vector<128x128xf32>
    %8 = arith.addf %5, %7 : vector<128x128xf32>
    %9 = arith.negf %8 : vector<128x128xf32>
    %10 = math.exp %9 : vector<128x128xf32>
    %cst_7 = arith.constant 1.000000e+00 : f32
    %11 = vector.broadcast %cst_7 : f32 to vector<128x128xf32>
    %12 = arith.addf %11, %10 : vector<128x128xf32>
    %13 = arith.divf %11, %12 : vector<128x128xf32>
    %14 = arith.mulf %8, %13 : vector<128x128xf32>
    %15 = arith.truncf %14 : vector<128x128xf32> to vector<128x128xbf16>
    %c0_8 = arith.constant 0 : index
    %c0_9 = arith.constant 0 : index
    %16 = vector.load %arg5[%c0_8, %c0_9] : memref<128x128xbf16, #tpu.memory_space<vmem>>, vector<128x128xbf16>
    tpu.vector_store %arg5[%c0_8, %c0_9], %15 {strides = array<i32>} : memref<128x128xbf16, #tpu.memory_space<vmem>>, vector<128x128xbf16>,
    return
  }
  func.func @transform_0(%arg0: i32) -> (i32, i32) {
    %c0_i32 = arith.constant 0 : i32
    %c0_i32_0 = arith.constant 0 : i32
    return %arg0, %c0_i32 : i32, i32
  }
  func.func @transform_1(%arg0: i32) -> (i32, i32) {
    %c0_i32 = arith.constant 0 : i32
    %c0_i32_0 = arith.constant 0 : i32
    %c0_i32_1 = arith.constant 0 : i32
    return %c0_i32, %c0_i32_0 : i32, i32
  }
  func.func @transform_2(%arg0: i32) -> (i32, i32) {
    %c0_i32 = arith.constant 0 : i32
    %c0_i32_0 = arith.constant 0 : i32
    %c0_i32_1 = arith.constant 0 : i32
    return %c0_i32, %c0_i32_0 : i32, i32
  }
  func.func @transform_3(%arg0: i32) -> (i32, i32) {
    %c0_i32 = arith.constant 0 : i32
    %c0_i32_0 = arith.constant 0 : i32
    %c0_i32_1 = arith.constant 0 : i32
    return %c0_i32, %c0_i32_0 : i32, i32
  }
  func.func @transform_4(%arg0: i32) -> (i32, i32) {
    %c0_i32 = arith.constant 0 : i32
    %c0_i32_0 = arith.constant 0 : i32
    return %arg0, %c0_i32 : i32, i32
  }
}

module attributes {stable_mosaic.version = 11 : i64} {
  func.func @_matmul_scale_bias_act_kernel(%arg0: i32, %arg1: memref<128x1152xbf16, #tpu.memory_space<vmem>>, %arg2: memref<1152x128xbf16, #tpu.memory_space<vmem>>, %arg3: memref<1x128xf32, #tpu.memory_space<vmem>>, %arg4: memref<1x128xf32, #tpu.memory_space<vmem>>, %arg5: memref<128x128xbf16, #tpu.memory_space<vmem>>) attributes {dimension_semantics = [#tpu.dimension_semantics<parallel>], iteration_bounds = array<i64: 2>, scalar_prefetch = 0 : i64, scratch_operands = 0 : i64, tpu.core_type = #tpu.core_type<tc>, window_params = [{transform_indices = @transform_0, window_bounds = array<i64: 128, 1152>}, {pipeline_mode = #tpu.pipeline_mode<synchronous>, transform_indices = @transform_1, window_bounds = array<i64: 1152, 128>}, {pipeline_mode = #tpu.pipeline_mode<synchronous>, transform_indices = @transform_2, window_bounds = array<i64: 1, 128>}, {pipeline_mode = #tpu.pipeline_mode<synchronous>, transform_indices = @transform_3, window_bounds = array<i64: 1, 128>}, {transform_indices = @transform_4, window_bounds = array<i64: 128, 128>}]} {
    %c0 = arith.constant 0 : index
    %c0_0 = arith.constant 0 : index
    %0 = vector.load %arg1[%c0, %c0_0] : memref<128x1152xbf16, #tpu.memory_space<vmem>>, vector<128x1152xbf16>
    %c0_1 = arith.constant 0 : index
    %c0_2 = arith.constant 0 : index
    %1 = vector.load %arg2[%c0_1, %c0_2] : memref<1152x128xbf16, #tpu.memory_space<vmem>>, vector<1152x128xbf16>
    %cst = arith.constant dense<0.000000e+00> : vector<128x128xf32>
    %2 = tpu.matmul %0, %1, %cst {dimension_numbers = #tpu.dot_dimension_numbers<[1], [0], [0], [1], [0, 0, 1, 1], [], []>} : vector<128x1152xbf16>, vector<1152x128xbf16>, vector<128x128xf32> -> vector<128x128xf32>
    %c0_3 = arith.constant 0 : index
    %c0_4 = arith.constant 0 : index
    %3 = vector.load %arg3[%c0_3, %c0_4] : memref<1x128xf32, #tpu.memory_space<vmem>>, vector<1x128xf32>
    %4 = vector.broadcast %3 : vector<1x128xf32> to vector<128x128xf32>
    %5 = arith.mulf %2, %4 : vector<128x128xf32>
    %c0_5 = arith.constant 0 : index
    %c0_6 = arith.constant 0 : index
    %6 = vector.load %arg4[%c0_5, %c0_6] : memref<1x128xf32, #tpu.memory_space<vmem>>, vector<1x128xf32>
    %7 = vector.broadcast %6 : vector<1x128xf32> to vector<128x128xf32>
    %8 = arith.addf %5, %7 : vector<128x128xf32>
    %9 = arith.negf %8 : vector<128x128xf32>
    %10 = math.exp %9 : vector<128x128xf32>
    %cst_7 = arith.constant 1.000000e+00 : f32
    %11 = vector.broadcast %cst_7 : f32 to vector<128x128xf32>
    %12 = arith.addf %11, %10 : vector<128x128xf32>
    %13 = arith.divf %11, %12 : vector<128x128xf32>
    %14 = arith.mulf %8, %13 : vector<128x128xf32>
    %15 = arith.truncf %14 : vector<128x128xf32> to vector<128x128xbf16>
    %c0_8 = arith.constant 0 : index
    %c0_9 = arith.constant 0 : index
    %16 = vector.load %arg5[%c0_8, %c0_9] : memref<128x128xbf16, #tpu.memory_space<vmem>>, vector<128x128xbf16>
    tpu.vector_store %arg5[%c0_8, %c0_9], %15 {strides = array<i32>} : memref<128x128xbf16, #tpu.memory_space<vmem>>, vector<128x128xbf16>,
    return
  }
  func.func @transform_0(%arg0: i32) -> (i32, i32) {
    %c0_i32 = arith.constant 0 : i32
    %c0_i32_0 = arith.constant 0 : i32
    return %arg0, %c0_i32 : i32, i32
  }
  func.func @transform_1(%arg0: i32) -> (i32, i32) {
    %c0_i32 = arith.constant 0 : i32
    %c0_i32_0 = arith.constant 0 : i32
    %c0_i32_1 = arith.constant 0 : i32
    return %c0_i32, %c0_i32_0 : i32, i32
  }
  func.func @transform_2(%arg0: i32) -> (i32, i32) {
    %c0_i32 = arith.constant 0 : i32
    %c0_i32_0 = arith.constant 0 : i32
    %c0_i32_1 = arith.constant 0 : i32
    return %c0_i32, %c0_i32_0 : i32, i32
  }
  func.func @transform_3(%arg0: i32) -> (i32, i32) {
    %c0_i32 = arith.constant 0 : i32
    %c0_i32_0 = arith.constant 0 : i32
    %c0_i32_1 = arith.constant 0 : i32
    return %c0_i32, %c0_i32_0 : i32, i32
  }
  func.func @transform_4(%arg0: i32) -> (i32, i32) {
    %c0_i32 = arith.constant 0 : i32
    %c0_i32_0 = arith.constant 0 : i32
    return %arg0, %c0_i32 : i32, i32
  }
}

module attributes {stable_mosaic.version = 11 : i64} {
  func.func @_conv1x1_bn_silu_pool_kernel(%arg0: i32, %arg1: memref<6x16x128xbf16, #tpu.memory_space<vmem>>, %arg2: memref<128x128xbf16, #tpu.memory_space<vmem>>, %arg3: memref<1x128xf32, #tpu.memory_space<vmem>>, %arg4: memref<1x128xf32, #tpu.memory_space<vmem>>, %arg5: memref<6x1x128xf32, #tpu.memory_space<vmem>>) attributes {dimension_semantics = [#tpu.dimension_semantics<parallel>], iteration_bounds = array<i64: 2>, scalar_prefetch = 0 : i64, scratch_operands = 0 : i64, tpu.core_type = #tpu.core_type<tc>, window_params = [{transform_indices = @transform_0, window_bounds = array<i64: 6, 16, 128>}, {pipeline_mode = #tpu.pipeline_mode<synchronous>, transform_indices = @transform_1, window_bounds = array<i64: 128, 128>}, {pipeline_mode = #tpu.pipeline_mode<synchronous>, transform_indices = @transform_2, window_bounds = array<i64: 1, 128>}, {pipeline_mode = #tpu.pipeline_mode<synchronous>, transform_indices = @transform_3, window_bounds = array<i64: 1, 128>}, {transform_indices = @transform_4, window_bounds = array<i64: 6, 1, 128>}]} {
    %c0 = arith.constant 0 : index
    %c0_0 = arith.constant 0 : index
    %c0_1 = arith.constant 0 : index
    %0 = vector.load %arg1[%c0, %c0_0, %c0_1] : memref<6x16x128xbf16, #tpu.memory_space<vmem>>, vector<6x16x128xbf16>
    %1 = vector.shape_cast %0 : vector<6x16x128xbf16> to vector<96x128xbf16>
    %c0_2 = arith.constant 0 : index
    %c0_3 = arith.constant 0 : index
    %2 = vector.load %arg2[%c0_2, %c0_3] : memref<128x128xbf16, #tpu.memory_space<vmem>>, vector<128x128xbf16>
    %cst = arith.constant dense<0.000000e+00> : vector<96x128xf32>
    %3 = tpu.matmul %1, %2, %cst {dimension_numbers = #tpu.dot_dimension_numbers<[1], [0], [0], [1], [0, 0, 1, 1], [], []>} : vector<96x128xbf16>, vector<128x128xbf16>, vector<96x128xf32> -> vector<96x128xf32>
    %c0_4 = arith.constant 0 : index
    %c0_5 = arith.constant 0 : index
    %4 = vector.load %arg3[%c0_4, %c0_5] : memref<1x128xf32, #tpu.memory_space<vmem>>, vector<1x128xf32>
    %5 = vector.broadcast %4 : vector<1x128xf32> to vector<96x128xf32>
    %6 = arith.mulf %3, %5 : vector<96x128xf32>
    %c0_6 = arith.constant 0 : index
    %c0_7 = arith.constant 0 : index
    %7 = vector.load %arg4[%c0_6, %c0_7] : memref<1x128xf32, #tpu.memory_space<vmem>>, vector<1x128xf32>
    %8 = vector.broadcast %7 : vector<1x128xf32> to vector<96x128xf32>
    %9 = arith.addf %6, %8 : vector<96x128xf32>
    %10 = arith.negf %9 : vector<96x128xf32>
    %11 = math.exp %10 : vector<96x128xf32>
    %cst_8 = arith.constant 1.000000e+00 : f32
    %12 = vector.broadcast %cst_8 : f32 to vector<96x128xf32>
    %13 = arith.addf %12, %11 : vector<96x128xf32>
    %14 = arith.divf %12, %13 : vector<96x128xf32>
    %15 = arith.mulf %9, %14 : vector<96x128xf32>
    %16 = vector.shape_cast %15 : vector<96x128xf32> to vector<6x16x128xf32>
    %cst_9 = arith.constant dense<0.000000e+00> : vector<6x128xf32>
    %17 = vector.multi_reduction <add>, %16, %cst_9 [1] : vector<6x16x128xf32> to vector<6x128xf32>
    %18 = vector.shape_cast %17 : vector<6x128xf32> to vector<6x1x128xf32>
    %cst_10 = arith.constant 1.600000e+01 : f32
    %19 = vector.broadcast %cst_10 : f32 to vector<6x1x128xf32>
    %20 = arith.divf %18, %19 : vector<6x1x128xf32>
    %c0_11 = arith.constant 0 : index
    %c0_12 = arith.constant 0 : index
    %c0_13 = arith.constant 0 : index
    %21 = vector.load %arg5[%c0_11, %c0_12, %c0_13] : memref<6x1x128xf32, #tpu.memory_space<vmem>>, vector<6x1x128xf32>
    tpu.vector_store %arg5[%c0_11, %c0_12, %c0_13], %20 {strides = array<i32>} : memref<6x1x128xf32, #tpu.memory_space<vmem>>, vector<6x1x128xf32>,
    return
  }
  func.func @transform_0(%arg0: i32) -> (i32, i32, i32) {
    %c0_i32 = arith.constant 0 : i32
    %c0_i32_0 = arith.constant 0 : i32
    %c0_i32_1 = arith.constant 0 : i32
    return %arg0, %c0_i32, %c0_i32_0 : i32, i32, i32
  }
  func.func @transform_1(%arg0: i32) -> (i32, i32) {
    %c0_i32 = arith.constant 0 : i32
    %c0_i32_0 = arith.constant 0 : i32
    %c0_i32_1 = arith.constant 0 : i32
    return %c0_i32, %c0_i32_0 : i32, i32
  }
  func.func @transform_2(%arg0: i32) -> (i32, i32) {
    %c0_i32 = arith.constant 0 : i32
    %c0_i32_0 = arith.constant 0 : i32
    %c0_i32_1 = arith.constant 0 : i32
    return %c0_i32, %c0_i32_0 : i32, i32
  }
  func.func @transform_3(%arg0: i32) -> (i32, i32) {
    %c0_i32 = arith.constant 0 : i32
    %c0_i32_0 = arith.constant 0 : i32
    %c0_i32_1 = arith.constant 0 : i32
    return %c0_i32, %c0_i32_0 : i32, i32
  }
  func.func @transform_4(%arg0: i32) -> (i32, i32, i32) {
    %c0_i32 = arith.constant 0 : i32
    %c0_i32_0 = arith.constant 0 : i32
    %c0_i32_1 = arith.constant 0 : i32
    return %arg0, %c0_i32, %c0_i32_0 : i32, i32, i32
  }
}

module attributes {stable_mosaic.version = 11 : i64} {
  func.func @_bilstm_mean_kernel(%arg0: i32, %arg1: i32, %arg2: memref<1x6x128xbf16, #tpu.memory_space<vmem>>, %arg3: memref<1x128x512xbf16, #tpu.memory_space<vmem>>, %arg4: memref<1x128x512xbf16, #tpu.memory_space<vmem>>, %arg5: memref<1x1x512xf32, #tpu.memory_space<vmem>>, %arg6: memref<1x6x128xf32, #tpu.memory_space<vmem>>, %arg7: memref<6x128xf32, #tpu.memory_space<vmem>>, %arg8: memref<6x128xf32, #tpu.memory_space<vmem>>, %arg9: memref<6x128xf32, #tpu.memory_space<vmem>>) attributes {dimension_semantics = [#tpu.dimension_semantics<arbitrary>, #tpu.dimension_semantics<arbitrary>], iteration_bounds = array<i64: 2, 2>, scalar_prefetch = 0 : i64, scratch_operands = 3 : i64, tpu.core_type = #tpu.core_type<tc>, window_params = [{transform_indices = @transform_0, window_bounds = array<i64: 1, 6, 128>}, {transform_indices = @transform_1, window_bounds = array<i64: 1, 128, 512>}, {transform_indices = @transform_2, window_bounds = array<i64: 1, 128, 512>}, {transform_indices = @transform_3, window_bounds = array<i64: 1, 1, 512>}, {transform_indices = @transform_4, window_bounds = array<i64: 1, 6, 128>}]} {
    %c0_i32 = arith.constant 0 : i32
    %0 = arith.cmpi eq, %arg1, %c0_i32 : i32
    %1 = arith.extui %0 : i1 to i32
    %c0_i32_0 = arith.constant 0 : i32
    %2 = arith.cmpi ne, %1, %c0_i32_0 : i32
    scf.if %2 {
      %cst_29 = arith.constant 0.000000e+00 : f32
      %52 = vector.broadcast %cst_29 : f32 to vector<6x128xf32>
      %c0_30 = arith.constant 0 : index
      %c0_31 = arith.constant 0 : index
      %53 = vector.load %arg7[%c0_30, %c0_31] : memref<6x128xf32, #tpu.memory_space<vmem>>, vector<6x128xf32>
      tpu.vector_store %arg7[%c0_30, %c0_31], %52 {strides = array<i32>} : memref<6x128xf32, #tpu.memory_space<vmem>>, vector<6x128xf32>,
      %cst_32 = arith.constant 0.000000e+00 : f32
      %54 = vector.broadcast %cst_32 : f32 to vector<6x128xf32>
      %c0_33 = arith.constant 0 : index
      %c0_34 = arith.constant 0 : index
      %55 = vector.load %arg8[%c0_33, %c0_34] : memref<6x128xf32, #tpu.memory_space<vmem>>, vector<6x128xf32>
      tpu.vector_store %arg8[%c0_33, %c0_34], %54 {strides = array<i32>} : memref<6x128xf32, #tpu.memory_space<vmem>>, vector<6x128xf32>,
      %cst_35 = arith.constant 0.000000e+00 : f32
      %56 = vector.broadcast %cst_35 : f32 to vector<6x128xf32>
      %c0_36 = arith.constant 0 : index
      %c0_37 = arith.constant 0 : index
      %57 = vector.load %arg9[%c0_36, %c0_37] : memref<6x128xf32, #tpu.memory_space<vmem>>, vector<6x128xf32>
      tpu.vector_store %arg9[%c0_36, %c0_37], %56 {strides = array<i32>} : memref<6x128xf32, #tpu.memory_space<vmem>>, vector<6x128xf32>,
    } else {
    }
    %c0 = arith.constant 0 : index
    %c0_1 = arith.constant 0 : index
    %c0_2 = arith.constant 0 : index
    %3 = vector.load %arg2[%c0, %c0_1, %c0_2] : memref<1x6x128xbf16, #tpu.memory_space<vmem>>, vector<1x6x128xbf16>
    %4 = vector.shape_cast %3 : vector<1x6x128xbf16> to vector<6x128xbf16>
    %c0_3 = arith.constant 0 : index
    %c0_4 = arith.constant 0 : index
    %5 = vector.load %arg7[%c0_3, %c0_4] : memref<6x128xf32, #tpu.memory_space<vmem>>, vector<6x128xf32>
    %c0_5 = arith.constant 0 : index
    %c0_6 = arith.constant 0 : index
    %c0_7 = arith.constant 0 : index
    %6 = vector.load %arg3[%c0_5, %c0_6, %c0_7] : memref<1x128x512xbf16, #tpu.memory_space<vmem>>, vector<1x128x512xbf16>
    %7 = vector.shape_cast %6 : vector<1x128x512xbf16> to vector<128x512xbf16>
    %cst = arith.constant dense<0.000000e+00> : vector<6x512xf32>
    %8 = tpu.matmul %4, %7, %cst {dimension_numbers = #tpu.dot_dimension_numbers<[1], [0], [0], [1], [0, 0, 1, 1], [], []>} : vector<6x128xbf16>, vector<128x512xbf16>, vector<6x512xf32> -> vector<6x512xf32>
    %9 = arith.truncf %5 : vector<6x128xf32> to vector<6x128xbf16>
    %c0_8 = arith.constant 0 : index
    %c0_9 = arith.constant 0 : index
    %c0_10 = arith.constant 0 : index
    %10 = vector.load %arg4[%c0_8, %c0_9, %c0_10] : memref<1x128x512xbf16, #tpu.memory_space<vmem>>, vector<1x128x512xbf16>
    %11 = vector.shape_cast %10 : vector<1x128x512xbf16> to vector<128x512xbf16>
    %cst_11 = arith.constant dense<0.000000e+00> : vector<6x512xf32>
    %12 = tpu.matmul %9, %11, %cst_11 {dimension_numbers = #tpu.dot_dimension_numbers<[1], [0], [0], [1], [0, 0, 1, 1], [], []>} : vector<6x128xbf16>, vector<128x512xbf16>, vector<6x512xf32> -> vector<6x512xf32>
    %13 = arith.addf %8, %12 : vector<6x512xf32>
    %c0_12 = arith.constant 0 : index
    %c0_13 = arith.constant 0 : index
    %c0_14 = arith.constant 0 : index
    %14 = vector.load %arg5[%c0_12, %c0_13, %c0_14] : memref<1x1x512xf32, #tpu.memory_space<vmem>>, vector<1x1x512xf32>
    %15 = vector.shape_cast %14 : vector<1x1x512xf32> to vector<1x512xf32>
    %16 = vector.broadcast %15 : vector<1x512xf32> to vector<6x512xf32>
    %17 = arith.addf %13, %16 : vector<6x512xf32>
    %18 = vector.extract_strided_slice %17 {offsets = [0, 0], sizes = [6, 128], strides = [1, 1]} : vector<6x512xf32> to vector<6x128xf32>
    %19 = arith.negf %18 : vector<6x128xf32>
    %20 = math.exp %19 : vector<6x128xf32>
    %cst_15 = arith.constant 1.000000e+00 : f32
    %21 = vector.broadcast %cst_15 : f32 to vector<6x128xf32>
    %22 = arith.addf %21, %20 : vector<6x128xf32>
    %23 = arith.divf %21, %22 : vector<6x128xf32>
    %24 = vector.extract_strided_slice %17 {offsets = [0, 128], sizes = [6, 128], strides = [1, 1]} : vector<6x512xf32> to vector<6x128xf32>
    %25 = arith.negf %24 : vector<6x128xf32>
    %26 = math.exp %25 : vector<6x128xf32>
    %cst_16 = arith.constant 1.000000e+00 : f32
    %27 = vector.broadcast %cst_16 : f32 to vector<6x128xf32>
    %28 = arith.addf %27, %26 : vector<6x128xf32>
    %29 = arith.divf %27, %28 : vector<6x128xf32>
    %30 = vector.extract_strided_slice %17 {offsets = [0, 256], sizes = [6, 128], strides = [1, 1]} : vector<6x512xf32> to vector<6x128xf32>
    %31 = math.tanh %30 : vector<6x128xf32>
    %32 = vector.extract_strided_slice %17 {offsets = [0, 384], sizes = [6, 128], strides = [1, 1]} : vector<6x512xf32> to vector<6x128xf32>
    %33 = arith.negf %32 : vector<6x128xf32>
    %34 = math.exp %33 : vector<6x128xf32>
    %cst_17 = arith.constant 1.000000e+00 : f32
    %35 = vector.broadcast %cst_17 : f32 to vector<6x128xf32>
    %36 = arith.addf %35, %34 : vector<6x128xf32>
    %37 = arith.divf %35, %36 : vector<6x128xf32>
    %c0_18 = arith.constant 0 : index
    %c0_19 = arith.constant 0 : index
    %38 = vector.load %arg8[%c0_18, %c0_19] : memref<6x128xf32, #tpu.memory_space<vmem>>, vector<6x128xf32>
    %39 = arith.mulf %29, %38 : vector<6x128xf32>
    %40 = arith.mulf %23, %31 : vector<6x128xf32>
    %41 = arith.addf %39, %40 : vector<6x128xf32>
    %42 = math.tanh %41 : vector<6x128xf32>
    %43 = arith.mulf %37, %42 : vector<6x128xf32>
    %c0_20 = arith.constant 0 : index
    %c0_21 = arith.constant 0 : index
    %44 = vector.load %arg8[%c0_20, %c0_21] : memref<6x128xf32, #tpu.memory_space<vmem>>, vector<6x128xf32>
    tpu.vector_store %arg8[%c0_20, %c0_21], %41 {strides = array<i32>} : memref<6x128xf32, #tpu.memory_space<vmem>>, vector<6x128xf32>,
    %c0_22 = arith.constant 0 : index
    %c0_23 = arith.constant 0 : index
    %45 = vector.load %arg7[%c0_22, %c0_23] : memref<6x128xf32, #tpu.memory_space<vmem>>, vector<6x128xf32>
    tpu.vector_store %arg7[%c0_22, %c0_23], %43 {strides = array<i32>} : memref<6x128xf32, #tpu.memory_space<vmem>>, vector<6x128xf32>,
    %c0_24 = arith.constant 0 : index
    %c0_25 = arith.constant 0 : index
    %46 = vector.load %arg9[%c0_24, %c0_25] : memref<6x128xf32, #tpu.memory_space<vmem>>, vector<6x128xf32>
    %47 = arith.addf %46, %43 : vector<6x128xf32>
    %c0_26 = arith.constant 0 : index
    %c0_27 = arith.constant 0 : index
    %48 = vector.load %arg9[%c0_26, %c0_27] : memref<6x128xf32, #tpu.memory_space<vmem>>, vector<6x128xf32>
    tpu.vector_store %arg9[%c0_26, %c0_27], %47 {strides = array<i32>} : memref<6x128xf32, #tpu.memory_space<vmem>>, vector<6x128xf32>,
    %c1_i32 = arith.constant 1 : i32
    %49 = arith.cmpi eq, %arg1, %c1_i32 : i32
    %50 = arith.extui %49 : i1 to i32
    %c0_i32_28 = arith.constant 0 : i32
    %51 = arith.cmpi ne, %50, %c0_i32_28 : i32
    scf.if %51 {
      %c0_29 = arith.constant 0 : index
      %c0_30 = arith.constant 0 : index
      %52 = vector.load %arg9[%c0_29, %c0_30] : memref<6x128xf32, #tpu.memory_space<vmem>>, vector<6x128xf32>
      %cst_31 = arith.constant 5.000000e-01 : f32
      %53 = vector.broadcast %cst_31 : f32 to vector<6x128xf32>
      %54 = arith.mulf %52, %53 : vector<6x128xf32>
      %c0_32 = arith.constant 0 : index
      %c0_33 = arith.constant 0 : index
      %c0_34 = arith.constant 0 : index
      %55 = vector.load %arg6[%c0_32, %c0_33, %c0_34] : memref<1x6x128xf32, #tpu.memory_space<vmem>>, vector<1x6x128xf32>
      %56 = vector.shape_cast %55 : vector<1x6x128xf32> to vector<6x128xf32>
      %57 = vector.shape_cast %54 : vector<6x128xf32> to vector<1x6x128xf32>
      tpu.vector_store %arg6[%c0_32, %c0_33, %c0_34], %57 {strides = array<i32>} : memref<1x6x128xf32, #tpu.memory_space<vmem>>, vector<1x6x128xf32>,
    } else {
    }
    return
  }
  func.func @transform_0(%arg0: i32, %arg1: i32) -> (i32, i32, i32) {
    %c1_i32 = arith.constant 1 : i32
    %0 = arith.muli %arg0, %c1_i32 : i32
    %c2_i32 = arith.constant 2 : i32
    %1 = arith.muli %c2_i32, %arg0 : i32
    %c1_i32_0 = arith.constant 1 : i32
    %2 = arith.subi %c1_i32_0, %1 : i32
    %3 = arith.muli %2, %arg1 : i32
    %4 = arith.addi %0, %3 : i32
    %c0_i32 = arith.constant 0 : i32
    %c0_i32_1 = arith.constant 0 : i32
    %c0_i32_2 = arith.constant 0 : i32
    return %4, %c0_i32, %c0_i32_1 : i32, i32, i32
  }
  func.func @transform_1(%arg0: i32, %arg1: i32) -> (i32, i32, i32) {
    %c0_i32 = arith.constant 0 : i32
    %c0_i32_0 = arith.constant 0 : i32
    %c0_i32_1 = arith.constant 0 : i32
    return %arg0, %c0_i32, %c0_i32_0 : i32, i32, i32
  }
  func.func @transform_2(%arg0: i32, %arg1: i32) -> (i32, i32, i32) {
    %c0_i32 = arith.constant 0 : i32
    %c0_i32_0 = arith.constant 0 : i32
    %c0_i32_1 = arith.constant 0 : i32
    return %arg0, %c0_i32, %c0_i32_0 : i32, i32, i32
  }
  func.func @transform_3(%arg0: i32, %arg1: i32) -> (i32, i32, i32) {
    %c0_i32 = arith.constant 0 : i32
    %c0_i32_0 = arith.constant 0 : i32
    %c0_i32_1 = arith.constant 0 : i32
    return %arg0, %c0_i32, %c0_i32_0 : i32, i32, i32
  }
  func.func @transform_4(%arg0: i32, %arg1: i32) -> (i32, i32, i32) {
    %c0_i32 = arith.constant 0 : i32
    %c0_i32_0 = arith.constant 0 : i32
    %c0_i32_1 = arith.constant 0 : i32
    return %arg0, %c0_i32, %c0_i32_0 : i32, i32, i32
  }
}

module attributes {stable_mosaic.version = 11 : i64} {
  func.func @_matmul_scale_bias_act_kernel(%arg0: i32, %arg1: memref<8x384xbf16, #tpu.memory_space<vmem>>, %arg2: memref<384x128xbf16, #tpu.memory_space<vmem>>, %arg3: memref<1x128xf32, #tpu.memory_space<vmem>>, %arg4: memref<1x128xf32, #tpu.memory_space<vmem>>, %arg5: memref<8x128xf32, #tpu.memory_space<vmem>>) attributes {dimension_semantics = [#tpu.dimension_semantics<parallel>], iteration_bounds = array<i64: 1>, scalar_prefetch = 0 : i64, scratch_operands = 0 : i64, tpu.core_type = #tpu.core_type<tc>, window_params = [{transform_indices = @transform_0, window_bounds = array<i64: 8, 384>}, {pipeline_mode = #tpu.pipeline_mode<synchronous>, transform_indices = @transform_1, window_bounds = array<i64: 384, 128>}, {pipeline_mode = #tpu.pipeline_mode<synchronous>, transform_indices = @transform_2, window_bounds = array<i64: 1, 128>}, {pipeline_mode = #tpu.pipeline_mode<synchronous>, transform_indices = @transform_3, window_bounds = array<i64: 1, 128>}, {transform_indices = @transform_4, window_bounds = array<i64: 8, 128>}]} {
    %c0 = arith.constant 0 : index
    %c0_0 = arith.constant 0 : index
    %0 = vector.load %arg1[%c0, %c0_0] : memref<8x384xbf16, #tpu.memory_space<vmem>>, vector<8x384xbf16>
    %c0_1 = arith.constant 0 : index
    %c0_2 = arith.constant 0 : index
    %1 = vector.load %arg2[%c0_1, %c0_2] : memref<384x128xbf16, #tpu.memory_space<vmem>>, vector<384x128xbf16>
    %cst = arith.constant dense<0.000000e+00> : vector<8x128xf32>
    %2 = tpu.matmul %0, %1, %cst {dimension_numbers = #tpu.dot_dimension_numbers<[1], [0], [0], [1], [0, 0, 1, 1], [], []>} : vector<8x384xbf16>, vector<384x128xbf16>, vector<8x128xf32> -> vector<8x128xf32>
    %c0_3 = arith.constant 0 : index
    %c0_4 = arith.constant 0 : index
    %3 = vector.load %arg3[%c0_3, %c0_4] : memref<1x128xf32, #tpu.memory_space<vmem>>, vector<1x128xf32>
    %4 = vector.broadcast %3 : vector<1x128xf32> to vector<8x128xf32>
    %5 = arith.mulf %2, %4 : vector<8x128xf32>
    %c0_5 = arith.constant 0 : index
    %c0_6 = arith.constant 0 : index
    %6 = vector.load %arg4[%c0_5, %c0_6] : memref<1x128xf32, #tpu.memory_space<vmem>>, vector<1x128xf32>
    %7 = vector.broadcast %6 : vector<1x128xf32> to vector<8x128xf32>
    %8 = arith.addf %5, %7 : vector<8x128xf32>
    %c0_7 = arith.constant 0 : index
    %c0_8 = arith.constant 0 : index
    %9 = vector.load %arg5[%c0_7, %c0_8] : memref<8x128xf32, #tpu.memory_space<vmem>>, vector<8x128xf32>
    tpu.vector_store %arg5[%c0_7, %c0_8], %8 {strides = array<i32>} : memref<8x128xf32, #tpu.memory_space<vmem>>, vector<8x128xf32>,
    return
  }
  func.func @transform_0(%arg0: i32) -> (i32, i32) {
    %c0_i32 = arith.constant 0 : i32
    %c0_i32_0 = arith.constant 0 : i32
    return %arg0, %c0_i32 : i32, i32
  }
  func.func @transform_1(%arg0: i32) -> (i32, i32) {
    %c0_i32 = arith.constant 0 : i32
    %c0_i32_0 = arith.constant 0 : i32
    %c0_i32_1 = arith.constant 0 : i32
    return %c0_i32, %c0_i32_0 : i32, i32
  }
  func.func @transform_2(%arg0: i32) -> (i32, i32) {
    %c0_i32 = arith.constant 0 : i32
    %c0_i32_0 = arith.constant 0 : i32
    %c0_i32_1 = arith.constant 0 : i32
    return %c0_i32, %c0_i32_0 : i32, i32
  }
  func.func @transform_3(%arg0: i32) -> (i32, i32) {
    %c0_i32 = arith.constant 0 : i32
    %c0_i32_0 = arith.constant 0 : i32
    %c0_i32_1 = arith.constant 0 : i32
    return %c0_i32, %c0_i32_0 : i32, i32
  }
  func.func @transform_4(%arg0: i32) -> (i32, i32) {
    %c0_i32 = arith.constant 0 : i32
    %c0_i32_0 = arith.constant 0 : i32
    return %arg0, %c0_i32 : i32, i32
  }
}

</mosaic_0001>

<llo_original>
// kernel: _lambda_.6
$region0: #{_lambda_.6}
  #allocation0 [shape = 'u32[]', space=smem, size = 0x4, offset = 0x4, fixed_abs, tag = 'smem constant byte address 0x4 - core index']
  #allocation1 [shape = 'u32[144,128]{1,0:T(1,128)}', space=vmem, size = 0x12000, scoped, tag = 'internal scratch']
  %s0 = inlined_call_operand.vmem [shape: bf16[768,128], index: 0, kind: input, shape index: {}]
  %s1 = inlined_call_operand.vmem [shape: bf16[128,128], index: 1, kind: input, shape index: {}]
  %s2 = inlined_call_operand.vmem [shape: f32[1,128], index: 2, kind: input, shape index: {}]
  %s3 = inlined_call_operand.vmem [shape: f32[1,128], index: 3, kind: input, shape index: {}]
  %s4 = inlined_call_operand.vmem [shape: bf16[768,128], index: 4, kind: output, shape index: {}]
  %s5 = sld [smem:[#allocation0]]
  $region49: #{_lambda_.6} parent=0
    _
  %s7 = ssub.s32 1, %s5
  %s8 = scalar_select 0, %s7, %s5
  loop: start=0, step=1, limit=8
  $region2: #{_lambda_.6} parent=0 // loop_pre_header
    _
  $region3: #{_lambda_.6} parent=0 // loop_header
    %s10 = sphi 0, %s14
    %p11 = scmp.ge.s32.totalorder %s10, 8
    %s20 = sphi 0, %s22
    %s23 = sphi 0, %s20
    %s24 = sphi 0, %s23
    %s40 = sphi 0, %s24
    %s44 = sphi 0, %s44
    %s46 = sphi 0, %s44
    %s47 = sphi 0, %s46
    %s61 = sphi 0, %s47
    %s65 = sphi 0, %s65
    %s67 = sphi 0, %s65
    %s68 = sphi 0, %s67
    %s82 = sphi 0, %s68
    %s86 = sphi 0, %s86
    %s88 = sphi 0, %s86
    %s89 = sphi 0, %s88
    %s103 = sphi 0, %s89
    %s109 = sphi 0, %s111
    %s112 = sphi 0, %s109
    %s113 = sphi 0, %s112
    %s129 = sphi 0, %s113
  $region4: #{_lambda_.6} parent=0 // loop_header_branch
    %13 = sbr.rel (%p11) target = $region8
  $region5: #{_lambda_.6} parent=0 // loop_body
    %s15 = ssub.s32 %s10, 1
    %s16 = ssub.s32 %s10, 2
    %s17 = sadd.s32 %s10, 1
    %s18 = ssub.s32 %s10, %s17
    %p19 = scmp.eq.s32.totalorder %s18, 0
    %s21 = sadd.s32 %s20, 1
    %s22 = scalar_select %p19, %s20, %s21
    %p25 = pneg %p19
    %p26 = scmp.eq.s32.totalorder %s10, 5
    %p27 = por %p25, %p26
    %p28 = scmp.ne.s32.totalorder %s20, %s23
    %p29 = scmp.eq.s32.totalorder %s10, 0
    %p30 = por %p28, %p29
    %p31 = scmp.ne.s32.totalorder %s20, %s23
    %p32 = scmp.eq.s32.totalorder %s15, 5
    %p33 = por %p31, %p32
    %p34 = scmp.ne.s32.totalorder %s23, %s24
    %p35 = scmp.eq.s32.totalorder %s15, 0
    %p36 = por %p34, %p35
    %p37 = scmp.ne.s32.totalorder %s23, %s24
    %p38 = scmp.eq.s32.totalorder %s16, 5
    %p39 = por %p37, %p38
    %p41 = scmp.ne.s32.totalorder %s24, %s40
    %p42 = scmp.eq.s32.totalorder %s16, 0
    %p43 = por %p41, %p42
    %s45 = sadd.s32 %s44, 1
    %p48 = scmp.eq.s32.totalorder %s10, 5
    %p49 = scmp.ne.s32.totalorder %s44, %s46
    %p50 = scmp.eq.s32.totalorder %s10, 0
    %p51 = por %p49, %p50
    %p52 = scmp.ne.s32.totalorder %s44, %s46
    %p53 = scmp.eq.s32.totalorder %s15, 5
    %p54 = por %p52, %p53
    %p55 = scmp.ne.s32.totalorder %s46, %s47
    %p56 = scmp.eq.s32.totalorder %s15, 0
    %p57 = por %p55, %p56
    %p58 = scmp.ne.s32.totalorder %s46, %s47
    %p59 = scmp.eq.s32.totalorder %s16, 5
    %p60 = por %p58, %p59
    %p62 = scmp.ne.s32.totalorder %s47, %s61
    %p63 = scmp.eq.s32.totalorder %s16, 0
    %p64 = por %p62, %p63
    %s66 = sadd.s32 %s65, 1
    %p69 = scmp.eq.s32.totalorder %s10, 5
    %p70 = scmp.ne.s32.totalorder %s65, %s67
    %p71 = scmp.eq.s32.totalorder %s10, 0
    %p72 = por %p70, %p71
    %p73 = scmp.ne.s32.totalorder %s65, %s67
    %p74 = scmp.eq.s32.totalorder %s15, 5
    %p75 = por %p73, %p74
    %p76 = scmp.ne.s32.totalorder %s67, %s68
    %p77 = scmp.eq.s32.totalorder %s15, 0
    %p78 = por %p76, %p77
    %p79 = scmp.ne.s32.totalorder %s67, %s68
    %p80 = scmp.eq.s32.totalorder %s16, 5
    %p81 = por %p79, %p80
    %p83 = scmp.ne.s32.totalorder %s68, %s82
    %p84 = scmp.eq.s32.totalorder %s16, 0
    %p85 = por %p83, %p84
    %s87 = sadd.s32 %s86, 1
    %p90 = scmp.eq.s32.totalorder %s10, 5
    %p91 = scmp.ne.s32.totalorder %s86, %s88
    %p92 = scmp.eq.s32.totalorder %s10, 0
    %p93 = por %p91, %p92
    %p94 = scmp.ne.s32.totalorder %s86, %s88
    %p95 = scmp.eq.s32.totalorder %s15, 5
    %p96 = por %p94, %p95
    %p97 = scmp.ne.s32.totalorder %s88, %s89
    %p98 = scmp.eq.s32.totalorder %s15, 0
    %p99 = por %p97, %p98
    %p100 = scmp.ne.s32.totalorder %s88, %s89
    %p101 = scmp.eq.s32.totalorder %s16, 5
    %p102 = por %p100, %p101
    %p104 = scmp.ne.s32.totalorder %s89, %s103
    %p105 = scmp.eq.s32.totalorder %s16, 0
    %p106 = por %p104, %p105
    %s107 = ssub.s32 %s10, %s17
    %p108 = scmp.eq.s32.totalorder %s107, 0
    %s110 = sadd.s32 %s109, 1
    %s111 = scalar_select %p108, %s109, %s110
    %p114 = pneg %p108
    %p115 = scmp.eq.s32.totalorder %s10, 5
    %p116 = por %p114, %p115
    %p117 = scmp.ne.s32.totalorder %s109, %s112
    %p118 = scmp.eq.s32.totalorder %s10, 0
    %p119 = por %p117, %p118
    %p120 = scmp.ne.s32.totalorder %s109, %s112
    %p121 = scmp.eq.s32.totalorder %s15, 5
    %p122 = por %p120, %p121
    %p123 = scmp.ne.s32.totalorder %s112, %s113
    %p124 = scmp.eq.s32.totalorder %s15, 0
    %p125 = por %p123, %p124
    %p126 = scmp.ne.s32.totalorder %s112, %s113
    %p127 = scmp.eq.s32.totalorder %s16, 5
    %p128 = por %p126, %p127
    %p130 = scmp.ne.s32.totalorder %s113, %s129
    %p131 = scmp.eq.s32.totalorder %s16, 0
    %p132 = por %p130, %p131
    %p133 = scmp.le.s32.totalorder 1, %s10
    %p134 = scmp.lt.s32.totalorder %s10, 7
    %p135 = pnand %p133, %p134
    %p136 = pneg %p135
    // Predicated region
    $region9: #{_lambda_.6} parent=5 // pred_check
      _
    $region10: #{_lambda_.6} parent=5 // pred_check_branch
      %138 = sbr.rel (%p135) target = $region12
    $region11: #{_lambda_.6} parent=5 // pred_region
      %s139 = ssub.s32 %s10, 1
      // Predicated region
      $region13: #{_lambda_.6} parent=11 // pred_check
        %p140 = pneg %p57
      $region14: #{_lambda_.6} parent=11 // pred_check_branch
        %142 = sbr.rel (%p140) target = $region16
      $region15: #{_lambda_.6} parent=11 // pred_region
        _
      $region16: #{_lambda_.6} parent=11 // pred_fallthru
        _
      // Predicated region
      $region17: #{_lambda_.6} parent=11 // pred_check
        %p143 = pneg %p78
      $region18: #{_lambda_.6} parent=11 // pred_check_branch
        %145 = sbr.rel (%p143) target = $region20
      $region19: #{_lambda_.6} parent=11 // pred_region
        _
      $region20: #{_lambda_.6} parent=11 // pred_fallthru
        _
      // Predicated region
      $region21: #{_lambda_.6} parent=11 // pred_check
        %p146 = pneg %p99
      $region22: #{_lambda_.6} parent=11 // pred_check_branch
        %148 = sbr.rel (%p146) target = $region24
      $region23: #{_lambda_.6} parent=11 // pred_region
        _
      $region24: #{_lambda_.6} parent=11 // pred_fallthru
        _
    $region12: #{_lambda_.6} parent=5 // pred_fallthru
      _
    %p149 = scmp.lt.s32.totalorder %s10, 6
    // Predicated region
    $region25: #{_lambda_.6} parent=5 // pred_check
      %p150 = pneg %p149
    $region26: #{_lambda_.6} parent=5 // pred_check_branch
      %152 = sbr.rel (%p150) target = $region28
    $region27: #{_lambda_.6} parent=5 // pred_region
      // Predicated region
      $region29: #{_lambda_.6} parent=27 // pred_check
        %p153 = pneg %p30
      $region30: #{_lambda_.6} parent=27 // pred_check_branch
        %155 = sbr.rel (%p153) target = $region32
      $region31: #{_lambda_.6} parent=27 // pred_region
        %s156 = smul.u32 16, %s10
        %p157 = scmp.lt.s32.totalorder %s156, 95
        %s158 = scalar_select %p157, %s156, 95
        %s159 = smul.addr %s158, 4
        %s160 = scalar_lea.vmem %s0, %s159
        %s161 = smul.u32 16, %s10
      $region32: #{_lambda_.6} parent=27 // pred_fallthru
        _
    $region28: #{_lambda_.6} parent=5 // pred_fallthru
      _
    %p162 = scmp.le.s32.totalorder 1, %s10
    %p163 = scmp.lt.s32.totalorder %s10, 7
    %p164 = pnand %p162, %p163
    %p165 = pneg %p164
    // Predicated region
    $region33: #{_lambda_.6} parent=5 // pred_check
      _
    $region34: #{_lambda_.6} parent=5 // pred_check_branch
      %167 = sbr.rel (%p164) target = $region36
    $region35: #{_lambda_.6} parent=5 // pred_region
      %s168 = ssub.s32 %s10, 1
      %s169 = smul.u32 16, %s15
      %p170 = scmp.lt.s32.totalorder %s169, 95
      %s171 = scalar_select %p170, %s169, 95
      %s172 = smul.addr %s171, 4
      %s173 = scalar_lea.vmem %s0, %s172
      %p174 = pneg %p36
      %p175 = pneg %p33
      %p176 = pneg %p57
      %p177 = pneg %p54
      %p178 = pneg %p78
      %p179 = pneg %p75
      %p180 = pneg %p99
      %p181 = pneg %p96
      %p182 = pneg %p125
      %p183 = pneg %p122
      %s184 = smul.u32 16, %s15
      %p185 = scmp.lt.s32.totalorder %s184, 95
      %s186 = scalar_select %p185, %s184, 95
      %s187 = smul.addr %s186, 4
      %s188 = scalar_lea.vmem %s4, %s187
      %s189 = smul.u32 16, %s15
      %p190 = scmp.lt.s32.totalorder %s189, 95
      %s191 = scalar_select %p190, %s189, 95
      %s192 = smul.addr %s191, 4
      %s193 = scalar_lea.vmem %s0, %s192
      %s194 = smul.u32 16, %s15
      %s195 = smul.u32 16, %s15
      %p196 = scmp.lt.s32.totalorder %s195, 95
      %s197 = scalar_select %p196, %s195, 95
      %s198 = smul.addr %s197, 4
      %s199 = scalar_lea.vmem %s4, %s198
      %s200 = smul.u32 16, %s15
      %v202 = vld [vmem:[%s193] sm:$0xf]
      %v203 = vld [vmem:[%s193 + $0x4] sm:$0xf]
      %v204 = vld [vmem:[%s193 + $0x8] sm:$0xf]
      %v205 = vld [vmem:[%s193 + $0xc] sm:$0xf]
      %v206 = vld [vmem:[%s193 + $0x10] sm:$0xf]
      %v207 = vld [vmem:[%s193 + $0x14] sm:$0xf]
      %v208 = vld [vmem:[%s193 + $0x18] sm:$0xf]
      %v209 = vld [vmem:[%s193 + $0x1c] sm:$0xf]
      %v210 = vld [vmem:[%s193 + $0x20] sm:$0xf]
      %v211 = vld [vmem:[%s193 + $0x24] sm:$0xf]
      %v212 = vld [vmem:[%s193 + $0x28] sm:$0xf]
      %v213 = vld [vmem:[%s193 + $0x2c] sm:$0xf]
      %v214 = vld [vmem:[%s193 + $0x30] sm:$0xf]
      %v215 = vld [vmem:[%s193 + $0x34] sm:$0xf]
      %v216 = vld [vmem:[%s193 + $0x38] sm:$0xf]
      %v217 = vld [vmem:[%s193 + $0x3c] sm:$0xf]
      %v218 = vld [vmem:[%s1] sm:$0xf]
      %v219 = vld [vmem:[%s1 + $0x4] sm:$0xf]
      %v220 = vld [vmem:[%s1 + $0x8] sm:$0xf]
      %v221 = vld [vmem:[%s1 + $0xc] sm:$0xf]
      %v222 = vld [vmem:[%s1 + $0x10] sm:$0xf]
      %v223 = vld [vmem:[%s1 + $0x14] sm:$0xf]
      %v224 = vld [vmem:[%s1 + $0x18] sm:$0xf]
      %v225 = vld [vmem:[%s1 + $0x1c] sm:$0xf]
      %v226 = vld [vmem:[%s1 + $0x20] sm:$0xf]
      %v227 = vld [vmem:[%s1 + $0x24] sm:$0xf]
      %v228 = vld [vmem:[%s1 + $0x28] sm:$0xf]
      %v229 = vld [vmem:[%s1 + $0x2c] sm:$0xf]
      %v230 = vld [vmem:[%s1 + $0x30] sm:$0xf]
      %v231 = vld [vmem:[%s1 + $0x34] sm:$0xf]
      %v232 = vld [vmem:[%s1 + $0x38] sm:$0xf]
      %v233 = vld [vmem:[%s1 + $0x3c] sm:$0xf]
      %v250 = vunpack.c.l.b16 %v202
      %v251 = vunpack.c.l.b16 %v203
      %v252 = vunpack.c.l.b16 %v204
      %v253 = vunpack.c.l.b16 %v205
      %v254 = vunpack.c.l.b16 %v206
      %v255 = vunpack.c.l.b16 %v207
      %v256 = vunpack.c.l.b16 %v208
      %v257 = vunpack.c.l.b16 %v209
      %v258 = vunpack.c.l.b16 %v210
      %v259 = vunpack.c.l.b16 %v211
      %v260 = vunpack.c.l.b16 %v212
      %v261 = vunpack.c.l.b16 %v213
      %v262 = vunpack.c.l.b16 %v214
      %v263 = vunpack.c.l.b16 %v215
      %v264 = vunpack.c.l.b16 %v216
      %v265 = vunpack.c.l.b16 %v217
      %v266 = vpack.c.b16 %v251, %v250
      %v267 = vpack.c.b16 %v253, %v252
      %v268 = vpack.c.b16 %v255, %v254
      %v269 = vpack.c.b16 %v257, %v256
      %v270 = vpack.c.b16 %v259, %v258
      %v271 = vpack.c.b16 %v261, %v260
      %v272 = vpack.c.b16 %v263, %v262
      %v273 = vpack.c.b16 %v265, %v264
      %v298 = vunpack.c.l.b16 %v218
      %v299 = vunpack.c.l.b16 %v219
      %v300 = vunpack.c.l.b16 %v220
      %v301 = vunpack.c.l.b16 %v221
      %v302 = vunpack.c.l.b16 %v222
      %v303 = vunpack.c.l.b16 %v223
      %v304 = vunpack.c.l.b16 %v224
      %v305 = vunpack.c.l.b16 %v225
      %v306 = vunpack.c.l.b16 %v226
      %v307 = vunpack.c.l.b16 %v227
      %v308 = vunpack.c.l.b16 %v228
      %v309 = vunpack.c.l.b16 %v229
      %v310 = vunpack.c.l.b16 %v230
      %v311 = vunpack.c.l.b16 %v231
      %v312 = vunpack.c.l.b16 %v232
      %v313 = vunpack.c.l.b16 %v233
      %v314 = vpack.c.b16 %v299, %v298
      %v315 = vpack.c.b16 %v301, %v300
      %v316 = vpack.c.b16 %v303, %v302
      %v317 = vpack.c.b16 %v305, %v304
      %v318 = vpack.c.b16 %v307, %v306
      %v319 = vpack.c.b16 %v309, %v308
      %v320 = vpack.c.b16 %v311, %v310
      %v321 = vpack.c.b16 %v313, %v312
      %330 = vmatprep.subr.bf16.mxu0 0
      %331 = vmatpush1.bf16.msra.mxu0 %v314
      %332 = vmatprep.subr.bf16.mxu0 0
      %333 = vmatpush1.bf16.msra.mxu0 %v315
      %334 = vmatprep.subr.bf16.mxu0 0
      %335 = vmatpush1.bf16.msra.mxu0 %v316
      %336 = vmatprep.subr.bf16.mxu0 0
      %337 = vmatpush1.bf16.msra.mxu0 %v317
      %338 = vmatprep.subr.bf16.mxu0 0
      %339 = vmatpush1.bf16.msra.mxu0 %v318
      %340 = vmatprep.subr.bf16.mxu0 0
      %341 = vmatpush1.bf16.msra.mxu0 %v319
      %342 = vmatprep.subr.bf16.mxu0 0
      %343 = vmatpush1.bf16.msra.mxu0 %v320
      %344 = vmatprep.subr.bf16.mxu0 0
      %345 = vmatpush1.bf16.msra.mxu0 %v321
      %346 = vmatprep.subr.bf16.mxu0 0
      %347 = vmatpush1.bf16.msra.mxu0 0
      %348 = vmatprep.subr.bf16.mxu0 0
      %349 = vmatpush1.bf16.msra.mxu0 0
      %350 = vmatprep.subr.bf16.mxu0 0
      %351 = vmatpush1.bf16.msra.mxu0 0
      %352 = vmatprep.subr.bf16.mxu0 0
      %353 = vmatpush1.bf16.msra.mxu0 0
      %354 = vmatprep.subr.bf16.mxu0 0
      %355 = vmatpush1.bf16.msra.mxu0 0
      %356 = vmatprep.subr.bf16.mxu0 0
      %357 = vmatpush1.bf16.msra.mxu0 0
      %358 = vmatprep.subr.bf16.mxu0 0
      %359 = vmatpush1.bf16.msra.mxu0 0
      %360 = vmatprep.subr.bf16.mxu0 0
      %361 = vmatpush1.bf16.msra.mxu0 0
      %362 = vmatprep.mubr.bf16.mxu0 0
      %363 = vmatmul.mubr.bf16.gmra.mrb[0].mxu0 %v266
      %v364 = vpop.f32.mrb[0].mxu0
      %v365 = vadd.f32 0.0, %v364
      %v366 = vpop.f32.mrb[0].mxu0
      %v367 = vpop.f32.mrb[0].mxu0
      %v368 = vadd.f32 0.0, %v367
      %v369 = vpop.f32.mrb[0].mxu0
      %370 = vmatprep.mubr.bf16.mxu0 0
      %371 = vmatmul.mubr.bf16.gmra.mrb[0].mxu0 %v267
      %v372 = vpop.f32.mrb[0].mxu0
      %v373 = vadd.f32 0.0, %v372
      %v374 = vpop.f32.mrb[0].mxu0
      %v375 = vpop.f32.mrb[0].mxu0
      %v376 = vadd.f32 0.0, %v375
      %v377 = vpop.f32.mrb[0].mxu0
      %378 = vmatprep.mubr.bf16.mxu0 0
      %379 = vmatmul.mubr.bf16.gmra.mrb[0].mxu0 %v268
      %v380 = vpop.f32.mrb[0].mxu0
      %v381 = vadd.f32 0.0, %v380
      %v382 = vpop.f32.mrb[0].mxu0
      %v383 = vpop.f32.mrb[0].mxu0
      %v384 = vadd.f32 0.0, %v383
      %v385 = vpop.f32.mrb[0].mxu0
      %386 = vmatprep.mubr.bf16.mxu0 0
      %387 = vmatmul.mubr.bf16.gmra.mrb[0].mxu0 %v269
      %v388 = vpop.f32.mrb[0].mxu0
      %v389 = vadd.f32 0.0, %v388
      %v390 = vpop.f32.mrb[0].mxu0
      %v391 = vpop.f32.mrb[0].mxu0
      %v392 = vadd.f32 0.0, %v391
      %v393 = vpop.f32.mrb[0].mxu0
      %394 = vmatprep.mubr.bf16.mxu0 0
      %395 = vmatmul.mubr.bf16.gmra.mrb[0].mxu0 %v270
      %v396 = vpop.f32.mrb[0].mxu0
      %v397 = vadd.f32 0.0, %v396
      %v398 = vpop.f32.mrb[0].mxu0
      %v399 = vpop.f32.mrb[0].mxu0
      %v400 = vadd.f32 0.0, %v399
      %v401 = vpop.f32.mrb[0].mxu0
      %402 = vmatprep.mubr.bf16.mxu0 0
      %403 = vmatmul.mubr.bf16.gmra.mrb[0].mxu0 %v271
      %v404 = vpop.f32.mrb[0].mxu0
      %v405 = vadd.f32 0.0, %v404
      %v406 = vpop.f32.mrb[0].mxu0
      %v407 = vpop.f32.mrb[0].mxu0
      %v408 = vadd.f32 0.0, %v407
      %v409 = vpop.f32.mrb[0].mxu0
      %410 = vmatprep.mubr.bf16.mxu0 0
      %411 = vmatmul.mubr.bf16.gmra.mrb[0].mxu0 %v272
      %v412 = vpop.f32.mrb[0].mxu0
      %v413 = vadd.f32 0.0, %v412
      %v414 = vpop.f32.mrb[0].mxu0
      %v415 = vpop.f32.mrb[0].mxu0
      %v416 = vadd.f32 0.0, %v415
      %v417 = vpop.f32.mrb[0].mxu0
      %418 = vmatprep.mubr.bf16.mxu0 0
      %419 = vmatmul.mubr.bf16.gmra.mrb[0].mxu0 %v273
      %v420 = vpop.f32.mrb[0].mxu0
      %v421 = vadd.f32 0.0, %v420
      %v422 = vpop.f32.mrb[0].mxu0
      %v423 = vpop.f32.mrb[0].mxu0
      %v424 = vadd.f32 0.0, %v423
      %v425 = vpop.f32.mrb[0].mxu0
      %426 = vdwg.mxu0
      %v427 = vld [vmem:[%s2] sm:$0x1]
      %v429 = vlaneseq
      %v430 = vshrl.u32 %v429, 7
      %v431 = vsub.s32 0, %v430
      %v432 = vrot.slane %v427, %v431
      %v434 = vmul.f32 %v365, %v432
      %v435 = vmul.f32 %v368, %v432
      %v436 = vmul.f32 %v373, %v432
      %v437 = vmul.f32 %v376, %v432
      %v438 = vmul.f32 %v381, %v432
      %v439 = vmul.f32 %v384, %v432
      %v440 = vmul.f32 %v389, %v432
      %v441 = vmul.f32 %v392, %v432
      %v442 = vmul.f32 %v397, %v432
      %v443 = vmul.f32 %v400, %v432
      %v444 = vmul.f32 %v405, %v432
      %v445 = vmul.f32 %v408, %v432
      %v446 = vmul.f32 %v413, %v432
      %v447 = vmul.f32 %v416, %v432
      %v448 = vmul.f32 %v421, %v432
      %v449 = vmul.f32 %v424, %v432
      %v450 = vld [vmem:[%s3] sm:$0x1]
      %v452 = vlaneseq
      %v453 = vshrl.u32 %v452, 7
      %v454 = vsub.s32 0, %v453
      %v455 = vrot.slane %v450, %v454
      %v457 = vadd.f32 %v434, %v455
      %v458 = vadd.f32 %v435, %v455
      %v459 = vadd.f32 %v436, %v455
      %v460 = vadd.f32 %v437, %v455
      %v461 = vadd.f32 %v438, %v455
      %v462 = vadd.f32 %v439, %v455
      %v463 = vadd.f32 %v440, %v455
      %v464 = vadd.f32 %v441, %v455
      %v465 = vadd.f32 %v442, %v455
      %v466 = vadd.f32 %v443, %v455
      %v467 = vadd.f32 %v444, %v455
      %v468 = vadd.f32 %v445, %v455
      %v469 = vadd.f32 %v446, %v455
      %v470 = vadd.f32 %v447, %v455
      %v471 = vadd.f32 %v448, %v455
      %v472 = vadd.f32 %v449, %v455
      %v473 = vxor.u32 %v457, 2147483648
      %v474 = vxor.u32 %v458, 2147483648
      %v475 = vxor.u32 %v459, 2147483648
      %v476 = vxor.u32 %v460, 2147483648
      %v477 = vxor.u32 %v461, 2147483648
      %v478 = vxor.u32 %v462, 2147483648
      %v479 = vxor.u32 %v463, 2147483648
      %v480 = vxor.u32 %v464, 2147483648
      %v481 = vxor.u32 %v465, 2147483648
      %v482 = vxor.u32 %v466, 2147483648
      %v483 = vxor.u32 %v467, 2147483648
      %v484 = vxor.u32 %v468, 2147483648
      %v485 = vxor.u32 %v469, 2147483648
      %v486 = vxor.u32 %v470, 2147483648
      %v487 = vxor.u32 %v471, 2147483648
      %v488 = vxor.u32 %v472, 2147483648
      %v489 = vmul.f32 %v473, 1.442695
      %v490 = vpow.pop %v489
      %v491 = vmul.f32 %v474, 1.442695
      %v492 = vpow.pop %v491
      %v493 = vmul.f32 %v475, 1.442695
      %v494 = vpow.pop %v493
      %v495 = vmul.f32 %v476, 1.442695
      %v496 = vpow.pop %v495
      %v497 = vmul.f32 %v477, 1.442695
      %v498 = vpow.pop %v497
      %v499 = vmul.f32 %v478, 1.442695
      %v500 = vpow.pop %v499
      %v501 = vmul.f32 %v479, 1.442695
      %v502 = vpow.pop %v501
      %v503 = vmul.f32 %v480, 1.442695
      %v504 = vpow.pop %v503
      %v505 = vmul.f32 %v481, 1.442695
      %v506 = vpow.pop %v505
      %v507 = vmul.f32 %v482, 1.442695
      %v508 = vpow.pop %v507
      %v509 = vmul.f32 %v483, 1.442695
      %v510 = vpow.pop %v509
      %v511 = vmul.f32 %v484, 1.442695
      %v512 = vpow.pop %v511
      %v513 = vmul.f32 %v485, 1.442695
      %v514 = vpow.pop %v513
      %v515 = vmul.f32 %v486, 1.442695
      %v516 = vpow.pop %v515
      %v517 = vmul.f32 %v487, 1.442695
      %v518 = vpow.pop %v517
      %v519 = vmul.f32 %v488, 1.442695
      %v520 = vpow.pop %v519
      %v521 = vadd.f32 %v490, 1.0
      %v522 = vadd.f32 %v492, 1.0
      %v523 = vadd.f32 %v494, 1.0
      %v524 = vadd.f32 %v496, 1.0
      %v525 = vadd.f32 %v498, 1.0
      %v526 = vadd.f32 %v500, 1.0
      %v527 = vadd.f32 %v502, 1.0
      %v528 = vadd.f32 %v504, 1.0
      %v529 = vadd.f32 %v506, 1.0
      %v530 = vadd.f32 %v508, 1.0
      %v531 = vadd.f32 %v510, 1.0
      %v532 = vadd.f32 %v512, 1.0
      %v533 = vadd.f32 %v514, 1.0
      %v534 = vadd.f32 %v516, 1.0
      %v535 = vadd.f32 %v518, 1.0
      %v536 = vadd.f32 %v520, 1.0
      %v537 = vrcp.pop %v521
      %v538 = vmul.f32 1.0, %v537
      %v539 = vrcp.pop %v522
      %v540 = vmul.f32 1.0, %v539
      %v541 = vrcp.pop %v523
      %v542 = vmul.f32 1.0, %v541
      %v543 = vrcp.pop %v524
      %v544 = vmul.f32 1.0, %v543
      %v545 = vrcp.pop %v525
      %v546 = vmul.f32 1.0, %v545
      %v547 = vrcp.pop %v526
      %v548 = vmul.f32 1.0, %v547
      %v549 = vrcp.pop %v527
      %v550 = vmul.f32 1.0, %v549
      %v551 = vrcp.pop %v528
      %v552 = vmul.f32 1.0, %v551
      %v553 = vrcp.pop %v529
      %v554 = vmul.f32 1.0, %v553
      %v555 = vrcp.pop %v530
      %v556 = vmul.f32 1.0, %v555
      %v557 = vrcp.pop %v531
      %v558 = vmul.f32 1.0, %v557
      %v559 = vrcp.pop %v532
      %v560 = vmul.f32 1.0, %v559
      %v561 = vrcp.pop %v533
      %v562 = vmul.f32 1.0, %v561
      %v563 = vrcp.pop %v534
      %v564 = vmul.f32 1.0, %v563
      %v565 = vrcp.pop %v535
      %v566 = vmul.f32 1.0, %v565
      %v567 = vrcp.pop %v536
      %v568 = vmul.f32 1.0, %v567
      %v569 = vmul.f32 %v457, %v538
      %v570 = vmul.f32 %v458, %v540
      %v571 = vmul.f32 %v459, %v542
      %v572 = vmul.f32 %v460, %v544
      %v573 = vmul.f32 %v461, %v546
      %v574 = vmul.f32 %v462, %v548
      %v575 = vmul.f32 %v463, %v550
      %v576 = vmul.f32 %v464, %v552
      %v577 = vmul.f32 %v465, %v554
      %v578 = vmul.f32 %v466, %v556
      %v579 = vmul.f32 %v467, %v558
      %v580 = vmul.f32 %v468, %v560
      %v581 = vmul.f32 %v469, %v562
      %v582 = vmul.f32 %v470, %v564
      %v583 = vmul.f32 %v471, %v566
      %v584 = vmul.f32 %v472, %v568
      %v585 = vpack.c.bf16 %v570, %v569
      %v586 = vpack.c.bf16 %v572, %v571
      %v587 = vpack.c.bf16 %v574, %v573
      %v588 = vpack.c.bf16 %v576, %v575
      %v589 = vpack.c.bf16 %v578, %v577
      %v590 = vpack.c.bf16 %v580, %v579
      %v591 = vpack.c.bf16 %v582, %v581
      %v592 = vpack.c.bf16 %v584, %v583
      %v601 = vunpack.c.l.b16 %v585
      %v602 = vunpack.c.h.b16 %v585
      %v603 = vunpack.c.l.b16 %v586
      %v604 = vunpack.c.h.b16 %v586
      %v605 = vunpack.c.l.b16 %v587
      %v606 = vunpack.c.h.b16 %v587
      %v607 = vunpack.c.l.b16 %v588
      %v608 = vunpack.c.h.b16 %v588
      %v609 = vunpack.c.l.b16 %v589
      %v610 = vunpack.c.h.b16 %v589
      %v611 = vunpack.c.l.b16 %v590
      %v612 = vunpack.c.h.b16 %v590
      %v613 = vunpack.c.l.b16 %v591
      %v614 = vunpack.c.h.b16 %v591
      %v615 = vunpack.c.l.b16 %v592
      %v616 = vunpack.c.h.b16 %v592
      %v617 = vpack.c.b16 %v601, %v601
      %v618 = vpack.c.b16 %v602, %v602
      %v619 = vpack.c.b16 %v603, %v603
      %v620 = vpack.c.b16 %v604, %v604
      %v621 = vpack.c.b16 %v605, %v605
      %v622 = vpack.c.b16 %v606, %v606
      %v623 = vpack.c.b16 %v607, %v607
      %v624 = vpack.c.b16 %v608, %v608
      %v625 = vpack.c.b16 %v609, %v609
      %v626 = vpack.c.b16 %v610, %v610
      %v627 = vpack.c.b16 %v611, %v611
      %v628 = vpack.c.b16 %v612, %v612
      %v629 = vpack.c.b16 %v613, %v613
      %v630 = vpack.c.b16 %v614, %v614
      %v631 = vpack.c.b16 %v615, %v615
      %v632 = vpack.c.b16 %v616, %v616
      %649 = vst [vmem:[%s199] sm:$0xf] %v617
      %650 = vst [vmem:[%s199 + $0x4] sm:$0xf] %v618
      %651 = vst [vmem:[%s199 + $0x8] sm:$0xf] %v619
      %652 = vst [vmem:[%s199 + $0xc] sm:$0xf] %v620
      %653 = vst [vmem:[%s199 + $0x10] sm:$0xf] %v621
      %654 = vst [vmem:[%s199 + $0x14] sm:$0xf] %v622
      %655 = vst [vmem:[%s199 + $0x18] sm:$0xf] %v623
      %656 = vst [vmem:[%s199 + $0x1c] sm:$0xf] %v624
      %657 = vst [vmem:[%s199 + $0x20] sm:$0xf] %v625
      %658 = vst [vmem:[%s199 + $0x24] sm:$0xf] %v626
      %659 = vst [vmem:[%s199 + $0x28] sm:$0xf] %v627
      %660 = vst [vmem:[%s199 + $0x2c] sm:$0xf] %v628
      %661 = vst [vmem:[%s199 + $0x30] sm:$0xf] %v629
      %662 = vst [vmem:[%s199 + $0x34] sm:$0xf] %v630
      %663 = vst [vmem:[%s199 + $0x38] sm:$0xf] %v631
      %664 = vst [vmem:[%s199 + $0x3c] sm:$0xf] %v632
      %s665 = smul.u32 16, %s15
      %p666 = scmp.lt.s32.totalorder %s665, 95
      %s667 = scalar_select %p666, %s665, 95
      %s668 = smul.addr %s667, 4
      %s669 = scalar_lea.vmem %s4, %s668
      // Predicated region
      $region37: #{_lambda_.6} parent=35 // pred_check
        %p670 = pneg %p122
      $region38: #{_lambda_.6} parent=35 // pred_check_branch
        %672 = sbr.rel (%p670) target = $region40
      $region39: #{_lambda_.6} parent=35 // pred_region
        %s673 = smul.u32 16, %s15
      $region40: #{_lambda_.6} parent=35 // pred_fallthru
        _
    $region36: #{_lambda_.6} parent=5 // pred_fallthru
      _
    %p674 = scmp.le.s32.totalorder 2, %s10
    // Predicated region
    $region41: #{_lambda_.6} parent=5 // pred_check
      %p675 = pneg %p674
    $region42: #{_lambda_.6} parent=5 // pred_check_branch
      %677 = sbr.rel (%p675) target = $region44
    $region43: #{_lambda_.6} parent=5 // pred_region
      %s678 = ssub.s32 %s10, 2
      // Predicated region
      $region45: #{_lambda_.6} parent=43 // pred_check
        %p679 = pneg %p128
      $region46: #{_lambda_.6} parent=43 // pred_check_branch
        %681 = sbr.rel (%p679) target = $region48
      $region47: #{_lambda_.6} parent=43 // pred_region
        %s682 = smul.u32 16, %s16
        %p683 = scmp.lt.s32.totalorder %s682, 95
        %s684 = scalar_select %p683, %s682, 95
        %s685 = smul.addr %s684, 4
        %s686 = scalar_lea.vmem %s4, %s685
      $region48: #{_lambda_.6} parent=43 // pred_fallthru
        _
    $region44: #{_lambda_.6} parent=5 // pred_fallthru
      _
  $region6: #{_lambda_.6} parent=0 // loop_footer
    %s14 = sadd.s32 1, %s10
  $region7: #{_lambda_.6} parent=0 // loop_footer_branch
    %9 = sbr.rel target = $region3
  $region8: #{_lambda_.6} parent=0 // loop_exit
    _

// kernel: _lambda_.7
$region0: #{_lambda_.7}
  #allocation0 [shape = 'u32[]', space=smem, size = 0x4, offset = 0x4, fixed_abs, tag = 'smem constant byte address 0x4 - core index']
  #allocation1 [shape = 'u32[144,128]{1,0:T(1,128)}', space=vmem, size = 0x12000, scoped, tag = 'internal scratch']
  %s0 = inlined_call_operand.vmem [shape: bf16[256,1152], index: 0, kind: input, shape index: {}]
  %s1 = inlined_call_operand.vmem [shape: bf16[1152,128], index: 1, kind: input, shape index: {}]
  %s2 = inlined_call_operand.vmem [shape: f32[1,128], index: 2, kind: input, shape index: {}]
  %s3 = inlined_call_operand.vmem [shape: f32[1,128], index: 3, kind: input, shape index: {}]
  %s4 = inlined_call_operand.vmem [shape: bf16[256,128], index: 4, kind: output, shape index: {}]
  %s5 = sld [smem:[#allocation0]]
  $region49: #{_lambda_.7} parent=0
    _
  %s7 = ssub.s32 1, %s5
  %s8 = scalar_select 0, %s7, %s5
  loop: start=0, step=1, limit=4
  $region2: #{_lambda_.7} parent=0 // loop_pre_header
    _
  $region3: #{_lambda_.7} parent=0 // loop_header
    %s10 = sphi 0, %s14
    %p11 = scmp.ge.s32.totalorder %s10, 4
    %s20 = sphi 0, %s22
    %s23 = sphi 0, %s20
    %s24 = sphi 0, %s23
    %s40 = sphi 0, %s24
    %s44 = sphi 0, %s44
    %s46 = sphi 0, %s44
    %s47 = sphi 0, %s46
    %s61 = sphi 0, %s47
    %s65 = sphi 0, %s65
    %s67 = sphi 0, %s65
    %s68 = sphi 0, %s67
    %s82 = sphi 0, %s68
    %s86 = sphi 0, %s86
    %s88 = sphi 0, %s86
    %s89 = sphi 0, %s88
    %s103 = sphi 0, %s89
    %s109 = sphi 0, %s111
    %s112 = sphi 0, %s109
    %s113 = sphi 0, %s112
    %s129 = sphi 0, %s113
  $region4: #{_lambda_.7} parent=0 // loop_header_branch
    %13 = sbr.rel (%p11) target = $region8
  $region5: #{_lambda_.7} parent=0 // loop_body
    %s15 = ssub.s32 %s10, 1
    %s16 = ssub.s32 %s10, 2
    %s17 = sadd.s32 %s10, 1
    %s18 = ssub.s32 %s10, %s17
    %p19 = scmp.eq.s32.totalorder %s18, 0
    %s21 = sadd.s32 %s20, 1
    %s22 = scalar_select %p19, %s20, %s21
    %p25 = pneg %p19
    %p26 = scmp.eq.s32.totalorder %s10, 1
    %p27 = por %p25, %p26
    %p28 = scmp.ne.s32.totalorder %s20, %s23
    %p29 = scmp.eq.s32.totalorder %s10, 0
    %p30 = por %p28, %p29
    %p31 = scmp.ne.s32.totalorder %s20, %s23
    %p32 = scmp.eq.s32.totalorder %s15, 1
    %p33 = por %p31, %p32
    %p34 = scmp.ne.s32.totalorder %s23, %s24
    %p35 = scmp.eq.s32.totalorder %s15, 0
    %p36 = por %p34, %p35
    %p37 = scmp.ne.s32.totalorder %s23, %s24
    %p38 = scmp.eq.s32.totalorder %s16, 1
    %p39 = por %p37, %p38
    %p41 = scmp.ne.s32.totalorder %s24, %s40
    %p42 = scmp.eq.s32.totalorder %s16, 0
    %p43 = por %p41, %p42
    %s45 = sadd.s32 %s44, 1
    %p48 = scmp.eq.s32.totalorder %s10, 1
    %p49 = scmp.ne.s32.totalorder %s44, %s46
    %p50 = scmp.eq.s32.totalorder %s10, 0
    %p51 = por %p49, %p50
    %p52 = scmp.ne.s32.totalorder %s44, %s46
    %p53 = scmp.eq.s32.totalorder %s15, 1
    %p54 = por %p52, %p53
    %p55 = scmp.ne.s32.totalorder %s46, %s47
    %p56 = scmp.eq.s32.totalorder %s15, 0
    %p57 = por %p55, %p56
    %p58 = scmp.ne.s32.totalorder %s46, %s47
    %p59 = scmp.eq.s32.totalorder %s16, 1
    %p60 = por %p58, %p59
    %p62 = scmp.ne.s32.totalorder %s47, %s61
    %p63 = scmp.eq.s32.totalorder %s16, 0
    %p64 = por %p62, %p63
    %s66 = sadd.s32 %s65, 1
    %p69 = scmp.eq.s32.totalorder %s10, 1
    %p70 = scmp.ne.s32.totalorder %s65, %s67
    %p71 = scmp.eq.s32.totalorder %s10, 0
    %p72 = por %p70, %p71
    %p73 = scmp.ne.s32.totalorder %s65, %s67
    %p74 = scmp.eq.s32.totalorder %s15, 1
    %p75 = por %p73, %p74
    %p76 = scmp.ne.s32.totalorder %s67, %s68
    %p77 = scmp.eq.s32.totalorder %s15, 0
    %p78 = por %p76, %p77
    %p79 = scmp.ne.s32.totalorder %s67, %s68
    %p80 = scmp.eq.s32.totalorder %s16, 1
    %p81 = por %p79, %p80
    %p83 = scmp.ne.s32.totalorder %s68, %s82
    %p84 = scmp.eq.s32.totalorder %s16, 0
    %p85 = por %p83, %p84
    %s87 = sadd.s32 %s86, 1
    %p90 = scmp.eq.s32.totalorder %s10, 1
    %p91 = scmp.ne.s32.totalorder %s86, %s88
    %p92 = scmp.eq.s32.totalorder %s10, 0
    %p93 = por %p91, %p92
    %p94 = scmp.ne.s32.totalorder %s86, %s88
    %p95 = scmp.eq.s32.totalorder %s15, 1
    %p96 = por %p94, %p95
    %p97 = scmp.ne.s32.totalorder %s88, %s89
    %p98 = scmp.eq.s32.totalorder %s15, 0
    %p99 = por %p97, %p98
    %p100 = scmp.ne.s32.totalorder %s88, %s89
    %p101 = scmp.eq.s32.totalorder %s16, 1
    %p102 = por %p100, %p101
    %p104 = scmp.ne.s32.totalorder %s89, %s103
    %p105 = scmp.eq.s32.totalorder %s16, 0
    %p106 = por %p104, %p105
    %s107 = ssub.s32 %s10, %s17
    %p108 = scmp.eq.s32.totalorder %s107, 0
    %s110 = sadd.s32 %s109, 1
    %s111 = scalar_select %p108, %s109, %s110
    %p114 = pneg %p108
    %p115 = scmp.eq.s32.totalorder %s10, 1
    %p116 = por %p114, %p115
    %p117 = scmp.ne.s32.totalorder %s109, %s112
    %p118 = scmp.eq.s32.totalorder %s10, 0
    %p119 = por %p117, %p118
    %p120 = scmp.ne.s32.totalorder %s109, %s112
    %p121 = scmp.eq.s32.totalorder %s15, 1
    %p122 = por %p120, %p121
    %p123 = scmp.ne.s32.totalorder %s112, %s113
    %p124 = scmp.eq.s32.totalorder %s15, 0
    %p125 = por %p123, %p124
    %p126 = scmp.ne.s32.totalorder %s112, %s113
    %p127 = scmp.eq.s32.totalorder %s16, 1
    %p128 = por %p126, %p127
    %p130 = scmp.ne.s32.totalorder %s113, %s129
    %p131 = scmp.eq.s32.totalorder %s16, 0
    %p132 = por %p130, %p131
    %p133 = scmp.le.s32.totalorder 1, %s10
    %p134 = scmp.lt.s32.totalorder %s10, 3
    %p135 = pnand %p133, %p134
    %p136 = pneg %p135
    // Predicated region
    $region9: #{_lambda_.7} parent=5 // pred_check
      _
    $region10: #{_lambda_.7} parent=5 // pred_check_branch
      %138 = sbr.rel (%p135) target = $region12
    $region11: #{_lambda_.7} parent=5 // pred_region
      %s139 = ssub.s32 %s10, 1
      // Predicated region
      $region13: #{_lambda_.7} parent=11 // pred_check
        %p140 = pneg %p57
      $region14: #{_lambda_.7} parent=11 // pred_check_branch
        %142 = sbr.rel (%p140) target = $region16
      $region15: #{_lambda_.7} parent=11 // pred_region
        _
      $region16: #{_lambda_.7} parent=11 // pred_fallthru
        _
      // Predicated region
      $region17: #{_lambda_.7} parent=11 // pred_check
        %p143 = pneg %p78
      $region18: #{_lambda_.7} parent=11 // pred_check_branch
        %145 = sbr.rel (%p143) target = $region20
      $region19: #{_lambda_.7} parent=11 // pred_region
        _
      $region20: #{_lambda_.7} parent=11 // pred_fallthru
        _
      // Predicated region
      $region21: #{_lambda_.7} parent=11 // pred_check
        %p146 = pneg %p99
      $region22: #{_lambda_.7} parent=11 // pred_check_branch
        %148 = sbr.rel (%p146) target = $region24
      $region23: #{_lambda_.7} parent=11 // pred_region
        _
      $region24: #{_lambda_.7} parent=11 // pred_fallthru
        _
    $region12: #{_lambda_.7} parent=5 // pred_fallthru
      _
    %p149 = scmp.lt.s32.totalorder %s10, 2
    // Predicated region
    $region25: #{_lambda_.7} parent=5 // pred_check
      %p150 = pneg %p149
    $region26: #{_lambda_.7} parent=5 // pred_check_branch
      %152 = sbr.rel (%p150) target = $region28
    $region27: #{_lambda_.7} parent=5 // pred_region
      // Predicated region
      $region29: #{_lambda_.7} parent=27 // pred_check
        %p153 = pneg %p30
      $region30: #{_lambda_.7} parent=27 // pred_check_branch
        %155 = sbr.rel (%p153) target = $region32
      $region31: #{_lambda_.7} parent=27 // pred_region
        %s156 = smul.u32 16, %s10
        %p157 = scmp.lt.s32.totalorder %s156, 31
        %s158 = scalar_select %p157, %s156, 31
        %s159 = smul.addr %s158, 9
        %s160 = smul.addr %s159, 4
        %s161 = scalar_lea.vmem %s0, %s160
        %s162 = smul.u32 16, %s10
      $region32: #{_lambda_.7} parent=27 // pred_fallthru
        _
    $region28: #{_lambda_.7} parent=5 // pred_fallthru
      _
    %p163 = scmp.le.s32.totalorder 1, %s10
    %p164 = scmp.lt.s32.totalorder %s10, 3
    %p165 = pnand %p163, %p164
    %p166 = pneg %p165
    // Predicated region
    $region33: #{_lambda_.7} parent=5 // pred_check
      _
    $region34: #{_lambda_.7} parent=5 // pred_check_branch
      %168 = sbr.rel (%p165) target = $region36
    $region35: #{_lambda_.7} parent=5 // pred_region
      %s169 = ssub.s32 %s10, 1
      %s170 = smul.u32 16, %s15
      %p171 = scmp.lt.s32.totalorder %s170, 31
      %s172 = scalar_select %p171, %s170, 31
      %s173 = smul.addr %s172, 9
      %s174 = smul.addr %s173, 4
      %s175 = scalar_lea.vmem %s0, %s174
      %p176 = pneg %p36
      %p177 = pneg %p33
      %p178 = pneg %p57
      %p179 = pneg %p54
      %p180 = pneg %p78
      %p181 = pneg %p75
      %p182 = pneg %p99
      %p183 = pneg %p96
      %p184 = pneg %p125
      %p185 = pneg %p122
      %s186 = smul.u32 16, %s15
      %p187 = scmp.lt.s32.totalorder %s186, 31
      %s188 = scalar_select %p187, %s186, 31
      %s189 = smul.addr %s188, 4
      %s190 = scalar_lea.vmem %s4, %s189
      %s191 = smul.u32 16, %s15
      %p192 = scmp.lt.s32.totalorder %s191, 31
      %s193 = scalar_select %p192, %s191, 31
      %s194 = smul.addr %s193, 9
      %s195 = smul.addr %s194, 4
      %s196 = scalar_lea.vmem %s0, %s195
      %s197 = smul.u32 16, %s15
      %s198 = smul.u32 16, %s15
      %p199 = scmp.lt.s32.totalorder %s198, 31
      %s200 = scalar_select %p199, %s198, 31
      %s201 = smul.addr %s200, 4
      %s202 = scalar_lea.vmem %s4, %s201
      %s203 = smul.u32 16, %s15
      %v205 = vld [vmem:[%s196] sm:$0xff]
      %v206 = vld [vmem:[%s196 + $0x8] sm:$0xff]
      %v207 = vld [vmem:[%s196 + $0x10] sm:$0xff]
      %v208 = vld [vmem:[%s196 + $0x18] sm:$0xff]
      %v209 = vld [vmem:[%s196 + $0x20] sm:$0xf]
      %v210 = vld [vmem:[%s196 + $0x24] sm:$0xff]
      %v211 = vld [vmem:[%s196 + $0x2c] sm:$0xff]
      %v212 = vld [vmem:[%s196 + $0x34] sm:$0xff]
      %v213 = vld [vmem:[%s196 + $0x3c] sm:$0xff]
      %v214 = vld [vmem:[%s196 + $0x44] sm:$0xf]
      %v215 = vld [vmem:[%s196 + $0x48] sm:$0xff]
      %v216 = vld [vmem:[%s196 + $0x50] sm:$0xff]
      %v217 = vld [vmem:[%s196 + $0x58] sm:$0xff]
      %v218 = vld [vmem:[%s196 + $0x60] sm:$0xff]
      %v219 = vld [vmem:[%s196 + $0x68] sm:$0xf]
      %v220 = vld [vmem:[%s196 + $0x6c] sm:$0xff]
      %v221 = vld [vmem:[%s196 + $0x74] sm:$0xff]
      %v222 = vld [vmem:[%s196 + $0x7c] sm:$0xff]
      %v223 = vld [vmem:[%s196 + $0x84] sm:$0xff]
      %v224 = vld [vmem:[%s196 + $0x8c] sm:$0xf]
      %v225 = vld [vmem:[%s196 + $0x90] sm:$0xff]
      %v226 = vld [vmem:[%s196 + $0x98] sm:$0xff]
      %v227 = vld [vmem:[%s196 + $0xa0] sm:$0xff]
      %v228 = vld [vmem:[%s196 + $0xa8] sm:$0xff]
      %v229 = vld [vmem:[%s196 + $0xb0] sm:$0xf]
      %v230 = vld [vmem:[%s196 + $0xb4] sm:$0xff]
      %v231 = vld [vmem:[%s196 + $0xbc] sm:$0xff]
      %v232 = vld [vmem:[%s196 + $0xc4] sm:$0xff]
      %v233 = vld [vmem:[%s196 + $0xcc] sm:$0xff]
      %v234 = vld [vmem:[%s196 + $0xd4] sm:$0xf]
      %v235 = vld [vmem:[%s196 + $0xd8] sm:$0xff]
      %v236 = vld [vmem:[%s196 + $0xe0] sm:$0xff]
      %v237 = vld [vmem:[%s196 + $0xe8] sm:$0xff]
      %v238 = vld [vmem:[%s196 + $0xf0] sm:$0xff]
      %v239 = vld [vmem:[%s196 + $0xf8] sm:$0xf]
      %v240 = vld [vmem:[%s196 + $0xfc] sm:$0xff]
      %v241 = vld [vmem:[%s196 + $0x104] sm:$0xff]
      %v242 = vld [vmem:[%s196 + $0x10c] sm:$0xff]
      %v243 = vld [vmem:[%s196 + $0x114] sm:$0xff]
      %v244 = vld [vmem:[%s196 + $0x11c] sm:$0xf]
      %v245 = vld [vmem:[%s196 + $0x120] sm:$0xff]
      %v246 = vld [vmem:[%s196 + $0x128] sm:$0xff]
      %v247 = vld [vmem:[%s196 + $0x130] sm:$0xff]
      %v248 = vld [vmem:[%s196 + $0x138] sm:$0xff]
      %v249 = vld [vmem:[%s196 + $0x140] sm:$0xf]
      %v250 = vld [vmem:[%s196 + $0x144] sm:$0xff]
      %v251 = vld [vmem:[%s196 + $0x14c] sm:$0xff]
      %v252 = vld [vmem:[%s196 + $0x154] sm:$0xff]
      %v253 = vld [vmem:[%s196 + $0x15c] sm:$0xff]
      %v254 = vld [vmem:[%s196 + $0x164] sm:$0xf]
      %v255 = vld [vmem:[%s196 + $0x168] sm:$0xff]
      %v256 = vld [vmem:[%s196 + $0x170] sm:$0xff]
      %v257 = vld [vmem:[%s196 + $0x178] sm:$0xff]
      %v258 = vld [vmem:[%s196 + $0x180] sm:$0xff]
      %v259 = vld [vmem:[%s196 + $0x188] sm:$0xf]
      %v260 = vld [vmem:[%s196 + $0x18c] sm:$0xff]
      %v261 = vld [vmem:[%s196 + $0x194] sm:$0xff]
      %v262 = vld [vmem:[%s196 + $0x19c] sm:$0xff]
      %v263 = vld [vmem:[%s196 + $0x1a4] sm:$0xff]
      %v264 = vld [vmem:[%s196 + $0x1ac] sm:$0xf]
      %v265 = vld [vmem:[%s196 + $0x1b0] sm:$0xff]
      %v266 = vld [vmem:[%s196 + $0x1b8] sm:$0xff]
      %v267 = vld [vmem:[%s196 + $0x1c0] sm:$0xff]
      %v268 = vld [vmem:[%s196 + $0x1c8] sm:$0xff]
      %v269 = vld [vmem:[%s196 + $0x1d0] sm:$0xf]
      %v270 = vld [vmem:[%s196 + $0x1d4] sm:$0xff]
      %v271 = vld [vmem:[%s196 + $0x1dc] sm:$0xff]
      %v272 = vld [vmem:[%s196 + $0x1e4] sm:$0xff]
      %v273 = vld [vmem:[%s196 + $0x1ec] sm:$0xff]
      %v274 = vld [vmem:[%s196 + $0x1f4] sm:$0xf]
      %v275 = vld [vmem:[%s196 + $0x1f8] sm:$0xff]
      %v276 = vld [vmem:[%s196 + $0x200] sm:$0xff]
      %v277 = vld [vmem:[%s196 + $0x208] sm:$0xff]
      %v278 = vld [vmem:[%s196 + $0x210] sm:$0xff]
      %v279 = vld [vmem:[%s196 + $0x218] sm:$0xf]
      %v280 = vld [vmem:[%s196 + $0x21c] sm:$0xff]
      %v281 = vld [vmem:[%s196 + $0x224] sm:$0xff]
      %v282 = vld [vmem:[%s196 + $0x22c] sm:$0xff]
      %v283 = vld [vmem:[%s196 + $0x234] sm:$0xff]
      %v284 = vld [vmem:[%s196 + $0x23c] sm:$0xf]
      %v285 = vld [vmem:[%s1] sm:$0xf]
      %v286 = vld [vmem:[%s1 + $0x4] sm:$0xf]
      %v287 = vld [vmem:[%s1 + $0x8] sm:$0xf]
      %v288 = vld [vmem:[%s1 + $0xc] sm:$0xf]
      %v289 = vld [vmem:[%s1 + $0x10] sm:$0xf]
      %v290 = vld [vmem:[%s1 + $0x14] sm:$0xf]
      %v291 = vld [vmem:[%s1 + $0x18] sm:$0xf]
      %v292 = vld [vmem:[%s1 + $0x1c] sm:$0xf]
      %v293 = vld [vmem:[%s1 + $0x20] sm:$0xf]
      %v294 = vld [vmem:[%s1 + $0x24] sm:$0xf]
      %v295 = vld [vmem:[%s1 + $0x28] sm:$0xf]
      %v296 = vld [vmem:[%s1 + $0x2c] sm:$0xf]
      %v297 = vld [vmem:[%s1 + $0x30] sm:$0xf]
      %v298 = vld [vmem:[%s1 + $0x34] sm:$0xf]
      %v299 = vld [vmem:[%s1 + $0x38] sm:$0xf]
      %v300 = vld [vmem:[%s1 + $0x3c] sm:$0xf]
      %v301 = vld [vmem:[%s1 + $0x40] sm:$0xf]
      %v302 = vld [vmem:[%s1 + $0x44] sm:$0xf]
      %v303 = vld [vmem:[%s1 + $0x48] sm:$0xf]
      %v304 = vld [vmem:[%s1 + $0x4c] sm:$0xf]
      %v305 = vld [vmem:[%s1 + $0x50] sm:$0xf]
      %v306 = vld [vmem:[%s1 + $0x54] sm:$0xf]
      %v307 = vld [vmem:[%s1 + $0x58] sm:$0xf]
      %v308 = vld [vmem:[%s1 + $0x5c] sm:$0xf]
      %v309 = vld [vmem:[%s1 + $0x60] sm:$0xf]
      %v310 = vld [vmem:[%s1 + $0x64] sm:$0xf]
      %v311 = vld [vmem:[%s1 + $0x68] sm:$0xf]
      %v312 = vld [vmem:[%s1 + $0x6c] sm:$0xf]
      %v313 = vld [vmem:[%s1 + $0x70] sm:$0xf]
      %v314 = vld [vmem:[%s1 + $0x74] sm:$0xf]
      %v315 = vld [vmem:[%s1 + $0x78] sm:$0xf]
      %v316 = vld [vmem:[%s1 + $0x7c] sm:$0xf]
      %v317 = vld [vmem:[%s1 + $0x80] sm:$0xf]
      %v318 = vld [vmem:[%s1 + $0x84] sm:$0xf]
      %v319 = vld [vmem:[%s1 + $0x88] sm:$0xf]
      %v320 = vld [vmem:[%s1 + $0x8c] sm:$0xf]
      %v321 = vld [vmem:[%s1 + $0x90] sm:$0xf]
      %v322 = vld [vmem:[%s1 + $0x94] sm:$0xf]
      %v323 = vld [vmem:[%s1 + $0x98] sm:$0xf]
      %v324 = vld [vmem:[%s1 + $0x9c] sm:$0xf]
      %v325 = vld [vmem:[%s1 + $0xa0] sm:$0xf]
      %v326 = vld [vmem:[%s1 + $0xa4] sm:$0xf]
      %v327 = vld [vmem:[%s1 + $0xa8] sm:$0xf]
      %v328 = vld [vmem:[%s1 + $0xac] sm:$0xf]
      %v329 = vld [vmem:[%s1 + $0xb0] sm:$0xf]
      %v330 = vld [vmem:[%s1 + $0xb4] sm:$0xf]
      %v331 = vld [vmem:[%s1 + $0xb8] sm:$0xf]
      %v332 = vld [vmem:[%s1 + $0xbc] sm:$0xf]
      %v333 = vld [vmem:[%s1 + $0xc0] sm:$0xf]
      %v334 = vld [vmem:[%s1 + $0xc4] sm:$0xf]
      %v335 = vld [vmem:[%s1 + $0xc8] sm:$0xf]
      %v336 = vld [vmem:[%s1 + $0xcc] sm:$0xf]
      %v337 = vld [vmem:[%s1 + $0xd0] sm:$0xf]
      %v338 = vld [vmem:[%s1 + $0xd4] sm:$0xf]
      %v339 = vld [vmem:[%s1 + $0xd8] sm:$0xf]
      %v340 = vld [vmem:[%s1 + $0xdc] sm:$0xf]
      %v341 = vld [vmem:[%s1 + $0xe0] sm:$0xf]
      %v342 = vld [vmem:[%s1 + $0xe4] sm:$0xf]
      %v343 = vld [vmem:[%s1 + $0xe8] sm:$0xf]
      %v344 = vld [vmem:[%s1 + $0xec] sm:$0xf]
      %v345 = vld [vmem:[%s1 + $0xf0] sm:$0xf]
      %v346 = vld [vmem:[%s1 + $0xf4] sm:$0xf]
      %v347 = vld [vmem:[%s1 + $0xf8] sm:$0xf]
      %v348 = vld [vmem:[%s1 + $0xfc] sm:$0xf]
      %v349 = vld [vmem:[%s1 + $0x100] sm:$0xf]
      %v350 = vld [vmem:[%s1 + $0x104] sm:$0xf]
      %v351 = vld [vmem:[%s1 + $0x108] sm:$0xf]
      %v352 = vld [vmem:[%s1 + $0x10c] sm:$0xf]
      %v353 = vld [vmem:[%s1 + $0x110] sm:$0xf]
      %v354 = vld [vmem:[%s1 + $0x114] sm:$0xf]
      %v355 = vld [vmem:[%s1 + $0x118] sm:$0xf]
      %v356 = vld [vmem:[%s1 + $0x11c] sm:$0xf]
      %v357 = vld [vmem:[%s1 + $0x120] sm:$0xf]
      %v358 = vld [vmem:[%s1 + $0x124] sm:$0xf]
      %v359 = vld [vmem:[%s1 + $0x128] sm:$0xf]
      %v360 = vld [vmem:[%s1 + $0x12c] sm:$0xf]
      %v361 = vld [vmem:[%s1 + $0x130] sm:$0xf]
      %v362 = vld [vmem:[%s1 + $0x134] sm:$0xf]
      %v363 = vld [vmem:[%s1 + $0x138] sm:$0xf]
      %v364 = vld [vmem:[%s1 + $0x13c] sm:$0xf]
      %v365 = vld [vmem:[%s1 + $0x140] sm:$0xf]
      %v366 = vld [vmem:[%s1 + $0x144] sm:$0xf]
      %v367 = vld [vmem:[%s1 + $0x148] sm:$0xf]
      %v368 = vld [vmem:[%s1 + $0x14c] sm:$0xf]
      %v369 = vld [vmem:[%s1 + $0x150] sm:$0xf]
      %v370 = vld [vmem:[%s1 + $0x154] sm:$0xf]
      %v371 = vld [vmem:[%s1 + $0x158] sm:$0xf]
      %v372 = vld [vmem:[%s1 + $0x15c] sm:$0xf]
      %v373 = vld [vmem:[%s1 + $0x160] sm:$0xf]
      %v374 = vld [vmem:[%s1 + $0x164] sm:$0xf]
      %v375 = vld [vmem:[%s1 + $0x168] sm:$0xf]
      %v376 = vld [vmem:[%s1 + $0x16c] sm:$0xf]
      %v377 = vld [vmem:[%s1 + $0x170] sm:$0xf]
      %v378 = vld [vmem:[%s1 + $0x174] sm:$0xf]
      %v379 = vld [vmem:[%s1 + $0x178] sm:$0xf]
      %v380 = vld [vmem:[%s1 + $0x17c] sm:$0xf]
      %v381 = vld [vmem:[%s1 + $0x180] sm:$0xf]
      %v382 = vld [vmem:[%s1 + $0x184] sm:$0xf]
      %v383 = vld [vmem:[%s1 + $0x188] sm:$0xf]
      %v384 = vld [vmem:[%s1 + $0x18c] sm:$0xf]
      %v385 = vld [vmem:[%s1 + $0x190] sm:$0xf]
      %v386 = vld [vmem:[%s1 + $0x194] sm:$0xf]
      %v387 = vld [vmem:[%s1 + $0x198] sm:$0xf]
      %v388 = vld [vmem:[%s1 + $0x19c] sm:$0xf]
      %v389 = vld [vmem:[%s1 + $0x1a0] sm:$0xf]
      %v390 = vld [vmem:[%s1 + $0x1a4] sm:$0xf]
      %v391 = vld [vmem:[%s1 + $0x1a8] sm:$0xf]
      %v392 = vld [vmem:[%s1 + $0x1ac] sm:$0xf]
      %v393 = vld [vmem:[%s1 + $0x1b0] sm:$0xf]
      %v394 = vld [vmem:[%s1 + $0x1b4] sm:$0xf]
      %v395 = vld [vmem:[%s1 + $0x1b8] sm:$0xf]
      %v396 = vld [vmem:[%s1 + $0x1bc] sm:$0xf]
      %v397 = vld [vmem:[%s1 + $0x1c0] sm:$0xf]
      %v398 = vld [vmem:[%s1 + $0x1c4] sm:$0xf]
      %v399 = vld [vmem:[%s1 + $0x1c8] sm:$0xf]
      %v400 = vld [vmem:[%s1 + $0x1cc] sm:$0xf]
      %v401 = vld [vmem:[%s1 + $0x1d0] sm:$0xf]
      %v402 = vld [vmem:[%s1 + $0x1d4] sm:$0xf]
      %v403 = vld [vmem:[%s1 + $0x1d8] sm:$0xf]
      %v404 = vld [vmem:[%s1 + $0x1dc] sm:$0xf]
      %v405 = vld [vmem:[%s1 + $0x1e0] sm:$0xf]
      %v406 = vld [vmem:[%s1 + $0x1e4] sm:$0xf]
      %v407 = vld [vmem:[%s1 + $0x1e8] sm:$0xf]
      %v408 = vld [vmem:[%s1 + $0x1ec] sm:$0xf]
      %v409 = vld [vmem:[%s1 + $0x1f0] sm:$0xf]
      %v410 = vld [vmem:[%s1 + $0x1f4] sm:$0xf]
      %v411 = vld [vmem:[%s1 + $0x1f8] sm:$0xf]
      %v412 = vld [vmem:[%s1 + $0x1fc] sm:$0xf]
      %v413 = vld [vmem:[%s1 + $0x200] sm:$0xf]
      %v414 = vld [vmem:[%s1 + $0x204] sm:$0xf]
      %v415 = vld [vmem:[%s1 + $0x208] sm:$0xf]
      %v416 = vld [vmem:[%s1 + $0x20c] sm:$0xf]
      %v417 = vld [vmem:[%s1 + $0x210] sm:$0xf]
      %v418 = vld [vmem:[%s1 + $0x214] sm:$0xf]
      %v419 = vld [vmem:[%s1 + $0x218] sm:$0xf]
      %v420 = vld [vmem:[%s1 + $0x21c] sm:$0xf]
      %v421 = vld [vmem:[%s1 + $0x220] sm:$0xf]
      %v422 = vld [vmem:[%s1 + $0x224] sm:$0xf]
      %v423 = vld [vmem:[%s1 + $0x228] sm:$0xf]
      %v424 = vld [vmem:[%s1 + $0x22c] sm:$0xf]
      %v425 = vld [vmem:[%s1 + $0x230] sm:$0xf]
      %v426 = vld [vmem:[%s1 + $0x234] sm:$0xf]
      %v427 = vld [vmem:[%s1 + $0x238] sm:$0xf]
      %v428 = vld [vmem:[%s1 + $0x23c] sm:$0xf]
      %v509 = vunpack.c.l.b16 %v205
      %v510 = vunpack.c.h.b16 %v205
      %v511 = vunpack.c.l.b16 %v206
      %v512 = vunpack.c.h.b16 %v206
      %v513 = vunpack.c.l.b16 %v207
      %v514 = vunpack.c.h.b16 %v207
      %v515 = vunpack.c.l.b16 %v208
      %v516 = vunpack.c.h.b16 %v208
      %v517 = vunpack.c.l.b16 %v209
      %v518 = vunpack.c.l.b16 %v210
      %v519 = vunpack.c.h.b16 %v210
      %v520 = vunpack.c.l.b16 %v211
      %v521 = vunpack.c.h.b16 %v211
      %v522 = vunpack.c.l.b16 %v212
      %v523 = vunpack.c.h.b16 %v212
      %v524 = vunpack.c.l.b16 %v213
      %v525 = vunpack.c.h.b16 %v213
      %v526 = vunpack.c.l.b16 %v214
      %v527 = vunpack.c.l.b16 %v215
      %v528 = vunpack.c.h.b16 %v215
      %v529 = vunpack.c.l.b16 %v216
      %v530 = vunpack.c.h.b16 %v216
      %v531 = vunpack.c.l.b16 %v217
      %v532 = vunpack.c.h.b16 %v217
      %v533 = vunpack.c.l.b16 %v218
      %v534 = vunpack.c.h.b16 %v218
      %v535 = vunpack.c.l.b16 %v219
      %v536 = vunpack.c.l.b16 %v220
      %v537 = vunpack.c.h.b16 %v220
      %v538 = vunpack.c.l.b16 %v221
      %v539 = vunpack.c.h.b16 %v221
      %v540 = vunpack.c.l.b16 %v222
      %v541 = vunpack.c.h.b16 %v222
      %v542 = vunpack.c.l.b16 %v223
      %v543 = vunpack.c.h.b16 %v223
      %v544 = vunpack.c.l.b16 %v224
      %v545 = vunpack.c.l.b16 %v225
      %v546 = vunpack.c.h.b16 %v225
      %v547 = vunpack.c.l.b16 %v226
      %v548 = vunpack.c.h.b16 %v226
      %v549 = vunpack.c.l.b16 %v227
      %v550 = vunpack.c.h.b16 %v227
      %v551 = vunpack.c.l.b16 %v228
      %v552 = vunpack.c.h.b16 %v228
      %v553 = vunpack.c.l.b16 %v229
      %v554 = vunpack.c.l.b16 %v230
      %v555 = vunpack.c.h.b16 %v230
      %v556 = vunpack.c.l.b16 %v231
      %v557 = vunpack.c.h.b16 %v231
      %v558 = vunpack.c.l.b16 %v232
      %v559 = vunpack.c.h.b16 %v232
      %v560 = vunpack.c.l.b16 %v233
      %v561 = vunpack.c.h.b16 %v233
      %v562 = vunpack.c.l.b16 %v234
      %v563 = vunpack.c.l.b16 %v235
      %v564 = vunpack.c.h.b16 %v235
      %v565 = vunpack.c.l.b16 %v236
      %v566 = vunpack.c.h.b16 %v236
      %v567 = vunpack.c.l.b16 %v237
      %v568 = vunpack.c.h.b16 %v237
      %v569 = vunpack.c.l.b16 %v238
      %v570 = vunpack.c.h.b16 %v238
      %v571 = vunpack.c.l.b16 %v239
      %v572 = vunpack.c.l.b16 %v240
      %v573 = vunpack.c.h.b16 %v240
      %v574 = vunpack.c.l.b16 %v241
      %v575 = vunpack.c.h.b16 %v241
      %v576 = vunpack.c.l.b16 %v242
      %v577 = vunpack.c.h.b16 %v242
      %v578 = vunpack.c.l.b16 %v243
      %v579 = vunpack.c.h.b16 %v243
      %v580 = vunpack.c.l.b16 %v244
      %v581 = vunpack.c.l.b16 %v245
      %v582 = vunpack.c.h.b16 %v245
      %v583 = vunpack.c.l.b16 %v246
      %v584 = vunpack.c.h.b16 %v246
      %v585 = vunpack.c.l.b16 %v247
      %v586 = vunpack.c.h.b16 %v247
      %v587 = vunpack.c.l.b16 %v248
      %v588 = vunpack.c.h.b16 %v248
      %v589 = vunpack.c.l.b16 %v249
      %v590 = vunpack.c.l.b16 %v250
      %v591 = vunpack.c.h.b16 %v250
      %v592 = vunpack.c.l.b16 %v251
      %v593 = vunpack.c.h.b16 %v251
      %v594 = vunpack.c.l.b16 %v252
      %v595 = vunpack.c.h.b16 %v252
      %v596 = vunpack.c.l.b16 %v253
      %v597 = vunpack.c.h.b16 %v253
      %v598 = vunpack.c.l.b16 %v254
      %v599 = vunpack.c.l.b16 %v255
      %v600 = vunpack.c.h.b16 %v255
      %v601 = vunpack.c.l.b16 %v256
      %v602 = vunpack.c.h.b16 %v256
      %v603 = vunpack.c.l.b16 %v257
      %v604 = vunpack.c.h.b16 %v257
      %v605 = vunpack.c.l.b16 %v258
      %v606 = vunpack.c.h.b16 %v258
      %v607 = vunpack.c.l.b16 %v259
      %v608 = vunpack.c.l.b16 %v260
      %v609 = vunpack.c.h.b16 %v260
      %v610 = vunpack.c.l.b16 %v261
      %v611 = vunpack.c.h.b16 %v261
      %v612 = vunpack.c.l.b16 %v262
      %v613 = vunpack.c.h.b16 %v262
      %v614 = vunpack.c.l.b16 %v263
      %v615 = vunpack.c.h.b16 %v263
      %v616 = vunpack.c.l.b16 %v264
      %v617 = vunpack.c.l.b16 %v265
      %v618 = vunpack.c.h.b16 %v265
      %v619 = vunpack.c.l.b16 %v266
      %v620 = vunpack.c.h.b16 %v266
      %v621 = vunpack.c.l.b16 %v267
      %v622 = vunpack.c.h.b16 %v267
      %v623 = vunpack.c.l.b16 %v268
      %v624 = vunpack.c.h.b16 %v268
      %v625 = vunpack.c.l.b16 %v269
      %v626 = vunpack.c.l.b16 %v270
      %v627 = vunpack.c.h.b16 %v270
      %v628 = vunpack.c.l.b16 %v271
      %v629 = vunpack.c.h.b16 %v271
      %v630 = vunpack.c.l.b16 %v272
      %v631 = vunpack.c.h.b16 %v272
      %v632 = vunpack.c.l.b16 %v273
      %v633 = vunpack.c.h.b16 %v273
      %v634 = vunpack.c.l.b16 %v274
      %v635 = vunpack.c.l.b16 %v275
      %v636 = vunpack.c.h.b16 %v275
      %v637 = vunpack.c.l.b16 %v276
      %v638 = vunpack.c.h.b16 %v276
      %v639 = vunpack.c.l.b16 %v277
      %v640 = vunpack.c.h.b16 %v277
      %v641 = vunpack.c.l.b16 %v278
      %v642 = vunpack.c.h.b16 %v278
      %v643 = vunpack.c.l.b16 %v279
      %v644 = vunpack.c.l.b16 %v280
      %v645 = vunpack.c.h.b16 %v280
      %v646 = vunpack.c.l.b16 %v281
      %v647 = vunpack.c.h.b16 %v281
      %v648 = vunpack.c.l.b16 %v282
      %v649 = vunpack.c.h.b16 %v282
      %v650 = vunpack.c.l.b16 %v283
      %v651 = vunpack.c.h.b16 %v283
      %v652 = vunpack.c.l.b16 %v284
      %v653 = vpack.c.b16 %v518, %v509
      %v654 = vpack.c.b16 %v519, %v510
      %v655 = vpack.c.b16 %v520, %v511
      %v656 = vpack.c.b16 %v521, %v512
      %v657 = vpack.c.b16 %v522, %v513
      %v658 = vpack.c.b16 %v523, %v514
      %v659 = vpack.c.b16 %v524, %v515
      %v660 = vpack.c.b16 %v525, %v516
      %v661 = vpack.c.b16 %v526, %v517
      %v662 = vpack.c.b16 %v536, %v527
      %v663 = vpack.c.b16 %v537, %v528
      %v664 = vpack.c.b16 %v538, %v529
      %v665 = vpack.c.b16 %v539, %v530
      %v666 = vpack.c.b16 %v540, %v531
      %v667 = vpack.c.b16 %v541, %v532
      %v668 = vpack.c.b16 %v542, %v533
      %v669 = vpack.c.b16 %v543, %v534
      %v670 = vpack.c.b16 %v544, %v535
      %v671 = vpack.c.b16 %v554, %v545
      %v672 = vpack.c.b16 %v555, %v546
      %v673 = vpack.c.b16 %v556, %v547
      %v674 = vpack.c.b16 %v557, %v548
      %v675 = vpack.c.b16 %v558, %v549
      %v676 = vpack.c.b16 %v559, %v550
      %v677 = vpack.c.b16 %v560, %v551
      %v678 = vpack.c.b16 %v561, %v552
      %v679 = vpack.c.b16 %v562, %v553
      %v680 = vpack.c.b16 %v572, %v563
      %v681 = vpack.c.b16 %v573, %v564
      %v682 = vpack.c.b16 %v574, %v565
      %v683 = vpack.c.b16 %v575, %v566
      %v684 = vpack.c.b16 %v576, %v567
      %v685 = vpack.c.b16 %v577, %v568
      %v686 = vpack.c.b16 %v578, %v569
      %v687 = vpack.c.b16 %v579, %v570
      %v688 = vpack.c.b16 %v580, %v571
      %v689 = vpack.c.b16 %v590, %v581
      %v690 = vpack.c.b16 %v591, %v582
      %v691 = vpack.c.b16 %v592, %v583
      %v692 = vpack.c.b16 %v593, %v584
      %v693 = vpack.c.b16 %v594, %v585
      %v694 = vpack.c.b16 %v595, %v586
      %v695 = vpack.c.b16 %v596, %v587
      %v696 = vpack.c.b16 %v597, %v588
      %v697 = vpack.c.b16 %v598, %v589
      %v698 = vpack.c.b16 %v608, %v599
      %v699 = vpack.c.b16 %v609, %v600
      %v700 = vpack.c.b16 %v610, %v601
      %v701 = vpack.c.b16 %v611, %v602
      %v702 = vpack.c.b16 %v612, %v603
      %v703 = vpack.c.b16 %v613, %v604
      %v704 = vpack.c.b16 %v614, %v605
      %v705 = vpack.c.b16 %v615, %v606
      %v706 = vpack.c.b16 %v616, %v607
      %v707 = vpack.c.b16 %v626, %v617
      %v708 = vpack.c.b16 %v627, %v618
      %v709 = vpack.c.b16 %v628, %v619
      %v710 = vpack.c.b16 %v629, %v620
      %v711 = vpack.c.b16 %v630, %v621
      %v712 = vpack.c.b16 %v631, %v622
      %v713 = vpack.c.b16 %v632, %v623
      %v714 = vpack.c.b16 %v633, %v624
      %v715 = vpack.c.b16 %v634, %v625
      %v716 = vpack.c.b16 %v644, %v635
      %v717 = vpack.c.b16 %v645, %v636
      %v718 = vpack.c.b16 %v646, %v637
      %v719 = vpack.c.b16 %v647, %v638
      %v720 = vpack.c.b16 %v648, %v639
      %v721 = vpack.c.b16 %v649, %v640
      %v722 = vpack.c.b16 %v650, %v641
      %v723 = vpack.c.b16 %v651, %v642
      %v724 = vpack.c.b16 %v652, %v643
      %v941 = vunpack.c.l.b16 %v285
      %v942 = vunpack.c.l.b16 %v286
      %v943 = vunpack.c.l.b16 %v287
      %v944 = vunpack.c.l.b16 %v288
      %v945 = vunpack.c.l.b16 %v289
      %v946 = vunpack.c.l.b16 %v290
      %v947 = vunpack.c.l.b16 %v291
      %v948 = vunpack.c.l.b16 %v292
      %v949 = vunpack.c.l.b16 %v293
      %v950 = vunpack.c.l.b16 %v294
      %v951 = vunpack.c.l.b16 %v295
      %v952 = vunpack.c.l.b16 %v296
      %v953 = vunpack.c.l.b16 %v297
      %v954 = vunpack.c.l.b16 %v298
      %v955 = vunpack.c.l.b16 %v299
      %v956 = vunpack.c.l.b16 %v300
      %v957 = vunpack.c.l.b16 %v301
      %v958 = vunpack.c.l.b16 %v302
      %v959 = vunpack.c.l.b16 %v303
      %v960 = vunpack.c.l.b16 %v304
      %v961 = vunpack.c.l.b16 %v305
      %v962 = vunpack.c.l.b16 %v306
      %v963 = vunpack.c.l.b16 %v307
      %v964 = vunpack.c.l.b16 %v308
      %v965 = vunpack.c.l.b16 %v309
      %v966 = vunpack.c.l.b16 %v310
      %v967 = vunpack.c.l.b16 %v311
      %v968 = vunpack.c.l.b16 %v312
      %v969 = vunpack.c.l.b16 %v313
      %v970 = vunpack.c.l.b16 %v314
      %v971 = vunpack.c.l.b16 %v315
      %v972 = vunpack.c.l.b16 %v316
      %v973 = vunpack.c.l.b16 %v317
      %v974 = vunpack.c.l.b16 %v318
      %v975 = vunpack.c.l.b16 %v319
      %v976 = vunpack.c.l.b16 %v320
      %v977 = vunpack.c.l.b16 %v321
      %v978 = vunpack.c.l.b16 %v322
      %v979 = vunpack.c.l.b16 %v323
      %v980 = vunpack.c.l.b16 %v324
      %v981 = vunpack.c.l.b16 %v325
      %v982 = vunpack.c.l.b16 %v326
      %v983 = vunpack.c.l.b16 %v327
      %v984 = vunpack.c.l.b16 %v328
      %v985 = vunpack.c.l.b16 %v329
      %v986 = vunpack.c.l.b16 %v330
      %v987 = vunpack.c.l.b16 %v331
      %v988 = vunpack.c.l.b16 %v332
      %v989 = vunpack.c.l.b16 %v333
      %v990 = vunpack.c.l.b16 %v334
      %v991 = vunpack.c.l.b16 %v335
      %v992 = vunpack.c.l.b16 %v336
      %v993 = vunpack.c.l.b16 %v337
      %v994 = vunpack.c.l.b16 %v338
      %v995 = vunpack.c.l.b16 %v339
      %v996 = vunpack.c.l.b16 %v340
      %v997 = vunpack.c.l.b16 %v341
      %v998 = vunpack.c.l.b16 %v342
      %v999 = vunpack.c.l.b16 %v343
      %v1000 = vunpack.c.l.b16 %v344
      %v1001 = vunpack.c.l.b16 %v345
      %v1002 = vunpack.c.l.b16 %v346
      %v1003 = vunpack.c.l.b16 %v347
      %v1004 = vunpack.c.l.b16 %v348
      %v1005 = vunpack.c.l.b16 %v349
      %v1006 = vunpack.c.l.b16 %v350
      %v1007 = vunpack.c.l.b16 %v351
      %v1008 = vunpack.c.l.b16 %v352
      %v1009 = vunpack.c.l.b16 %v353
      %v1010 = vunpack.c.l.b16 %v354
      %v1011 = vunpack.c.l.b16 %v355
      %v1012 = vunpack.c.l.b16 %v356
      %v1013 = vunpack.c.l.b16 %v357
      %v1014 = vunpack.c.l.b16 %v358
      %v1015 = vunpack.c.l.b16 %v359
      %v1016 = vunpack.c.l.b16 %v360
      %v1017 = vunpack.c.l.b16 %v361
      %v1018 = vunpack.c.l.b16 %v362
      %v1019 = vunpack.c.l.b16 %v363
      %v1020 = vunpack.c.l.b16 %v364
      %v1021 = vunpack.c.l.b16 %v365
      %v1022 = vunpack.c.l.b16 %v366
      %v1023 = vunpack.c.l.b16 %v367
      %v1024 = vunpack.c.l.b16 %v368
      %v1025 = vunpack.c.l.b16 %v369
      %v1026 = vunpack.c.l.b16 %v370
      %v1027 = vunpack.c.l.b16 %v371
      %v1028 = vunpack.c.l.b16 %v372
      %v1029 = vunpack.c.l.b16 %v373
      %v1030 = vunpack.c.l.b16 %v374
      %v1031 = vunpack.c.l.b16 %v375
      %v1032 = vunpack.c.l.b16 %v376
      %v1033 = vunpack.c.l.b16 %v377
      %v1034 = vunpack.c.l.b16 %v378
      %v1035 = vunpack.c.l.b16 %v379
      %v1036 = vunpack.c.l.b16 %v380
      %v1037 = vunpack.c.l.b16 %v381
      %v1038 = vunpack.c.l.b16 %v382
      %v1039 = vunpack.c.l.b16 %v383
      %v1040 = vunpack.c.l.b16 %v384
      %v1041 = vunpack.c.l.b16 %v385
      %v1042 = vunpack.c.l.b16 %v386
      %v1043 = vunpack.c.l.b16 %v387
      %v1044 = vunpack.c.l.b16 %v388
      %v1045 = vunpack.c.l.b16 %v389
      %v1046 = vunpack.c.l.b16 %v390
      %v1047 = vunpack.c.l.b16 %v391
      %v1048 = vunpack.c.l.b16 %v392
      %v1049 = vunpack.c.l.b16 %v393
      %v1050 = vunpack.c.l.b16 %v394
      %v1051 = vunpack.c.l.b16 %v395
      %v1052 = vunpack.c.l.b16 %v396
      %v1053 = vunpack.c.l.b16 %v397
      %v1054 = vunpack.c.l.b16 %v398
      %v1055 = vunpack.c.l.b16 %v399
      %v1056 = vunpack.c.l.b16 %v400
      %v1057 = vunpack.c.l.b16 %v401
      %v1058 = vunpack.c.l.b16 %v402
      %v1059 = vunpack.c.l.b16 %v403
      %v1060 = vunpack.c.l.b16 %v404
      %v1061 = vunpack.c.l.b16 %v405
      %v1062 = vunpack.c.l.b16 %v406
      %v1063 = vunpack.c.l.b16 %v407
      %v1064 = vunpack.c.l.b16 %v408
      %v1065 = vunpack.c.l.b16 %v409
      %v1066 = vunpack.c.l.b16 %v410
      %v1067 = vunpack.c.l.b16 %v411
      %v1068 = vunpack.c.l.b16 %v412
      %v1069 = vunpack.c.l.b16 %v413
      %v1070 = vunpack.c.l.b16 %v414
      %v1071 = vunpack.c.l.b16 %v415
      %v1072 = vunpack.c.l.b16 %v416
      %v1073 = vunpack.c.l.b16 %v417
      %v1074 = vunpack.c.l.b16 %v418
      %v1075 = vunpack.c.l.b16 %v419
      %v1076 = vunpack.c.l.b16 %v420
      %v1077 = vunpack.c.l.b16 %v421
      %v1078 = vunpack.c.l.b16 %v422
      %v1079 = vunpack.c.l.b16 %v423
      %v1080 = vunpack.c.l.b16 %v424
      %v1081 = vunpack.c.l.b16 %v425
      %v1082 = vunpack.c.l.b16 %v426
      %v1083 = vunpack.c.l.b16 %v427
      %v1084 = vunpack.c.l.b16 %v428
      %v1085 = vpack.c.b16 %v942, %v941
      %v1086 = vpack.c.b16 %v944, %v943
      %v1087 = vpack.c.b16 %v946, %v945
      %v1088 = vpack.c.b16 %v948, %v947
      %v1089 = vpack.c.b16 %v950, %v949
      %v1090 = vpack.c.b16 %v952, %v951
      %v1091 = vpack.c.b16 %v954, %v953
      %v1092 = vpack.c.b16 %v956, %v955
      %v1093 = vpack.c.b16 %v958, %v957
      %v1094 = vpack.c.b16 %v960, %v959
      %v1095 = vpack.c.b16 %v962, %v961
      %v1096 = vpack.c.b16 %v964, %v963
      %v1097 = vpack.c.b16 %v966, %v965
      %v1098 = vpack.c.b16 %v968, %v967
      %v1099 = vpack.c.b16 %v970, %v969
      %v1100 = vpack.c.b16 %v972, %v971
      %v1101 = vpack.c.b16 %v974, %v973
      %v1102 = vpack.c.b16 %v976, %v975
      %v1103 = vpack.c.b16 %v978, %v977
      %v1104 = vpack.c.b16 %v980, %v979
      %v1105 = vpack.c.b16 %v982, %v981
      %v1106 = vpack.c.b16 %v984, %v983
      %v1107 = vpack.c.b16 %v986, %v985
      %v1108 = vpack.c.b16 %v988, %v987
      %v1109 = vpack.c.b16 %v990, %v989
      %v1110 = vpack.c.b16 %v992, %v991
      %v1111 = vpack.c.b16 %v994, %v993
      %v1112 = vpack.c.b16 %v996, %v995
      %v1113 = vpack.c.b16 %v998, %v997
      %v1114 = vpack.c.b16 %v1000, %v999
      %v1115 = vpack.c.b16 %v1002, %v1001
      %v1116 = vpack.c.b16 %v1004, %v1003
      %v1117 = vpack.c.b16 %v1006, %v1005
      %v1118 = vpack.c.b16 %v1008, %v1007
      %v1119 = vpack.c.b16 %v1010, %v1009
      %v1120 = vpack.c.b16 %v1012, %v1011
      %v1121 = vpack.c.b16 %v1014, %v1013
      %v1122 = vpack.c.b16 %v1016, %v1015
      %v1123 = vpack.c.b16 %v1018, %v1017
      %v1124 = vpack.c.b16 %v1020, %v1019
      %v1125 = vpack.c.b16 %v1022, %v1021
      %v1126 = vpack.c.b16 %v1024, %v1023
      %v1127 = vpack.c.b16 %v1026, %v1025
      %v1128 = vpack.c.b16 %v1028, %v1027
      %v1129 = vpack.c.b16 %v1030, %v1029
      %v1130 = vpack.c.b16 %v1032, %v1031
      %v1131 = vpack.c.b16 %v1034, %v1033
      %v1132 = vpack.c.b16 %v1036, %v1035
      %v1133 = vpack.c.b16 %v1038, %v1037
      %v1134 = vpack.c.b16 %v1040, %v1039
      %v1135 = vpack.c.b16 %v1042, %v1041
      %v1136 = vpack.c.b16 %v1044, %v1043
      %v1137 = vpack.c.b16 %v1046, %v1045
      %v1138 = vpack.c.b16 %v1048, %v1047
      %v1139 = vpack.c.b16 %v1050, %v1049
      %v1140 = vpack.c.b16 %v1052, %v1051
      %v1141 = vpack.c.b16 %v1054, %v1053
      %v1142 = vpack.c.b16 %v1056, %v1055
      %v1143 = vpack.c.b16 %v1058, %v1057
      %v1144 = vpack.c.b16 %v1060, %v1059
      %v1145 = vpack.c.b16 %v1062, %v1061
      %v1146 = vpack.c.b16 %v1064, %v1063
      %v1147 = vpack.c.b16 %v1066, %v1065
      %v1148 = vpack.c.b16 %v1068, %v1067
      %v1149 = vpack.c.b16 %v1070, %v1069
      %v1150 = vpack.c.b16 %v1072, %v1071
      %v1151 = vpack.c.b16 %v1074, %v1073
      %v1152 = vpack.c.b16 %v1076, %v1075
      %v1153 = vpack.c.b16 %v1078, %v1077
      %v1154 = vpack.c.b16 %v1080, %v1079
      %v1155 = vpack.c.b16 %v1082, %v1081
      %v1156 = vpack.c.b16 %v1084, %v1083
      %1229 = vmatprep.subr.bf16.mxu0 0
      %1230 = vmatpush1.bf16.msra.mxu0 %v1085
      %1231 = vmatprep.subr.bf16.mxu0 0
      %1232 = vmatpush1.bf16.msra.mxu0 %v1086
      %1233 = vmatprep.subr.bf16.mxu0 0
      %1234 = vmatpush1.bf16.msra.mxu0 %v1087
      %1235 = vmatprep.subr.bf16.mxu0 0
      %1236 = vmatpush1.bf16.msra.mxu0 %v1088
      %1237 = vmatprep.subr.bf16.mxu0 0
      %1238 = vmatpush1.bf16.msra.mxu0 %v1089
      %1239 = vmatprep.subr.bf16.mxu0 0
      %1240 = vmatpush1.bf16.msra.mxu0 %v1090
      %1241 = vmatprep.subr.bf16.mxu0 0
      %1242 = vmatpush1.bf16.msra.mxu0 %v1091
      %1243 = vmatprep.subr.bf16.mxu0 0
      %1244 = vmatpush1.bf16.msra.mxu0 %v1092
      %1245 = vmatprep.subr.bf16.mxu0 0
      %1246 = vmatpush1.bf16.msra.mxu0 %v1093
      %1247 = vmatprep.subr.bf16.mxu0 0
      %1248 = vmatpush1.bf16.msra.mxu0 %v1094
      %1249 = vmatprep.subr.bf16.mxu0 0
      %1250 = vmatpush1.bf16.msra.mxu0 %v1095
      %1251 = vmatprep.subr.bf16.mxu0 0
      %1252 = vmatpush1.bf16.msra.mxu0 %v1096
      %1253 = vmatprep.subr.bf16.mxu0 0
      %1254 = vmatpush1.bf16.msra.mxu0 %v1097
      %1255 = vmatprep.subr.bf16.mxu0 0
      %1256 = vmatpush1.bf16.msra.mxu0 %v1098
      %1257 = vmatprep.subr.bf16.mxu0 0
      %1258 = vmatpush1.bf16.msra.mxu0 %v1099
      %1259 = vmatprep.subr.bf16.mxu0 0
      %1260 = vmatpush1.bf16.msra.mxu0 %v1100
      %1261 = vmatprep.mubr.bf16.mxu0 %v654
      %1262 = vmatmul.mubr.bf16.gmra.mrb[0].mxu0 %v653
      %v1263 = vpop.f32.mrb[0].mxu0
      %v1264 = vadd.f32 0.0, %v1263
      %v1265 = vpop.f32.mrb[0].mxu0
      %v1266 = vpop.f32.mrb[0].mxu0
      %v1267 = vadd.f32 0.0, %v1266
      %v1268 = vpop.f32.mrb[0].mxu0
      %1269 = vmatprep.mubr.bf16.mxu0 %v663
      %1270 = vmatmul.mubr.bf16.gmra.mrb[0].mxu0 %v662
      %v1271 = vpop.f32.mrb[0].mxu0
      %v1272 = vadd.f32 0.0, %v1271
      %v1273 = vpop.f32.mrb[0].mxu0
      %v1274 = vpop.f32.mrb[0].mxu0
      %v1275 = vadd.f32 0.0, %v1274
      %v1276 = vpop.f32.mrb[0].mxu0
      %1277 = vmatprep.mubr.bf16.mxu0 %v672
      %1278 = vmatmul.mubr.bf16.gmra.mrb[0].mxu0 %v671
      %v1279 = vpop.f32.mrb[0].mxu0
      %v1280 = vadd.f32 0.0, %v1279
      %v1281 = vpop.f32.mrb[0].mxu0
      %v1282 = vpop.f32.mrb[0].mxu0
      %v1283 = vadd.f32 0.0, %v1282
      %v1284 = vpop.f32.mrb[0].mxu0
      %1285 = vmatprep.mubr.bf16.mxu0 %v681
      %1286 = vmatmul.mubr.bf16.gmra.mrb[0].mxu0 %v680
      %v1287 = vpop.f32.mrb[0].mxu0
      %v1288 = vadd.f32 0.0, %v1287
      %v1289 = vpop.f32.mrb[0].mxu0
      %v1290 = vpop.f32.mrb[0].mxu0
      %v1291 = vadd.f32 0.0, %v1290
      %v1292 = vpop.f32.mrb[0].mxu0
      %1293 = vmatprep.mubr.bf16.mxu0 %v690
      %1294 = vmatmul.mubr.bf16.gmra.mrb[0].mxu0 %v689
      %v1295 = vpop.f32.mrb[0].mxu0
      %v1296 = vadd.f32 0.0, %v1295
      %v1297 = vpop.f32.mrb[0].mxu0
      %v1298 = vpop.f32.mrb[0].mxu0
      %v1299 = vadd.f32 0.0, %v1298
      %v1300 = vpop.f32.mrb[0].mxu0
      %1301 = vmatprep.mubr.bf16.mxu0 %v699
      %1302 = vmatmul.mubr.bf16.gmra.mrb[0].mxu0 %v698
      %v1303 = vpop.f32.mrb[0].mxu0
      %v1304 = vadd.f32 0.0, %v1303
      %v1305 = vpop.f32.mrb[0].mxu0
      %v1306 = vpop.f32.mrb[0].mxu0
      %v1307 = vadd.f32 0.0, %v1306
      %v1308 = vpop.f32.mrb[0].mxu0
      %1309 = vmatprep.mubr.bf16.mxu0 %v708
      %1310 = vmatmul.mubr.bf16.gmra.mrb[0].mxu0 %v707
      %v1311 = vpop.f32.mrb[0].mxu0
      %v1312 = vadd.f32 0.0, %v1311
      %v1313 = vpop.f32.mrb[0].mxu0
      %v1314 = vpop.f32.mrb[0].mxu0
      %v1315 = vadd.f32 0.0, %v1314
      %v1316 = vpop.f32.mrb[0].mxu0
      %1317 = vmatprep.mubr.bf16.mxu0 %v717
      %1318 = vmatmul.mubr.bf16.gmra.mrb[0].mxu0 %v716
      %v1319 = vpop.f32.mrb[0].mxu0
      %v1320 = vadd.f32 0.0, %v1319
      %v1321 = vpop.f32.mrb[0].mxu0
      %v1322 = vpop.f32.mrb[0].mxu0
      %v1323 = vadd.f32 0.0, %v1322
      %v1324 = vpop.f32.mrb[0].mxu0
      %1325 = vdwg.mxu0
      %1326 = vmatprep.subr.bf16.mxu0 0
      %1327 = vmatpush1.bf16.msra.mxu0 %v1101
      %1328 = vmatprep.subr.bf16.mxu0 0
      %1329 = vmatpush1.bf16.msra.mxu0 %v1102
      %1330 = vmatprep.subr.bf16.mxu0 0
      %1331 = vmatpush1.bf16.msra.mxu0 %v1103
      %1332 = vmatprep.subr.bf16.mxu0 0
      %1333 = vmatpush1.bf16.msra.mxu0 %v1104
      %1334 = vmatprep.subr.bf16.mxu0 0
      %1335 = vmatpush1.bf16.msra.mxu0 %v1105
      %1336 = vmatprep.subr.bf16.mxu0 0
      %1337 = vmatpush1.bf16.msra.mxu0 %v1106
      %1338 = vmatprep.subr.bf16.mxu0 0
      %1339 = vmatpush1.bf16.msra.mxu0 %v1107
      %1340 = vmatprep.subr.bf16.mxu0 0
      %1341 = vmatpush1.bf16.msra.mxu0 %v1108
      %1342 = vmatprep.subr.bf16.mxu0 0
      %1343 = vmatpush1.bf16.msra.mxu0 %v1109
      %1344 = vmatprep.subr.bf16.mxu0 0
      %1345 = vmatpush1.bf16.msra.mxu0 %v1110
      %1346 = vmatprep.subr.bf16.mxu0 0
      %1347 = vmatpush1.bf16.msra.mxu0 %v1111
      %1348 = vmatprep.subr.bf16.mxu0 0
      %1349 = vmatpush1.bf16.msra.mxu0 %v1112
      %1350 = vmatprep.subr.bf16.mxu0 0
      %1351 = vmatpush1.bf16.msra.mxu0 %v1113
      %1352 = vmatprep.subr.bf16.mxu0 0
      %1353 = vmatpush1.bf16.msra.mxu0 %v1114
      %1354 = vmatprep.subr.bf16.mxu0 0
      %1355 = vmatpush1.bf16.msra.mxu0 %v1115
      %1356 = vmatprep.subr.bf16.mxu0 0
      %1357 = vmatpush1.bf16.msra.mxu0 %v1116
      %1358 = vmatprep.mubr.bf16.mxu0 %v656
      %1359 = vmatmul.mubr.bf16.gmra.mrb[0].mxu0 %v655
      %v1360 = vpop.f32.mrb[0].mxu0
      %v1361 = vadd.f32 %v1264, %v1360
      %v1362 = vpop.f32.mrb[0].mxu0
      %v1363 = vpop.f32.mrb[0].mxu0
      %v1364 = vadd.f32 %v1267, %v1363
      %v1365 = vpop.f32.mrb[0].mxu0
      %1366 = vmatprep.mubr.bf16.mxu0 %v665
      %1367 = vmatmul.mubr.bf16.gmra.mrb[0].mxu0 %v664
      %v1368 = vpop.f32.mrb[0].mxu0
      %v1369 = vadd.f32 %v1272, %v1368
      %v1370 = vpop.f32.mrb[0].mxu0
      %v1371 = vpop.f32.mrb[0].mxu0
      %v1372 = vadd.f32 %v1275, %v1371
      %v1373 = vpop.f32.mrb[0].mxu0
      %1374 = vmatprep.mubr.bf16.mxu0 %v674
      %1375 = vmatmul.mubr.bf16.gmra.mrb[0].mxu0 %v673
      %v1376 = vpop.f32.mrb[0].mxu0
      %v1377 = vadd.f32 %v1280, %v1376
      %v1378 = vpop.f32.mrb[0].mxu0
      %v1379 = vpop.f32.mrb[0].mxu0
      %v1380 = vadd.f32 %v1283, %v1379
      %v1381 = vpop.f32.mrb[0].mxu0
      %1382 = vmatprep.mubr.bf16.mxu0 %v683
      %1383 = vmatmul.mubr.bf16.gmra.mrb[0].mxu0 %v682
      %v1384 = vpop.f32.mrb[0].mxu0
      %v1385 = vadd.f32 %v1288, %v1384
      %v1386 = vpop.f32.mrb[0].mxu0
      %v1387 = vpop.f32.mrb[0].mxu0
      %v1388 = vadd.f32 %v1291, %v1387
      %v1389 = vpop.f32.mrb[0].mxu0
      %1390 = vmatprep.mubr.bf16.mxu0 %v692
      %1391 = vmatmul.mubr.bf16.gmra.mrb[0].mxu0 %v691
      %v1392 = vpop.f32.mrb[0].mxu0
      %v1393 = vadd.f32 %v1296, %v1392
      %v1394 = vpop.f32.mrb[0].mxu0
      %v1395 = vpop.f32.mrb[0].mxu0
      %v1396 = vadd.f32 %v1299, %v1395
      %v1397 = vpop.f32.mrb[0].mxu0
      %1398 = vmatprep.mubr.bf16.mxu0 %v701
      %1399 = vmatmul.mubr.bf16.gmra.mrb[0].mxu0 %v700
      %v1400 = vpop.f32.mrb[0].mxu0
      %v1401 = vadd.f32 %v1304, %v1400
      %v1402 = vpop.f32.mrb[0].mxu0
      %v1403 = vpop.f32.mrb[0].mxu0
      %v1404 = vadd.f32 %v1307, %v1403
      %v1405 = vpop.f32.mrb[0].mxu0
      %1406 = vmatprep.mubr.bf16.mxu0 %v710
      %1407 = vmatmul.mubr.bf16.gmra.mrb[0].mxu0 %v709
      %v1408 = vpop.f32.mrb[0].mxu0
      %v1409 = vadd.f32 %v1312, %v1408
      %v1410 = vpop.f32.mrb[0].mxu0
      %v1411 = vpop.f32.mrb[0].mxu0
      %v1412 = vadd.f32 %v1315, %v1411
      %v1413 = vpop.f32.mrb[0].mxu0
      %1414 = vmatprep.mubr.bf16.mxu0 %v719
      %1415 = vmatmul.mubr.bf16.gmra.mrb[0].mxu0 %v718
      %v1416 = vpop.f32.mrb[0].mxu0
      %v1417 = vadd.f32 %v1320, %v1416
      %v1418 = vpop.f32.mrb[0].mxu0
      %v1419 = vpop.f32.mrb[0].mxu0
      %v1420 = vadd.f32 %v1323, %v1419
      %v1421 = vpop.f32.mrb[0].mxu0
      %1422 = vdwg.mxu0
      %1423 = vmatprep.subr.bf16.mxu0 0
      %1424 = vmatpush1.bf16.msra.mxu0 %v1117
      %1425 = vmatprep.subr.bf16.mxu0 0
      %1426 = vmatpush1.bf16.msra.mxu0 %v1118
      %1427 = vmatprep.subr.bf16.mxu0 0
      %1428 = vmatpush1.bf16.msra.mxu0 %v1119
      %1429 = vmatprep.subr.bf16.mxu0 0
      %1430 = vmatpush1.bf16.msra.mxu0 %v1120
      %1431 = vmatprep.subr.bf16.mxu0 0
      %1432 = vmatpush1.bf16.msra.mxu0 %v1121
      %1433 = vmatprep.subr.bf16.mxu0 0
      %1434 = vmatpush1.bf16.msra.mxu0 %v1122
      %1435 = vmatprep.subr.bf16.mxu0 0
      %1436 = vmatpush1.bf16.msra.mxu0 %v1123
      %1437 = vmatprep.subr.bf16.mxu0 0
      %1438 = vmatpush1.bf16.msra.mxu0 %v1124
      %1439 = vmatprep.subr.bf16.mxu0 0
      %1440 = vmatpush1.bf16.msra.mxu0 %v1125
      %1441 = vmatprep.subr.bf16.mxu0 0
      %1442 = vmatpush1.bf16.msra.mxu0 %v1126
      %1443 = vmatprep.subr.bf16.mxu0 0
      %1444 = vmatpush1.bf16.msra.mxu0 %v1127
      %1445 = vmatprep.subr.bf16.mxu0 0
      %1446 = vmatpush1.bf16.msra.mxu0 %v1128
      %1447 = vmatprep.subr.bf16.mxu0 0
      %1448 = vmatpush1.bf16.msra.mxu0 %v1129
      %1449 = vmatprep.subr.bf16.mxu0 0
      %1450 = vmatpush1.bf16.msra.mxu0 %v1130
      %1451 = vmatprep.subr.bf16.mxu0 0
      %1452 = vmatpush1.bf16.msra.mxu0 %v1131
      %1453 = vmatprep.subr.bf16.mxu0 0
      %1454 = vmatpush1.bf16.msra.mxu0 %v1132
      %1455 = vmatprep.mubr.bf16.mxu0 %v658
      %1456 = vmatmul.mubr.bf16.gmra.mrb[0].mxu0 %v657
      %v1457 = vpop.f32.mrb[0].mxu0
      %v1458 = vadd.f32 %v1361, %v1457
      %v1459 = vpop.f32.mrb[0].mxu0
      %v1460 = vpop.f32.mrb[0].mxu0
      %v1461 = vadd.f32 %v1364, %v1460
      %v1462 = vpop.f32.mrb[0].mxu0
      %1463 = vmatprep.mubr.bf16.mxu0 %v667
      %1464 = vmatmul.mubr.bf16.gmra.mrb[0].mxu0 %v666
      %v1465 = vpop.f32.mrb[0].mxu0
      %v1466 = vadd.f32 %v1369, %v1465
      %v1467 = vpop.f32.mrb[0].mxu0
      %v1468 = vpop.f32.mrb[0].mxu0
      %v1469 = vadd.f32 %v1372, %v1468
      %v1470 = vpop.f32.mrb[0].mxu0
      %1471 = vmatprep.mubr.bf16.mxu0 %v676
      %1472 = vmatmul.mubr.bf16.gmra.mrb[0].mxu0 %v675
      %v1473 = vpop.f32.mrb[0].mxu0
      %v1474 = vadd.f32 %v1377, %v1473
      %v1475 = vpop.f32.mrb[0].mxu0
      %v1476 = vpop.f32.mrb[0].mxu0
      %v1477 = vadd.f32 %v1380, %v1476
      %v1478 = vpop.f32.mrb[0].mxu0
      %1479 = vmatprep.mubr.bf16.mxu0 %v685
      %1480 = vmatmul.mubr.bf16.gmra.mrb[0].mxu0 %v684
      %v1481 = vpop.f32.mrb[0].mxu0
      %v1482 = vadd.f32 %v1385, %v1481
      %v1483 = vpop.f32.mrb[0].mxu0
      %v1484 = vpop.f32.mrb[0].mxu0
      %v1485 = vadd.f32 %v1388, %v1484
      %v1486 = vpop.f32.mrb[0].mxu0
      %1487 = vmatprep.mubr.bf16.mxu0 %v694
      %1488 = vmatmul.mubr.bf16.gmra.mrb[0].mxu0 %v693
      %v1489 = vpop.f32.mrb[0].mxu0
      %v1490 = vadd.f32 %v1393, %v1489
      %v1491 = vpop.f32.mrb[0].mxu0
      %v1492 = vpop.f32.mrb[0].mxu0
      %v1493 = vadd.f32 %v1396, %v1492
      %v1494 = vpop.f32.mrb[0].mxu0
      %1495 = vmatprep.mubr.bf16.mxu0 %v703
      %1496 = vmatmul.mubr.bf16.gmra.mrb[0].mxu0 %v702
      %v1497 = vpop.f32.mrb[0].mxu0
      %v1498 = vadd.f32 %v1401, %v1497
      %v1499 = vpop.f32.mrb[0].mxu0
      %v1500 = vpop.f32.mrb[0].mxu0
      %v1501 = vadd.f32 %v1404, %v1500
      %v1502 = vpop.f32.mrb[0].mxu0
      %1503 = vmatprep.mubr.bf16.mxu0 %v712
      %1504 = vmatmul.mubr.bf16.gmra.mrb[0].mxu0 %v711
      %v1505 = vpop.f32.mrb[0].mxu0
      %v1506 = vadd.f32 %v1409, %v1505
      %v1507 = vpop.f32.mrb[0].mxu0
      %v1508 = vpop.f32.mrb[0].mxu0
      %v1509 = vadd.f32 %v1412, %v1508
      %v1510 = vpop.f32.mrb[0].mxu0
      %1511 = vmatprep.mubr.bf16.mxu0 %v721
      %1512 = vmatmul.mubr.bf16.gmra.mrb[0].mxu0 %v720
      %v1513 = vpop.f32.mrb[0].mxu0
      %v1514 = vadd.f32 %v1417, %v1513
      %v1515 = vpop.f32.mrb[0].mxu0
      %v1516 = vpop.f32.mrb[0].mxu0
      %v1517 = vadd.f32 %v1420, %v1516
      %v1518 = vpop.f32.mrb[0].mxu0
      %1519 = vdwg.mxu0
      %1520 = vmatprep.subr.bf16.mxu0 0
      %1521 = vmatpush1.bf16.msra.mxu0 %v1133
      %1522 = vmatprep.subr.bf16.mxu0 0
      %1523 = vmatpush1.bf16.msra.mxu0 %v1134
      %1524 = vmatprep.subr.bf16.mxu0 0
      %1525 = vmatpush1.bf16.msra.mxu0 %v1135
      %1526 = vmatprep.subr.bf16.mxu0 0
      %1527 = vmatpush1.bf16.msra.mxu0 %v1136
      %1528 = vmatprep.subr.bf16.mxu0 0
      %1529 = vmatpush1.bf16.msra.mxu0 %v1137
      %1530 = vmatprep.subr.bf16.mxu0 0
      %1531 = vmatpush1.bf16.msra.mxu0 %v1138
      %1532 = vmatprep.subr.bf16.mxu0 0
      %1533 = vmatpush1.bf16.msra.mxu0 %v1139
      %1534 = vmatprep.subr.bf16.mxu0 0
      %1535 = vmatpush1.bf16.msra.mxu0 %v1140
      %1536 = vmatprep.subr.bf16.mxu0 0
      %1537 = vmatpush1.bf16.msra.mxu0 %v1141
      %1538 = vmatprep.subr.bf16.mxu0 0
      %1539 = vmatpush1.bf16.msra.mxu0 %v1142
      %1540 = vmatprep.subr.bf16.mxu0 0
      %1541 = vmatpush1.bf16.msra.mxu0 %v1143
      %1542 = vmatprep.subr.bf16.mxu0 0
      %1543 = vmatpush1.bf16.msra.mxu0 %v1144
      %1544 = vmatprep.subr.bf16.mxu0 0
      %1545 = vmatpush1.bf16.msra.mxu0 %v1145
      %1546 = vmatprep.subr.bf16.mxu0 0
      %1547 = vmatpush1.bf16.msra.mxu0 %v1146
      %1548 = vmatprep.subr.bf16.mxu0 0
      %1549 = vmatpush1.bf16.msra.mxu0 %v1147
      %1550 = vmatprep.subr.bf16.mxu0 0
      %1551 = vmatpush1.bf16.msra.mxu0 %v1148
      %1552 = vmatprep.mubr.bf16.mxu0 %v660
      %1553 = vmatmul.mubr.bf16.gmra.mrb[0].mxu0 %v659
      %v1554 = vpop.f32.mrb[0].mxu0
      %v1555 = vadd.f32 %v1458, %v1554
      %v1556 = vpop.f32.mrb[0].mxu0
      %v1557 = vpop.f32.mrb[0].mxu0
      %v1558 = vadd.f32 %v1461, %v1557
      %v1559 = vpop.f32.mrb[0].mxu0
      %1560 = vmatprep.mubr.bf16.mxu0 %v669
      %1561 = vmatmul.mubr.bf16.gmra.mrb[0].mxu0 %v668
      %v1562 = vpop.f32.mrb[0].mxu0
      %v1563 = vadd.f32 %v1466, %v1562
      %v1564 = vpop.f32.mrb[0].mxu0
      %v1565 = vpop.f32.mrb[0].mxu0
      %v1566 = vadd.f32 %v1469, %v1565
      %v1567 = vpop.f32.mrb[0].mxu0
      %1568 = vmatprep.mubr.bf16.mxu0 %v678
      %1569 = vmatmul.mubr.bf16.gmra.mrb[0].mxu0 %v677
      %v1570 = vpop.f32.mrb[0].mxu0
      %v1571 = vadd.f32 %v1474, %v1570
      %v1572 = vpop.f32.mrb[0].mxu0
      %v1573 = vpop.f32.mrb[0].mxu0
      %v1574 = vadd.f32 %v1477, %v1573
      %v1575 = vpop.f32.mrb[0].mxu0
      %1576 = vmatprep.mubr.bf16.mxu0 %v687
      %1577 = vmatmul.mubr.bf16.gmra.mrb[0].mxu0 %v686
      %v1578 = vpop.f32.mrb[0].mxu0
      %v1579 = vadd.f32 %v1482, %v1578
      %v1580 = vpop.f32.mrb[0].mxu0
      %v1581 = vpop.f32.mrb[0].mxu0
      %v1582 = vadd.f32 %v1485, %v1581
      %v1583 = vpop.f32.mrb[0].mxu0
      %1584 = vmatprep.mubr.bf16.mxu0 %v696
      %1585 = vmatmul.mubr.bf16.gmra.mrb[0].mxu0 %v695
      %v1586 = vpop.f32.mrb[0].mxu0
      %v1587 = vadd.f32 %v1490, %v1586
      %v1588 = vpop.f32.mrb[0].mxu0
      %v1589 = vpop.f32.mrb[0].mxu0
      %v1590 = vadd.f32 %v1493, %v1589
      %v1591 = vpop.f32.mrb[0].mxu0
      %1592 = vmatprep.mubr.bf16.mxu0 %v705
      %1593 = vmatmul.mubr.bf16.gmra.mrb[0].mxu0 %v704
      %v1594 = vpop.f32.mrb[0].mxu0
      %v1595 = vadd.f32 %v1498, %v1594
      %v1596 = vpop.f32.mrb[0].mxu0
      %v1597 = vpop.f32.mrb[0].mxu0
      %v1598 = vadd.f32 %v1501, %v1597
      %v1599 = vpop.f32.mrb[0].mxu0
      %1600 = vmatprep.mubr.bf16.mxu0 %v714
      %1601 = vmatmul.mubr.bf16.gmra.mrb[0].mxu0 %v713
      %v1602 = vpop.f32.mrb[0].mxu0
      %v1603 = vadd.f32 %v1506, %v1602
      %v1604 = vpop.f32.mrb[0].mxu0
      %v1605 = vpop.f32.mrb[0].mxu0
      %v1606 = vadd.f32 %v1509, %v1605
      %v1607 = vpop.f32.mrb[0].mxu0
      %1608 = vmatprep.mubr.bf16.mxu0 %v723
      %1609 = vmatmul.mubr.bf16.gmra.mrb[0].mxu0 %v722
      %v1610 = vpop.f32.mrb[0].mxu0
      %v1611 = vadd.f32 %v1514, %v1610
      %v1612 = vpop.f32.mrb[0].mxu0
      %v1613 = vpop.f32.mrb[0].mxu0
      %v1614 = vadd.f32 %v1517, %v1613
      %v1615 = vpop.f32.mrb[0].mxu0
      %1616 = vdwg.mxu0
      %1617 = vmatprep.subr.bf16.mxu0 0
      %1618 = vmatpush1.bf16.msra.mxu0 %v1149
      %1619 = vmatprep.subr.bf16.mxu0 0
      %1620 = vmatpush1.bf16.msra.mxu0 %v1150
      %1621 = vmatprep.subr.bf16.mxu0 0
      %1622 = vmatpush1.bf16.msra.mxu0 %v1151
      %1623 = vmatprep.subr.bf16.mxu0 0
      %1624 = vmatpush1.bf16.msra.mxu0 %v1152
      %1625 = vmatprep.subr.bf16.mxu0 0
      %1626 = vmatpush1.bf16.msra.mxu0 %v1153
      %1627 = vmatprep.subr.bf16.mxu0 0
      %1628 = vmatpush1.bf16.msra.mxu0 %v1154
      %1629 = vmatprep.subr.bf16.mxu0 0
      %1630 = vmatpush1.bf16.msra.mxu0 %v1155
      %1631 = vmatprep.subr.bf16.mxu0 0
      %1632 = vmatpush1.bf16.msra.mxu0 %v1156
      %1633 = vmatprep.subr.bf16.mxu0 0
      %1634 = vmatpush1.bf16.msra.mxu0 0
      %1635 = vmatprep.subr.bf16.mxu0 0
      %1636 = vmatpush1.bf16.msra.mxu0 0
      %1637 = vmatprep.subr.bf16.mxu0 0
      %1638 = vmatpush1.bf16.msra.mxu0 0
      %1639 = vmatprep.subr.bf16.mxu0 0
      %1640 = vmatpush1.bf16.msra.mxu0 0
      %1641 = vmatprep.subr.bf16.mxu0 0
      %1642 = vmatpush1.bf16.msra.mxu0 0
      %1643 = vmatprep.subr.bf16.mxu0 0
      %1644 = vmatpush1.bf16.msra.mxu0 0
      %1645 = vmatprep.subr.bf16.mxu0 0
      %1646 = vmatpush1.bf16.msra.mxu0 0
      %1647 = vmatprep.subr.bf16.mxu0 0
      %1648 = vmatpush1.bf16.msra.mxu0 0
      %1649 = vmatprep.mubr.bf16.mxu0 0
      %1650 = vmatmul.mubr.bf16.gmra.mrb[0].mxu0 %v661
      %v1651 = vpop.f32.mrb[0].mxu0
      %v1652 = vadd.f32 %v1555, %v1651
      %v1653 = vpop.f32.mrb[0].mxu0
      %v1654 = vpop.f32.mrb[0].mxu0
      %v1655 = vadd.f32 %v1558, %v1654
      %v1656 = vpop.f32.mrb[0].mxu0
      %1657 = vmatprep.mubr.bf16.mxu0 0
      %1658 = vmatmul.mubr.bf16.gmra.mrb[0].mxu0 %v670
      %v1659 = vpop.f32.mrb[0].mxu0
      %v1660 = vadd.f32 %v1563, %v1659
      %v1661 = vpop.f32.mrb[0].mxu0
      %v1662 = vpop.f32.mrb[0].mxu0
      %v1663 = vadd.f32 %v1566, %v1662
      %v1664 = vpop.f32.mrb[0].mxu0
      %1665 = vmatprep.mubr.bf16.mxu0 0
      %1666 = vmatmul.mubr.bf16.gmra.mrb[0].mxu0 %v679
      %v1667 = vpop.f32.mrb[0].mxu0
      %v1668 = vadd.f32 %v1571, %v1667
      %v1669 = vpop.f32.mrb[0].mxu0
      %v1670 = vpop.f32.mrb[0].mxu0
      %v1671 = vadd.f32 %v1574, %v1670
      %v1672 = vpop.f32.mrb[0].mxu0
      %1673 = vmatprep.mubr.bf16.mxu0 0
      %1674 = vmatmul.mubr.bf16.gmra.mrb[0].mxu0 %v688
      %v1675 = vpop.f32.mrb[0].mxu0
      %v1676 = vadd.f32 %v1579, %v1675
      %v1677 = vpop.f32.mrb[0].mxu0
      %v1678 = vpop.f32.mrb[0].mxu0
      %v1679 = vadd.f32 %v1582, %v1678
      %v1680 = vpop.f32.mrb[0].mxu0
      %1681 = vmatprep.mubr.bf16.mxu0 0
      %1682 = vmatmul.mubr.bf16.gmra.mrb[0].mxu0 %v697
      %v1683 = vpop.f32.mrb[0].mxu0
      %v1684 = vadd.f32 %v1587, %v1683
      %v1685 = vpop.f32.mrb[0].mxu0
      %v1686 = vpop.f32.mrb[0].mxu0
      %v1687 = vadd.f32 %v1590, %v1686
      %v1688 = vpop.f32.mrb[0].mxu0
      %1689 = vmatprep.mubr.bf16.mxu0 0
      %1690 = vmatmul.mubr.bf16.gmra.mrb[0].mxu0 %v706
      %v1691 = vpop.f32.mrb[0].mxu0
      %v1692 = vadd.f32 %v1595, %v1691
      %v1693 = vpop.f32.mrb[0].mxu0
      %v1694 = vpop.f32.mrb[0].mxu0
      %v1695 = vadd.f32 %v1598, %v1694
      %v1696 = vpop.f32.mrb[0].mxu0
      %1697 = vmatprep.mubr.bf16.mxu0 0
      %1698 = vmatmul.mubr.bf16.gmra.mrb[0].mxu0 %v715
      %v1699 = vpop.f32.mrb[0].mxu0
      %v1700 = vadd.f32 %v1603, %v1699
      %v1701 = vpop.f32.mrb[0].mxu0
      %v1702 = vpop.f32.mrb[0].mxu0
      %v1703 = vadd.f32 %v1606, %v1702
      %v1704 = vpop.f32.mrb[0].mxu0
      %1705 = vmatprep.mubr.bf16.mxu0 0
      %1706 = vmatmul.mubr.bf16.gmra.mrb[0].mxu0 %v724
      %v1707 = vpop.f32.mrb[0].mxu0
      %v1708 = vadd.f32 %v1611, %v1707
      %v1709 = vpop.f32.mrb[0].mxu0
      %v1710 = vpop.f32.mrb[0].mxu0
      %v1711 = vadd.f32 %v1614, %v1710
      %v1712 = vpop.f32.mrb[0].mxu0
      %1713 = vdwg.mxu0
      %v1714 = vld [vmem:[%s2] sm:$0x1]
      %v1716 = vlaneseq
      %v1717 = vshrl.u32 %v1716, 7
      %v1718 = vsub.s32 0, %v1717
      %v1719 = vrot.slane %v1714, %v1718
      %v1721 = vmul.f32 %v1652, %v1719
      %v1722 = vmul.f32 %v1655, %v1719
      %v1723 = vmul.f32 %v1660, %v1719
      %v1724 = vmul.f32 %v1663, %v1719
      %v1725 = vmul.f32 %v1668, %v1719
      %v1726 = vmul.f32 %v1671, %v1719
      %v1727 = vmul.f32 %v1676, %v1719
      %v1728 = vmul.f32 %v1679, %v1719
      %v1729 = vmul.f32 %v1684, %v1719
      %v1730 = vmul.f32 %v1687, %v1719
      %v1731 = vmul.f32 %v1692, %v1719
      %v1732 = vmul.f32 %v1695, %v1719
      %v1733 = vmul.f32 %v1700, %v1719
      %v1734 = vmul.f32 %v1703, %v1719
      %v1735 = vmul.f32 %v1708, %v1719
      %v1736 = vmul.f32 %v1711, %v1719
      %v1737 = vld [vmem:[%s3] sm:$0x1]
      %v1739 = vlaneseq
      %v1740 = vshrl.u32 %v1739, 7
      %v1741 = vsub.s32 0, %v1740
      %v1742 = vrot.slane %v1737, %v1741
      %v1744 = vadd.f32 %v1721, %v1742
      %v1745 = vadd.f32 %v1722, %v1742
      %v1746 = vadd.f32 %v1723, %v1742
      %v1747 = vadd.f32 %v1724, %v1742
      %v1748 = vadd.f32 %v1725, %v1742
      %v1749 = vadd.f32 %v1726, %v1742
      %v1750 = vadd.f32 %v1727, %v1742
      %v1751 = vadd.f32 %v1728, %v1742
      %v1752 = vadd.f32 %v1729, %v1742
      %v1753 = vadd.f32 %v1730, %v1742
      %v1754 = vadd.f32 %v1731, %v1742
      %v1755 = vadd.f32 %v1732, %v1742
      %v1756 = vadd.f32 %v1733, %v1742
      %v1757 = vadd.f32 %v1734, %v1742
      %v1758 = vadd.f32 %v1735, %v1742
      %v1759 = vadd.f32 %v1736, %v1742
      %v1760 = vxor.u32 %v1744, 2147483648
      %v1761 = vxor.u32 %v1745, 2147483648
      %v1762 = vxor.u32 %v1746, 2147483648
      %v1763 = vxor.u32 %v1747, 2147483648
      %v1764 = vxor.u32 %v1748, 2147483648
      %v1765 = vxor.u32 %v1749, 2147483648
      %v1766 = vxor.u32 %v1750, 2147483648
      %v1767 = vxor.u32 %v1751, 2147483648
      %v1768 = vxor.u32 %v1752, 2147483648
      %v1769 = vxor.u32 %v1753, 2147483648
      %v1770 = vxor.u32 %v1754, 2147483648
      %v1771 = vxor.u32 %v1755, 2147483648
      %v1772 = vxor.u32 %v1756, 2147483648
      %v1773 = vxor.u32 %v1757, 2147483648
      %v1774 = vxor.u32 %v1758, 2147483648
      %v1775 = vxor.u32 %v1759, 2147483648
      %v1776 = vmul.f32 %v1760, 1.442695
      %v1777 = vpow.pop %v1776
      %v1778 = vmul.f32 %v1761, 1.442695
      %v1779 = vpow.pop %v1778
      %v1780 = vmul.f32 %v1762, 1.442695
      %v1781 = vpow.pop %v1780
      %v1782 = vmul.f32 %v1763, 1.442695
      %v1783 = vpow.pop %v1782
      %v1784 = vmul.f32 %v1764, 1.442695
      %v1785 = vpow.pop %v1784
      %v1786 = vmul.f32 %v1765, 1.442695
      %v1787 = vpow.pop %v1786
      %v1788 = vmul.f32 %v1766, 1.442695
      %v1789 = vpow.pop %v1788
      %v1790 = vmul.f32 %v1767, 1.442695
      %v1791 = vpow.pop %v1790
      %v1792 = vmul.f32 %v1768, 1.442695
      %v1793 = vpow.pop %v1792
      %v1794 = vmul.f32 %v1769, 1.442695
      %v1795 = vpow.pop %v1794
      %v1796 = vmul.f32 %v1770, 1.442695
      %v1797 = vpow.pop %v1796
      %v1798 = vmul.f32 %v1771, 1.442695
      %v1799 = vpow.pop %v1798
      %v1800 = vmul.f32 %v1772, 1.442695
      %v1801 = vpow.pop %v1800
      %v1802 = vmul.f32 %v1773, 1.442695
      %v1803 = vpow.pop %v1802
      %v1804 = vmul.f32 %v1774, 1.442695
      %v1805 = vpow.pop %v1804
      %v1806 = vmul.f32 %v1775, 1.442695
      %v1807 = vpow.pop %v1806
      %v1808 = vadd.f32 %v1777, 1.0
      %v1809 = vadd.f32 %v1779, 1.0
      %v1810 = vadd.f32 %v1781, 1.0
      %v1811 = vadd.f32 %v1783, 1.0
      %v1812 = vadd.f32 %v1785, 1.0
      %v1813 = vadd.f32 %v1787, 1.0
      %v1814 = vadd.f32 %v1789, 1.0
      %v1815 = vadd.f32 %v1791, 1.0
      %v1816 = vadd.f32 %v1793, 1.0
      %v1817 = vadd.f32 %v1795, 1.0
      %v1818 = vadd.f32 %v1797, 1.0
      %v1819 = vadd.f32 %v1799, 1.0
      %v1820 = vadd.f32 %v1801, 1.0
      %v1821 = vadd.f32 %v1803, 1.0
      %v1822 = vadd.f32 %v1805, 1.0
      %v1823 = vadd.f32 %v1807, 1.0
      %v1824 = vrcp.pop %v1808
      %v1825 = vmul.f32 1.0, %v1824
      %v1826 = vrcp.pop %v1809
      %v1827 = vmul.f32 1.0, %v1826
      %v1828 = vrcp.pop %v1810
      %v1829 = vmul.f32 1.0, %v1828
      %v1830 = vrcp.pop %v1811
      %v1831 = vmul.f32 1.0, %v1830
      %v1832 = vrcp.pop %v1812
      %v1833 = vmul.f32 1.0, %v1832
      %v1834 = vrcp.pop %v1813
      %v1835 = vmul.f32 1.0, %v1834
      %v1836 = vrcp.pop %v1814
      %v1837 = vmul.f32 1.0, %v1836
      %v1838 = vrcp.pop %v1815
      %v1839 = vmul.f32 1.0, %v1838
      %v1840 = vrcp.pop %v1816
      %v1841 = vmul.f32 1.0, %v1840
      %v1842 = vrcp.pop %v1817
      %v1843 = vmul.f32 1.0, %v1842
      %v1844 = vrcp.pop %v1818
      %v1845 = vmul.f32 1.0, %v1844
      %v1846 = vrcp.pop %v1819
      %v1847 = vmul.f32 1.0, %v1846
      %v1848 = vrcp.pop %v1820
      %v1849 = vmul.f32 1.0, %v1848
      %v1850 = vrcp.pop %v1821
      %v1851 = vmul.f32 1.0, %v1850
      %v1852 = vrcp.pop %v1822
      %v1853 = vmul.f32 1.0, %v1852
      %v1854 = vrcp.pop %v1823
      %v1855 = vmul.f32 1.0, %v1854
      %v1856 = vmul.f32 %v1744, %v1825
      %v1857 = vmul.f32 %v1745, %v1827
      %v1858 = vmul.f32 %v1746, %v1829
      %v1859 = vmul.f32 %v1747, %v1831
      %v1860 = vmul.f32 %v1748, %v1833
      %v1861 = vmul.f32 %v1749, %v1835
      %v1862 = vmul.f32 %v1750, %v1837
      %v1863 = vmul.f32 %v1751, %v1839
      %v1864 = vmul.f32 %v1752, %v1841
      %v1865 = vmul.f32 %v1753, %v1843
      %v1866 = vmul.f32 %v1754, %v1845
      %v1867 = vmul.f32 %v1755, %v1847
      %v1868 = vmul.f32 %v1756, %v1849
      %v1869 = vmul.f32 %v1757, %v1851
      %v1870 = vmul.f32 %v1758, %v1853
      %v1871 = vmul.f32 %v1759, %v1855
      %v1872 = vpack.c.bf16 %v1857, %v1856
      %v1873 = vpack.c.bf16 %v1859, %v1858
      %v1874 = vpack.c.bf16 %v1861, %v1860
      %v1875 = vpack.c.bf16 %v1863, %v1862
      %v1876 = vpack.c.bf16 %v1865, %v1864
      %v1877 = vpack.c.bf16 %v1867, %v1866
      %v1878 = vpack.c.bf16 %v1869, %v1868
      %v1879 = vpack.c.bf16 %v1871, %v1870
      %v1888 = vunpack.c.l.b16 %v1872
      %v1889 = vunpack.c.h.b16 %v1872
      %v1890 = vunpack.c.l.b16 %v1873
      %v1891 = vunpack.c.h.b16 %v1873
      %v1892 = vunpack.c.l.b16 %v1874
      %v1893 = vunpack.c.h.b16 %v1874
      %v1894 = vunpack.c.l.b16 %v1875
      %v1895 = vunpack.c.h.b16 %v1875
      %v1896 = vunpack.c.l.b16 %v1876
      %v1897 = vunpack.c.h.b16 %v1876
      %v1898 = vunpack.c.l.b16 %v1877
      %v1899 = vunpack.c.h.b16 %v1877
      %v1900 = vunpack.c.l.b16 %v1878
      %v1901 = vunpack.c.h.b16 %v1878
      %v1902 = vunpack.c.l.b16 %v1879
      %v1903 = vunpack.c.h.b16 %v1879
      %v1904 = vpack.c.b16 %v1888, %v1888
      %v1905 = vpack.c.b16 %v1889, %v1889
      %v1906 = vpack.c.b16 %v1890, %v1890
      %v1907 = vpack.c.b16 %v1891, %v1891
      %v1908 = vpack.c.b16 %v1892, %v1892
      %v1909 = vpack.c.b16 %v1893, %v1893
      %v1910 = vpack.c.b16 %v1894, %v1894
      %v1911 = vpack.c.b16 %v1895, %v1895
      %v1912 = vpack.c.b16 %v1896, %v1896
      %v1913 = vpack.c.b16 %v1897, %v1897
      %v1914 = vpack.c.b16 %v1898, %v1898
      %v1915 = vpack.c.b16 %v1899, %v1899
      %v1916 = vpack.c.b16 %v1900, %v1900
      %v1917 = vpack.c.b16 %v1901, %v1901
      %v1918 = vpack.c.b16 %v1902, %v1902
      %v1919 = vpack.c.b16 %v1903, %v1903
      %1936 = vst [vmem:[%s202] sm:$0xf] %v1904
      %1937 = vst [vmem:[%s202 + $0x4] sm:$0xf] %v1905
      %1938 = vst [vmem:[%s202 + $0x8] sm:$0xf] %v1906
      %1939 = vst [vmem:[%s202 + $0xc] sm:$0xf] %v1907
      %1940 = vst [vmem:[%s202 + $0x10] sm:$0xf] %v1908
      %1941 = vst [vmem:[%s202 + $0x14] sm:$0xf] %v1909
      %1942 = vst [vmem:[%s202 + $0x18] sm:$0xf] %v1910
      %1943 = vst [vmem:[%s202 + $0x1c] sm:$0xf] %v1911
      %1944 = vst [vmem:[%s202 + $0x20] sm:$0xf] %v1912
      %1945 = vst [vmem:[%s202 + $0x24] sm:$0xf] %v1913
      %1946 = vst [vmem:[%s202 + $0x28] sm:$0xf] %v1914
      %1947 = vst [vmem:[%s202 + $0x2c] sm:$0xf] %v1915
      %1948 = vst [vmem:[%s202 + $0x30] sm:$0xf] %v1916
      %1949 = vst [vmem:[%s202 + $0x34] sm:$0xf] %v1917
      %1950 = vst [vmem:[%s202 + $0x38] sm:$0xf] %v1918
      %1951 = vst [vmem:[%s202 + $0x3c] sm:$0xf] %v1919
      %s1952 = smul.u32 16, %s15
      %p1953 = scmp.lt.s32.totalorder %s1952, 31
      %s1954 = scalar_select %p1953, %s1952, 31
      %s1955 = smul.addr %s1954, 4
      %s1956 = scalar_lea.vmem %s4, %s1955
      // Predicated region
      $region37: #{_lambda_.7} parent=35 // pred_check
        %p1957 = pneg %p122
      $region38: #{_lambda_.7} parent=35 // pred_check_branch
        %1959 = sbr.rel (%p1957) target = $region40
      $region39: #{_lambda_.7} parent=35 // pred_region
        %s1960 = smul.u32 16, %s15
      $region40: #{_lambda_.7} parent=35 // pred_fallthru
        _
    $region36: #{_lambda_.7} parent=5 // pred_fallthru
      _
    %p1961 = scmp.le.s32.totalorder 2, %s10
    // Predicated region
    $region41: #{_lambda_.7} parent=5 // pred_check
      %p1962 = pneg %p1961
    $region42: #{_lambda_.7} parent=5 // pred_check_branch
      %1964 = sbr.rel (%p1962) target = $region44
    $region43: #{_lambda_.7} parent=5 // pred_region
      %s1965 = ssub.s32 %s10, 2
      // Predicated region
      $region45: #{_lambda_.7} parent=43 // pred_check
        %p1966 = pneg %p128
      $region46: #{_lambda_.7} parent=43 // pred_check_branch
        %1968 = sbr.rel (%p1966) target = $region48
      $region47: #{_lambda_.7} parent=43 // pred_region
        %s1969 = smul.u32 16, %s16
        %p1970 = scmp.lt.s32.totalorder %s1969, 31
        %s1971 = scalar_select %p1970, %s1969, 31
        %s1972 = smul.addr %s1971, 4
        %s1973 = scalar_lea.vmem %s4, %s1972
      $region48: #{_lambda_.7} parent=43 // pred_fallthru
        _
    $region44: #{_lambda_.7} parent=5 // pred_fallthru
      _
  $region6: #{_lambda_.7} parent=0 // loop_footer
    %s14 = sadd.s32 1, %s10
  $region7: #{_lambda_.7} parent=0 // loop_footer_branch
    %9 = sbr.rel target = $region3
  $region8: #{_lambda_.7} parent=0 // loop_exit
    _

// kernel: _lambda_.9
$region0: #{_lambda_.9}
  #allocation0 [shape = 'u32[]', space=smem, size = 0x4, offset = 0x4, fixed_abs, tag = 'smem constant byte address 0x4 - core index']
  #allocation1 [shape = 'u32[144,128]{1,0:T(1,128)}', space=vmem, size = 0x12000, scoped, tag = 'internal scratch']
  %s0 = inlined_call_operand.vmem [shape: bf16[12,16,128], index: 0, kind: input, shape index: {}]
  %s1 = inlined_call_operand.vmem [shape: bf16[128,128], index: 1, kind: input, shape index: {}]
  %s2 = inlined_call_operand.vmem [shape: f32[1,128], index: 2, kind: input, shape index: {}]
  %s3 = inlined_call_operand.vmem [shape: f32[1,128], index: 3, kind: input, shape index: {}]
  %s4 = inlined_call_operand.vmem [shape: f32[12,1,128], index: 4, kind: output, shape index: {}]
  %s5 = sld [smem:[#allocation0]]
  $region49: #{_lambda_.9} parent=0
    _
  %s7 = ssub.s32 1, %s5
  %s8 = scalar_select 0, %s7, %s5
  loop: start=0, step=1, limit=4
  $region2: #{_lambda_.9} parent=0 // loop_pre_header
    _
  $region3: #{_lambda_.9} parent=0 // loop_header
    %s10 = sphi 0, %s14
    %p11 = scmp.ge.s32.totalorder %s10, 4
    %s20 = sphi 0, %s22
    %s23 = sphi 0, %s20
    %s24 = sphi 0, %s23
    %s40 = sphi 0, %s24
    %s44 = sphi 0, %s44
    %s46 = sphi 0, %s44
    %s47 = sphi 0, %s46
    %s61 = sphi 0, %s47
    %s65 = sphi 0, %s65
    %s67 = sphi 0, %s65
    %s68 = sphi 0, %s67
    %s82 = sphi 0, %s68
    %s86 = sphi 0, %s86
    %s88 = sphi 0, %s86
    %s89 = sphi 0, %s88
    %s103 = sphi 0, %s89
    %s109 = sphi 0, %s111
    %s112 = sphi 0, %s109
    %s113 = sphi 0, %s112
    %s129 = sphi 0, %s113
  $region4: #{_lambda_.9} parent=0 // loop_header_branch
    %13 = sbr.rel (%p11) target = $region8
  $region5: #{_lambda_.9} parent=0 // loop_body
    %s15 = ssub.s32 %s10, 1
    %s16 = ssub.s32 %s10, 2
    %s17 = sadd.s32 %s10, 1
    %s18 = ssub.s32 %s10, %s17
    %p19 = scmp.eq.s32.totalorder %s18, 0
    %s21 = sadd.s32 %s20, 1
    %s22 = scalar_select %p19, %s20, %s21
    %p25 = pneg %p19
    %p26 = scmp.eq.s32.totalorder %s10, 1
    %p27 = por %p25, %p26
    %p28 = scmp.ne.s32.totalorder %s20, %s23
    %p29 = scmp.eq.s32.totalorder %s10, 0
    %p30 = por %p28, %p29
    %p31 = scmp.ne.s32.totalorder %s20, %s23
    %p32 = scmp.eq.s32.totalorder %s15, 1
    %p33 = por %p31, %p32
    %p34 = scmp.ne.s32.totalorder %s23, %s24
    %p35 = scmp.eq.s32.totalorder %s15, 0
    %p36 = por %p34, %p35
    %p37 = scmp.ne.s32.totalorder %s23, %s24
    %p38 = scmp.eq.s32.totalorder %s16, 1
    %p39 = por %p37, %p38
    %p41 = scmp.ne.s32.totalorder %s24, %s40
    %p42 = scmp.eq.s32.totalorder %s16, 0
    %p43 = por %p41, %p42
    %s45 = sadd.s32 %s44, 1
    %p48 = scmp.eq.s32.totalorder %s10, 1
    %p49 = scmp.ne.s32.totalorder %s44, %s46
    %p50 = scmp.eq.s32.totalorder %s10, 0
    %p51 = por %p49, %p50
    %p52 = scmp.ne.s32.totalorder %s44, %s46
    %p53 = scmp.eq.s32.totalorder %s15, 1
    %p54 = por %p52, %p53
    %p55 = scmp.ne.s32.totalorder %s46, %s47
    %p56 = scmp.eq.s32.totalorder %s15, 0
    %p57 = por %p55, %p56
    %p58 = scmp.ne.s32.totalorder %s46, %s47
    %p59 = scmp.eq.s32.totalorder %s16, 1
    %p60 = por %p58, %p59
    %p62 = scmp.ne.s32.totalorder %s47, %s61
    %p63 = scmp.eq.s32.totalorder %s16, 0
    %p64 = por %p62, %p63
    %s66 = sadd.s32 %s65, 1
    %p69 = scmp.eq.s32.totalorder %s10, 1
    %p70 = scmp.ne.s32.totalorder %s65, %s67
    %p71 = scmp.eq.s32.totalorder %s10, 0
    %p72 = por %p70, %p71
    %p73 = scmp.ne.s32.totalorder %s65, %s67
    %p74 = scmp.eq.s32.totalorder %s15, 1
    %p75 = por %p73, %p74
    %p76 = scmp.ne.s32.totalorder %s67, %s68
    %p77 = scmp.eq.s32.totalorder %s15, 0
    %p78 = por %p76, %p77
    %p79 = scmp.ne.s32.totalorder %s67, %s68
    %p80 = scmp.eq.s32.totalorder %s16, 1
    %p81 = por %p79, %p80
    %p83 = scmp.ne.s32.totalorder %s68, %s82
    %p84 = scmp.eq.s32.totalorder %s16, 0
    %p85 = por %p83, %p84
    %s87 = sadd.s32 %s86, 1
    %p90 = scmp.eq.s32.totalorder %s10, 1
    %p91 = scmp.ne.s32.totalorder %s86, %s88
    %p92 = scmp.eq.s32.totalorder %s10, 0
    %p93 = por %p91, %p92
    %p94 = scmp.ne.s32.totalorder %s86, %s88
    %p95 = scmp.eq.s32.totalorder %s15, 1
    %p96 = por %p94, %p95
    %p97 = scmp.ne.s32.totalorder %s88, %s89
    %p98 = scmp.eq.s32.totalorder %s15, 0
    %p99 = por %p97, %p98
    %p100 = scmp.ne.s32.totalorder %s88, %s89
    %p101 = scmp.eq.s32.totalorder %s16, 1
    %p102 = por %p100, %p101
    %p104 = scmp.ne.s32.totalorder %s89, %s103
    %p105 = scmp.eq.s32.totalorder %s16, 0
    %p106 = por %p104, %p105
    %s107 = ssub.s32 %s10, %s17
    %p108 = scmp.eq.s32.totalorder %s107, 0
    %s110 = sadd.s32 %s109, 1
    %s111 = scalar_select %p108, %s109, %s110
    %p114 = pneg %p108
    %p115 = scmp.eq.s32.totalorder %s10, 1
    %p116 = por %p114, %p115
    %p117 = scmp.ne.s32.totalorder %s109, %s112
    %p118 = scmp.eq.s32.totalorder %s10, 0
    %p119 = por %p117, %p118
    %p120 = scmp.ne.s32.totalorder %s109, %s112
    %p121 = scmp.eq.s32.totalorder %s15, 1
    %p122 = por %p120, %p121
    %p123 = scmp.ne.s32.totalorder %s112, %s113
    %p124 = scmp.eq.s32.totalorder %s15, 0
    %p125 = por %p123, %p124
    %p126 = scmp.ne.s32.totalorder %s112, %s113
    %p127 = scmp.eq.s32.totalorder %s16, 1
    %p128 = por %p126, %p127
    %p130 = scmp.ne.s32.totalorder %s113, %s129
    %p131 = scmp.eq.s32.totalorder %s16, 0
    %p132 = por %p130, %p131
    %p133 = scmp.le.s32.totalorder 1, %s10
    %p134 = scmp.lt.s32.totalorder %s10, 3
    %p135 = pnand %p133, %p134
    %p136 = pneg %p135
    // Predicated region
    $region9: #{_lambda_.9} parent=5 // pred_check
      _
    $region10: #{_lambda_.9} parent=5 // pred_check_branch
      %138 = sbr.rel (%p135) target = $region12
    $region11: #{_lambda_.9} parent=5 // pred_region
      %s139 = ssub.s32 %s10, 1
      // Predicated region
      $region13: #{_lambda_.9} parent=11 // pred_check
        %p140 = pneg %p57
      $region14: #{_lambda_.9} parent=11 // pred_check_branch
        %142 = sbr.rel (%p140) target = $region16
      $region15: #{_lambda_.9} parent=11 // pred_region
        _
      $region16: #{_lambda_.9} parent=11 // pred_fallthru
        _
      // Predicated region
      $region17: #{_lambda_.9} parent=11 // pred_check
        %p143 = pneg %p78
      $region18: #{_lambda_.9} parent=11 // pred_check_branch
        %145 = sbr.rel (%p143) target = $region20
      $region19: #{_lambda_.9} parent=11 // pred_region
        _
      $region20: #{_lambda_.9} parent=11 // pred_fallthru
        _
      // Predicated region
      $region21: #{_lambda_.9} parent=11 // pred_check
        %p146 = pneg %p99
      $region22: #{_lambda_.9} parent=11 // pred_check_branch
        %148 = sbr.rel (%p146) target = $region24
      $region23: #{_lambda_.9} parent=11 // pred_region
        _
      $region24: #{_lambda_.9} parent=11 // pred_fallthru
        _
    $region12: #{_lambda_.9} parent=5 // pred_fallthru
      _
    %p149 = scmp.lt.s32.totalorder %s10, 2
    // Predicated region
    $region25: #{_lambda_.9} parent=5 // pred_check
      %p150 = pneg %p149
    $region26: #{_lambda_.9} parent=5 // pred_check_branch
      %152 = sbr.rel (%p150) target = $region28
    $region27: #{_lambda_.9} parent=5 // pred_region
      // Predicated region
      $region29: #{_lambda_.9} parent=27 // pred_check
        %p153 = pneg %p30
      $region30: #{_lambda_.9} parent=27 // pred_check_branch
        %155 = sbr.rel (%p153) target = $region32
      $region31: #{_lambda_.9} parent=27 // pred_region
        %s156 = smul.u32 6, %s10
        %p157 = scmp.lt.s32.totalorder %s156, 11
        %s158 = scalar_select %p157, %s156, 11
        %s159 = smul.addr %s158, 2
        %s160 = smul.addr %s159, 4
        %s161 = scalar_lea.vmem %s0, %s160
        %s162 = smul.u32 6, %s10
      $region32: #{_lambda_.9} parent=27 // pred_fallthru
        _
    $region28: #{_lambda_.9} parent=5 // pred_fallthru
      _
    %p163 = scmp.le.s32.totalorder 1, %s10
    %p164 = scmp.lt.s32.totalorder %s10, 3
    %p165 = pnand %p163, %p164
    %p166 = pneg %p165
    // Predicated region
    $region33: #{_lambda_.9} parent=5 // pred_check
      _
    $region34: #{_lambda_.9} parent=5 // pred_check_branch
      %168 = sbr.rel (%p165) target = $region36
    $region35: #{_lambda_.9} parent=5 // pred_region
      %s169 = ssub.s32 %s10, 1
      %s170 = smul.u32 6, %s15
      %p171 = scmp.lt.s32.totalorder %s170, 11
      %s172 = scalar_select %p171, %s170, 11
      %s173 = smul.addr %s172, 2
      %s174 = smul.addr %s173, 4
      %s175 = scalar_lea.vmem %s0, %s174
      %p176 = pneg %p36
      %p177 = pneg %p33
      %p178 = pneg %p57
      %p179 = pneg %p54
      %p180 = pneg %p78
      %p181 = pneg %p75
      %p182 = pneg %p99
      %p183 = pneg %p96
      %p184 = pneg %p125
      %p185 = pneg %p122
      %s186 = smul.u32 6, %s15
      %p187 = scmp.lt.s32.totalorder %s186, 11
      %s188 = scalar_select %p187, %s186, 11
      %s189 = scalar_lea.vmem %s4, %s188
      %s190 = smul.u32 6, %s15
      %p191 = scmp.lt.s32.totalorder %s190, 11
      %s192 = scalar_select %p191, %s190, 11
      %s193 = smul.addr %s192, 2
      %s194 = smul.addr %s193, 4
      %s195 = scalar_lea.vmem %s0, %s194
      %s196 = smul.u32 6, %s15
      %s197 = smul.u32 6, %s15
      %p198 = scmp.lt.s32.totalorder %s197, 11
      %s199 = scalar_select %p198, %s197, 11
      %s200 = scalar_lea.vmem %s4, %s199
      %s201 = smul.u32 6, %s15
      %v203 = vld [vmem:[%s195] sm:$0xf]
      %v204 = vld [vmem:[%s195 + $0x4] sm:$0xf]
      %v205 = vld [vmem:[%s195 + $0x8] sm:$0xf]
      %v206 = vld [vmem:[%s195 + $0xc] sm:$0xf]
      %v207 = vld [vmem:[%s195 + $0x10] sm:$0xf]
      %v208 = vld [vmem:[%s195 + $0x14] sm:$0xf]
      %v209 = vld [vmem:[%s195 + $0x18] sm:$0xf]
      %v210 = vld [vmem:[%s195 + $0x1c] sm:$0xf]
      %v211 = vld [vmem:[%s195 + $0x20] sm:$0xf]
      %v212 = vld [vmem:[%s195 + $0x24] sm:$0xf]
      %v213 = vld [vmem:[%s195 + $0x28] sm:$0xf]
      %v214 = vld [vmem:[%s195 + $0x2c] sm:$0xf]
      %v215 = vld [vmem:[%s1] sm:$0xf]
      %v216 = vld [vmem:[%s1 + $0x4] sm:$0xf]
      %v217 = vld [vmem:[%s1 + $0x8] sm:$0xf]
      %v218 = vld [vmem:[%s1 + $0xc] sm:$0xf]
      %v219 = vld [vmem:[%s1 + $0x10] sm:$0xf]
      %v220 = vld [vmem:[%s1 + $0x14] sm:$0xf]
      %v221 = vld [vmem:[%s1 + $0x18] sm:$0xf]
      %v222 = vld [vmem:[%s1 + $0x1c] sm:$0xf]
      %v223 = vld [vmem:[%s1 + $0x20] sm:$0xf]
      %v224 = vld [vmem:[%s1 + $0x24] sm:$0xf]
      %v225 = vld [vmem:[%s1 + $0x28] sm:$0xf]
      %v226 = vld [vmem:[%s1 + $0x2c] sm:$0xf]
      %v227 = vld [vmem:[%s1 + $0x30] sm:$0xf]
      %v228 = vld [vmem:[%s1 + $0x34] sm:$0xf]
      %v229 = vld [vmem:[%s1 + $0x38] sm:$0xf]
      %v230 = vld [vmem:[%s1 + $0x3c] sm:$0xf]
      %v243 = vunpack.c.l.b16 %v203
      %v244 = vunpack.c.l.b16 %v204
      %v245 = vunpack.c.l.b16 %v205
      %v246 = vunpack.c.l.b16 %v206
      %v247 = vunpack.c.l.b16 %v207
      %v248 = vunpack.c.l.b16 %v208
      %v249 = vunpack.c.l.b16 %v209
      %v250 = vunpack.c.l.b16 %v210
      %v251 = vunpack.c.l.b16 %v211
      %v252 = vunpack.c.l.b16 %v212
      %v253 = vunpack.c.l.b16 %v213
      %v254 = vunpack.c.l.b16 %v214
      %v255 = vpack.c.b16 %v244, %v243
      %v256 = vpack.c.b16 %v246, %v245
      %v257 = vpack.c.b16 %v248, %v247
      %v258 = vpack.c.b16 %v250, %v249
      %v259 = vpack.c.b16 %v252, %v251
      %v260 = vpack.c.b16 %v254, %v253
      %v283 = vunpack.c.l.b16 %v215
      %v284 = vunpack.c.l.b16 %v216
      %v285 = vunpack.c.l.b16 %v217
      %v286 = vunpack.c.l.b16 %v218
      %v287 = vunpack.c.l.b16 %v219
      %v288 = vunpack.c.l.b16 %v220
      %v289 = vunpack.c.l.b16 %v221
      %v290 = vunpack.c.l.b16 %v222
      %v291 = vunpack.c.l.b16 %v223
      %v292 = vunpack.c.l.b16 %v224
      %v293 = vunpack.c.l.b16 %v225
      %v294 = vunpack.c.l.b16 %v226
      %v295 = vunpack.c.l.b16 %v227
      %v296 = vunpack.c.l.b16 %v228
      %v297 = vunpack.c.l.b16 %v229
      %v298 = vunpack.c.l.b16 %v230
      %v299 = vpack.c.b16 %v284, %v283
      %v300 = vpack.c.b16 %v286, %v285
      %v301 = vpack.c.b16 %v288, %v287
      %v302 = vpack.c.b16 %v290, %v289
      %v303 = vpack.c.b16 %v292, %v291
      %v304 = vpack.c.b16 %v294, %v293
      %v305 = vpack.c.b16 %v296, %v295
      %v306 = vpack.c.b16 %v298, %v297
      %315 = vmatprep.subr.bf16.mxu0 0
      %316 = vmatpush1.bf16.msra.mxu0 %v299
      %317 = vmatprep.subr.bf16.mxu0 0
      %318 = vmatpush1.bf16.msra.mxu0 %v300
      %319 = vmatprep.subr.bf16.mxu0 0
      %320 = vmatpush1.bf16.msra.mxu0 %v301
      %321 = vmatprep.subr.bf16.mxu0 0
      %322 = vmatpush1.bf16.msra.mxu0 %v302
      %323 = vmatprep.subr.bf16.mxu0 0
      %324 = vmatpush1.bf16.msra.mxu0 %v303
      %325 = vmatprep.subr.bf16.mxu0 0
      %326 = vmatpush1.bf16.msra.mxu0 %v304
      %327 = vmatprep.subr.bf16.mxu0 0
      %328 = vmatpush1.bf16.msra.mxu0 %v305
      %329 = vmatprep.subr.bf16.mxu0 0
      %330 = vmatpush1.bf16.msra.mxu0 %v306
      %331 = vmatprep.subr.bf16.mxu0 0
      %332 = vmatpush1.bf16.msra.mxu0 0
      %333 = vmatprep.subr.bf16.mxu0 0
      %334 = vmatpush1.bf16.msra.mxu0 0
      %335 = vmatprep.subr.bf16.mxu0 0
      %336 = vmatpush1.bf16.msra.mxu0 0
      %337 = vmatprep.subr.bf16.mxu0 0
      %338 = vmatpush1.bf16.msra.mxu0 0
      %339 = vmatprep.subr.bf16.mxu0 0
      %340 = vmatpush1.bf16.msra.mxu0 0
      %341 = vmatprep.subr.bf16.mxu0 0
      %342 = vmatpush1.bf16.msra.mxu0 0
      %343 = vmatprep.subr.bf16.mxu0 0
      %344 = vmatpush1.bf16.msra.mxu0 0
      %345 = vmatprep.subr.bf16.mxu0 0
      %346 = vmatpush1.bf16.msra.mxu0 0
      %347 = vmatprep.mubr.bf16.mxu0 0
      %348 = vmatmul.mubr.bf16.gmra.mrb[0].mxu0 %v255
      %v349 = vpop.f32.mrb[0].mxu0
      %v350 = vadd.f32 0.0, %v349
      %v351 = vpop.f32.mrb[0].mxu0
      %v352 = vpop.f32.mrb[0].mxu0
      %v353 = vadd.f32 0.0, %v352
      %v354 = vpop.f32.mrb[0].mxu0
      %355 = vmatprep.mubr.bf16.mxu0 0
      %356 = vmatmul.mubr.bf16.gmra.mrb[0].mxu0 %v256
      %v357 = vpop.f32.mrb[0].mxu0
      %v358 = vadd.f32 0.0, %v357
      %v359 = vpop.f32.mrb[0].mxu0
      %v360 = vpop.f32.mrb[0].mxu0
      %v361 = vadd.f32 0.0, %v360
      %v362 = vpop.f32.mrb[0].mxu0
      %363 = vmatprep.mubr.bf16.mxu0 0
      %364 = vmatmul.mubr.bf16.gmra.mrb[0].mxu0 %v257
      %v365 = vpop.f32.mrb[0].mxu0
      %v366 = vadd.f32 0.0, %v365
      %v367 = vpop.f32.mrb[0].mxu0
      %v368 = vpop.f32.mrb[0].mxu0
      %v369 = vadd.f32 0.0, %v368
      %v370 = vpop.f32.mrb[0].mxu0
      %371 = vmatprep.mubr.bf16.mxu0 0
      %372 = vmatmul.mubr.bf16.gmra.mrb[0].mxu0 %v258
      %v373 = vpop.f32.mrb[0].mxu0
      %v374 = vadd.f32 0.0, %v373
      %v375 = vpop.f32.mrb[0].mxu0
      %v376 = vpop.f32.mrb[0].mxu0
      %v377 = vadd.f32 0.0, %v376
      %v378 = vpop.f32.mrb[0].mxu0
      %379 = vmatprep.mubr.bf16.mxu0 0
      %380 = vmatmul.mubr.bf16.gmra.mrb[0].mxu0 %v259
      %v381 = vpop.f32.mrb[0].mxu0
      %v382 = vadd.f32 0.0, %v381
      %v383 = vpop.f32.mrb[0].mxu0
      %v384 = vpop.f32.mrb[0].mxu0
      %v385 = vadd.f32 0.0, %v384
      %v386 = vpop.f32.mrb[0].mxu0
      %387 = vmatprep.mubr.bf16.mxu0 0
      %388 = vmatmul.mubr.bf16.gmra.mrb[0].mxu0 %v260
      %v389 = vpop.f32.mrb[0].mxu0
      %v390 = vadd.f32 0.0, %v389
      %v391 = vpop.f32.mrb[0].mxu0
      %v392 = vpop.f32.mrb[0].mxu0
      %v393 = vadd.f32 0.0, %v392
      %v394 = vpop.f32.mrb[0].mxu0
      %395 = vdwg.mxu0
      %v396 = vld [vmem:[%s2] sm:$0x1]
      %v398 = vlaneseq
      %v399 = vshrl.u32 %v398, 7
      %v400 = vsub.s32 0, %v399
      %v401 = vrot.slane %v396, %v400
      %v403 = vmul.f32 %v350, %v401
      %v404 = vmul.f32 %v353, %v401
      %v405 = vmul.f32 %v358, %v401
      %v406 = vmul.f32 %v361, %v401
      %v407 = vmul.f32 %v366, %v401
      %v408 = vmul.f32 %v369, %v401
      %v409 = vmul.f32 %v374, %v401
      %v410 = vmul.f32 %v377, %v401
      %v411 = vmul.f32 %v382, %v401
      %v412 = vmul.f32 %v385, %v401
      %v413 = vmul.f32 %v390, %v401
      %v414 = vmul.f32 %v393, %v401
      %v415 = vld [vmem:[%s3] sm:$0x1]
      %v417 = vlaneseq
      %v418 = vshrl.u32 %v417, 7
      %v419 = vsub.s32 0, %v418
      %v420 = vrot.slane %v415, %v419
      %v422 = vadd.f32 %v403, %v420
      %v423 = vadd.f32 %v404, %v420
      %v424 = vadd.f32 %v405, %v420
      %v425 = vadd.f32 %v406, %v420
      %v426 = vadd.f32 %v407, %v420
      %v427 = vadd.f32 %v408, %v420
      %v428 = vadd.f32 %v409, %v420
      %v429 = vadd.f32 %v410, %v420
      %v430 = vadd.f32 %v411, %v420
      %v431 = vadd.f32 %v412, %v420
      %v432 = vadd.f32 %v413, %v420
      %v433 = vadd.f32 %v414, %v420
      %v434 = vxor.u32 %v422, 2147483648
      %v435 = vxor.u32 %v423, 2147483648
      %v436 = vxor.u32 %v424, 2147483648
      %v437 = vxor.u32 %v425, 2147483648
      %v438 = vxor.u32 %v426, 2147483648
      %v439 = vxor.u32 %v427, 2147483648
      %v440 = vxor.u32 %v428, 2147483648
      %v441 = vxor.u32 %v429, 2147483648
      %v442 = vxor.u32 %v430, 2147483648
      %v443 = vxor.u32 %v431, 2147483648
      %v444 = vxor.u32 %v432, 2147483648
      %v445 = vxor.u32 %v433, 2147483648
      %v446 = vmul.f32 %v434, 1.442695
      %v447 = vpow.pop %v446
      %v448 = vmul.f32 %v435, 1.442695
      %v449 = vpow.pop %v448
      %v450 = vmul.f32 %v436, 1.442695
      %v451 = vpow.pop %v450
      %v452 = vmul.f32 %v437, 1.442695
      %v453 = vpow.pop %v452
      %v454 = vmul.f32 %v438, 1.442695
      %v455 = vpow.pop %v454
      %v456 = vmul.f32 %v439, 1.442695
      %v457 = vpow.pop %v456
      %v458 = vmul.f32 %v440, 1.442695
      %v459 = vpow.pop %v458
      %v460 = vmul.f32 %v441, 1.442695
      %v461 = vpow.pop %v460
      %v462 = vmul.f32 %v442, 1.442695
      %v463 = vpow.pop %v462
      %v464 = vmul.f32 %v443, 1.442695
      %v465 = vpow.pop %v464
      %v466 = vmul.f32 %v444, 1.442695
      %v467 = vpow.pop %v466
      %v468 = vmul.f32 %v445, 1.442695
      %v469 = vpow.pop %v468
      %v470 = vadd.f32 %v447, 1.0
      %v471 = vadd.f32 %v449, 1.0
      %v472 = vadd.f32 %v451, 1.0
      %v473 = vadd.f32 %v453, 1.0
      %v474 = vadd.f32 %v455, 1.0
      %v475 = vadd.f32 %v457, 1.0
      %v476 = vadd.f32 %v459, 1.0
      %v477 = vadd.f32 %v461, 1.0
      %v478 = vadd.f32 %v463, 1.0
      %v479 = vadd.f32 %v465, 1.0
      %v480 = vadd.f32 %v467, 1.0
      %v481 = vadd.f32 %v469, 1.0
      %v482 = vrcp.pop %v470
      %v483 = vmul.f32 1.0, %v482
      %v484 = vrcp.pop %v471
      %v485 = vmul.f32 1.0, %v484
      %v486 = vrcp.pop %v472
      %v487 = vmul.f32 1.0, %v486
      %v488 = vrcp.pop %v473
      %v489 = vmul.f32 1.0, %v488
      %v490 = vrcp.pop %v474
      %v491 = vmul.f32 1.0, %v490
      %v492 = vrcp.pop %v475
      %v493 = vmul.f32 1.0, %v492
      %v494 = vrcp.pop %v476
      %v495 = vmul.f32 1.0, %v494
      %v496 = vrcp.pop %v477
      %v497 = vmul.f32 1.0, %v496
      %v498 = vrcp.pop %v478
      %v499 = vmul.f32 1.0, %v498
      %v500 = vrcp.pop %v479
      %v501 = vmul.f32 1.0, %v500
      %v502 = vrcp.pop %v480
      %v503 = vmul.f32 1.0, %v502
      %v504 = vrcp.pop %v481
      %v505 = vmul.f32 1.0, %v504
      %v506 = vmul.f32 %v422, %v483
      %v507 = vmul.f32 %v423, %v485
      %v508 = vmul.f32 %v424, %v487
      %v509 = vmul.f32 %v425, %v489
      %v510 = vmul.f32 %v426, %v491
      %v511 = vmul.f32 %v427, %v493
      %v512 = vmul.f32 %v428, %v495
      %v513 = vmul.f32 %v429, %v497
      %v514 = vmul.f32 %v430, %v499
      %v515 = vmul.f32 %v431, %v501
      %v516 = vmul.f32 %v432, %v503
      %v517 = vmul.f32 %v433, %v505
      %v518 = vadd.f32 %v506, %v507
      %v519 = vrot.slane %v518, 4
      %v520 = vadd.f32 %v518, %v519
      %v521 = vrot.slane %v520, 2
      %v522 = vadd.f32 %v520, %v521
      %v523 = vrot.slane %v522, 1
      %v524 = vadd.f32 %v522, %v523
      %v525 = vadd.f32 %v508, %v509
      %v526 = vrot.slane %v525, 4
      %v527 = vadd.f32 %v525, %v526
      %v528 = vrot.slane %v527, 2
      %v529 = vadd.f32 %v527, %v528
      %v530 = vrot.slane %v529, 1
      %v531 = vadd.f32 %v529, %v530
      %v532 = vadd.f32 %v510, %v511
      %v533 = vrot.slane %v532, 4
      %v534 = vadd.f32 %v532, %v533
      %v535 = vrot.slane %v534, 2
      %v536 = vadd.f32 %v534, %v535
      %v537 = vrot.slane %v536, 1
      %v538 = vadd.f32 %v536, %v537
      %v539 = vadd.f32 %v512, %v513
      %v540 = vrot.slane %v539, 4
      %v541 = vadd.f32 %v539, %v540
      %v542 = vrot.slane %v541, 2
      %v543 = vadd.f32 %v541, %v542
      %v544 = vrot.slane %v543, 1
      %v545 = vadd.f32 %v543, %v544
      %v546 = vadd.f32 %v514, %v515
      %v547 = vrot.slane %v546, 4
      %v548 = vadd.f32 %v546, %v547
      %v549 = vrot.slane %v548, 2
      %v550 = vadd.f32 %v548, %v549
      %v551 = vrot.slane %v550, 1
      %v552 = vadd.f32 %v550, %v551
      %v553 = vadd.f32 %v516, %v517
      %v554 = vrot.slane %v553, 4
      %v555 = vadd.f32 %v553, %v554
      %v556 = vrot.slane %v555, 2
      %v557 = vadd.f32 %v555, %v556
      %v558 = vrot.slane %v557, 1
      %v559 = vadd.f32 %v557, %v558
      %v560 = vrcp.pop 16.0
      %v561 = vmul.f32 %v524, %v560
      %v562 = vmul.f32 %v531, %v560
      %v563 = vmul.f32 %v538, %v560
      %v564 = vmul.f32 %v545, %v560
      %v565 = vmul.f32 %v552, %v560
      %v566 = vmul.f32 %v559, %v560
      %567 = vst [vmem:[%s200] sm:$0x1] %v561
      %568 = vst [vmem:[%s200 + $0x1] sm:$0x1] %v562
      %569 = vst [vmem:[%s200 + $0x2] sm:$0x1] %v563
      %570 = vst [vmem:[%s200 + $0x3] sm:$0x1] %v564
      %571 = vst [vmem:[%s200 + $0x4] sm:$0x1] %v565
      %572 = vst [vmem:[%s200 + $0x5] sm:$0x1] %v566
      %s573 = smul.u32 6, %s15
      %p574 = scmp.lt.s32.totalorder %s573, 11
      %s575 = scalar_select %p574, %s573, 11
      %s576 = scalar_lea.vmem %s4, %s575
      // Predicated region
      $region37: #{_lambda_.9} parent=35 // pred_check
        %p577 = pneg %p122
      $region38: #{_lambda_.9} parent=35 // pred_check_branch
        %579 = sbr.rel (%p577) target = $region40
      $region39: #{_lambda_.9} parent=35 // pred_region
        %s580 = smul.u32 6, %s15
      $region40: #{_lambda_.9} parent=35 // pred_fallthru
        _
    $region36: #{_lambda_.9} parent=5 // pred_fallthru
      _
    %p581 = scmp.le.s32.totalorder 2, %s10
    // Predicated region
    $region41: #{_lambda_.9} parent=5 // pred_check
      %p582 = pneg %p581
    $region42: #{_lambda_.9} parent=5 // pred_check_branch
      %584 = sbr.rel (%p582) target = $region44
    $region43: #{_lambda_.9} parent=5 // pred_region
      %s585 = ssub.s32 %s10, 2
      // Predicated region
      $region45: #{_lambda_.9} parent=43 // pred_check
        %p586 = pneg %p128
      $region46: #{_lambda_.9} parent=43 // pred_check_branch
        %588 = sbr.rel (%p586) target = $region48
      $region47: #{_lambda_.9} parent=43 // pred_region
        %s589 = smul.u32 6, %s16
        %p590 = scmp.lt.s32.totalorder %s589, 11
        %s591 = scalar_select %p590, %s589, 11
        %s592 = scalar_lea.vmem %s4, %s591
      $region48: #{_lambda_.9} parent=43 // pred_fallthru
        _
    $region44: #{_lambda_.9} parent=5 // pred_fallthru
      _
  $region6: #{_lambda_.9} parent=0 // loop_footer
    %s14 = sadd.s32 1, %s10
  $region7: #{_lambda_.9} parent=0 // loop_footer_branch
    %9 = sbr.rel target = $region3
  $region8: #{_lambda_.9} parent=0 // loop_exit
    _

// kernel: _lambda_.10
$region0: #{_lambda_.10}
  #allocation0 [shape = 'u32[]', space=smem, size = 0x4, offset = 0x4, fixed_abs, tag = 'smem constant byte address 0x4 - core index']
  #allocation1 [shape = 'u32[144,128]{1,0:T(1,128)}', space=vmem, size = 0x12000, scoped, tag = 'internal scratch']
  #allocation2 [shape = 'f32[6,128]{1,0:T(8,128)}', space=vmem, size = 0x1000, scoped, tag = 'scratch operand']
  #allocation3 [shape = 'f32[6,128]{1,0:T(8,128)}', space=vmem, size = 0x1000, scoped, tag = 'scratch operand']
  #allocation4 [shape = 'f32[6,128]{1,0:T(8,128)}', space=vmem, size = 0x1000, scoped, tag = 'scratch operand']
  %s0 = inlined_call_operand.vmem [shape: bf16[2,6,128], index: 0, kind: input, shape index: {}]
  %s1 = inlined_call_operand.vmem [shape: bf16[2,128,512], index: 1, kind: input, shape index: {}]
  %s2 = inlined_call_operand.vmem [shape: bf16[2,128,512], index: 2, kind: input, shape index: {}]
  %s3 = inlined_call_operand.vmem [shape: f32[2,1,512], index: 3, kind: input, shape index: {}]
  %s4 = inlined_call_operand.vmem [shape: f32[2,6,128], index: 4, kind: output, shape index: {}]
  %s5 = sld [smem:[#allocation0]]
  $region57: #{_lambda_.10} parent=0
    _
  %s7 = ssub.s32 1, %s5
  %s8 = scalar_select 0, %s7, %s5
  loop: start=0, step=1, limit=6
  $region2: #{_lambda_.10} parent=0 // loop_pre_header
    _
  $region3: #{_lambda_.10} parent=0 // loop_header
    %s10 = sphi 0, %s14
    %p11 = scmp.ge.s32.totalorder %s10, 6
    %s17 = sphi 0, %s29
    %s18 = sphi 0, %s25
    %s19 = sphi 0, %s17
    %s20 = sphi 0, %s18
    %s21 = sphi 0, %s19
    %s22 = sphi 0, %s20
    %s40 = sphi 0, %s42
    %s43 = sphi 0, %s40
    %s44 = sphi 0, %s43
    %s60 = sphi 0, %s44
    %s66 = sphi 0, %s68
    %s69 = sphi 0, %s66
    %s70 = sphi 0, %s69
    %s86 = sphi 0, %s70
    %s92 = sphi 0, %s94
    %s95 = sphi 0, %s92
    %s96 = sphi 0, %s95
    %s112 = sphi 0, %s96
    %s118 = sphi 0, %s120
    %s121 = sphi 0, %s118
    %s122 = sphi 0, %s121
    %s138 = sphi 0, %s122
    %s144 = sphi 0, %s146
    %s147 = sphi 0, %s144
    %s148 = sphi 0, %s147
    %s164 = sphi 0, %s148
  $region4: #{_lambda_.10} parent=0 // loop_header_branch
    %13 = sbr.rel (%p11) target = $region8
  $region5: #{_lambda_.10} parent=0 // loop_body
    %s15 = ssub.s32 %s10, 1
    %s16 = ssub.s32 %s10, 2
    %s23 = sadd.s32 1, %s18
    %p24 = scmp.ge.s32.totalorder %s23, 2
    %s25 = scalar_select %p24, 0, %s23
    %s26 = sadd.s32 1, %s17
    %s27 = scalar_select %p24, %s26, %s17
    %p28 = scmp.ge.s32.totalorder %s27, 2
    %s29 = scalar_select %p28, 0, %s27
    %s30 = smul.u32 %s17, 2
    %s31 = ssub.s32 1, %s30
    %s32 = smul.u32 %s31, %s18
    %s33 = sadd.s32 %s17, %s32
    %s34 = smul.u32 %s29, 2
    %s35 = ssub.s32 1, %s34
    %s36 = smul.u32 %s35, %s25
    %s37 = sadd.s32 %s29, %s36
    %s38 = ssub.s32 %s33, %s37
    %p39 = scmp.eq.s32.totalorder %s38, 0
    %s41 = sadd.s32 %s40, 1
    %s42 = scalar_select %p39, %s40, %s41
    %p45 = pneg %p39
    %p46 = scmp.eq.s32.totalorder %s10, 3
    %p47 = por %p45, %p46
    %p48 = scmp.ne.s32.totalorder %s40, %s43
    %p49 = scmp.eq.s32.totalorder %s10, 0
    %p50 = por %p48, %p49
    %p51 = scmp.ne.s32.totalorder %s40, %s43
    %p52 = scmp.eq.s32.totalorder %s15, 3
    %p53 = por %p51, %p52
    %p54 = scmp.ne.s32.totalorder %s43, %s44
    %p55 = scmp.eq.s32.totalorder %s15, 0
    %p56 = por %p54, %p55
    %p57 = scmp.ne.s32.totalorder %s43, %s44
    %p58 = scmp.eq.s32.totalorder %s16, 3
    %p59 = por %p57, %p58
    %p61 = scmp.ne.s32.totalorder %s44, %s60
    %p62 = scmp.eq.s32.totalorder %s16, 0
    %p63 = por %p61, %p62
    %s64 = ssub.s32 %s17, %s29
    %p65 = scmp.eq.s32.totalorder %s64, 0
    %s67 = sadd.s32 %s66, 1
    %s68 = scalar_select %p65, %s66, %s67
    %p71 = pneg %p65
    %p72 = scmp.eq.s32.totalorder %s10, 3
    %p73 = por %p71, %p72
    %p74 = scmp.ne.s32.totalorder %s66, %s69
    %p75 = scmp.eq.s32.totalorder %s10, 0
    %p76 = por %p74, %p75
    %p77 = scmp.ne.s32.totalorder %s66, %s69
    %p78 = scmp.eq.s32.totalorder %s15, 3
    %p79 = por %p77, %p78
    %p80 = scmp.ne.s32.totalorder %s69, %s70
    %p81 = scmp.eq.s32.totalorder %s15, 0
    %p82 = por %p80, %p81
    %p83 = scmp.ne.s32.totalorder %s69, %s70
    %p84 = scmp.eq.s32.totalorder %s16, 3
    %p85 = por %p83, %p84
    %p87 = scmp.ne.s32.totalorder %s70, %s86
    %p88 = scmp.eq.s32.totalorder %s16, 0
    %p89 = por %p87, %p88
    %s90 = ssub.s32 %s17, %s29
    %p91 = scmp.eq.s32.totalorder %s90, 0
    %s93 = sadd.s32 %s92, 1
    %s94 = scalar_select %p91, %s92, %s93
    %p97 = pneg %p91
    %p98 = scmp.eq.s32.totalorder %s10, 3
    %p99 = por %p97, %p98
    %p100 = scmp.ne.s32.totalorder %s92, %s95
    %p101 = scmp.eq.s32.totalorder %s10, 0
    %p102 = por %p100, %p101
    %p103 = scmp.ne.s32.totalorder %s92, %s95
    %p104 = scmp.eq.s32.totalorder %s15, 3
    %p105 = por %p103, %p104
    %p106 = scmp.ne.s32.totalorder %s95, %s96
    %p107 = scmp.eq.s32.totalorder %s15, 0
    %p108 = por %p106, %p107
    %p109 = scmp.ne.s32.totalorder %s95, %s96
    %p110 = scmp.eq.s32.totalorder %s16, 3
    %p111 = por %p109, %p110
    %p113 = scmp.ne.s32.totalorder %s96, %s112
    %p114 = scmp.eq.s32.totalorder %s16, 0
    %p115 = por %p113, %p114
    %s116 = ssub.s32 %s17, %s29
    %p117 = scmp.eq.s32.totalorder %s116, 0
    %s119 = sadd.s32 %s118, 1
    %s120 = scalar_select %p117, %s118, %s119
    %p123 = pneg %p117
    %p124 = scmp.eq.s32.totalorder %s10, 3
    %p125 = por %p123, %p124
    %p126 = scmp.ne.s32.totalorder %s118, %s121
    %p127 = scmp.eq.s32.totalorder %s10, 0
    %p128 = por %p126, %p127
    %p129 = scmp.ne.s32.totalorder %s118, %s121
    %p130 = scmp.eq.s32.totalorder %s15, 3
    %p131 = por %p129, %p130
    %p132 = scmp.ne.s32.totalorder %s121, %s122
    %p133 = scmp.eq.s32.totalorder %s15, 0
    %p134 = por %p132, %p133
    %p135 = scmp.ne.s32.totalorder %s121, %s122
    %p136 = scmp.eq.s32.totalorder %s16, 3
    %p137 = por %p135, %p136
    %p139 = scmp.ne.s32.totalorder %s122, %s138
    %p140 = scmp.eq.s32.totalorder %s16, 0
    %p141 = por %p139, %p140
    %s142 = ssub.s32 %s17, %s29
    %p143 = scmp.eq.s32.totalorder %s142, 0
    %s145 = sadd.s32 %s144, 1
    %s146 = scalar_select %p143, %s144, %s145
    %p149 = pneg %p143
    %p150 = scmp.eq.s32.totalorder %s10, 3
    %p151 = por %p149, %p150
    %p152 = scmp.ne.s32.totalorder %s144, %s147
    %p153 = scmp.eq.s32.totalorder %s10, 0
    %p154 = por %p152, %p153
    %p155 = scmp.ne.s32.totalorder %s144, %s147
    %p156 = scmp.eq.s32.totalorder %s15, 3
    %p157 = por %p155, %p156
    %p158 = scmp.ne.s32.totalorder %s147, %s148
    %p159 = scmp.eq.s32.totalorder %s15, 0
    %p160 = por %p158, %p159
    %p161 = scmp.ne.s32.totalorder %s147, %s148
    %p162 = scmp.eq.s32.totalorder %s16, 3
    %p163 = por %p161, %p162
    %p165 = scmp.ne.s32.totalorder %s148, %s164
    %p166 = scmp.eq.s32.totalorder %s16, 0
    %p167 = por %p165, %p166
    %p168 = scmp.le.s32.totalorder 1, %s10
    %p169 = scmp.lt.s32.totalorder %s10, 5
    %p170 = pnand %p168, %p169
    %p171 = pneg %p170
    // Predicated region
    $region9: #{_lambda_.10} parent=5 // pred_check
      _
    $region10: #{_lambda_.10} parent=5 // pred_check_branch
      %173 = sbr.rel (%p170) target = $region12
    $region11: #{_lambda_.10} parent=5 // pred_region
      %s174 = ssub.s32 %s10, 1
    $region12: #{_lambda_.10} parent=5 // pred_fallthru
      _
    %p175 = scmp.lt.s32.totalorder %s10, 4
    // Predicated region
    $region13: #{_lambda_.10} parent=5 // pred_check
      %p176 = pneg %p175
    $region14: #{_lambda_.10} parent=5 // pred_check_branch
      %178 = sbr.rel (%p176) target = $region16
    $region15: #{_lambda_.10} parent=5 // pred_region
      // Predicated region
      $region17: #{_lambda_.10} parent=15 // pred_check
        %p179 = pneg %p50
      $region18: #{_lambda_.10} parent=15 // pred_check_branch
        %181 = sbr.rel (%p179) target = $region20
      $region19: #{_lambda_.10} parent=15 // pred_region
        %s182 = smul.u32 %s17, 2
        %s183 = ssub.s32 1, %s182
        %s184 = smul.u32 %s183, %s18
        %s185 = sadd.s32 %s17, %s184
        %p186 = scmp.lt.s32.totalorder %s185, 1
        %s187 = scalar_select %p186, %s185, 1
        %s188 = smul.addr %s187, 4
        %s189 = scalar_lea.vmem %s0, %s188
        %s190 = smul.u32 %s17, 2
        %s191 = ssub.s32 1, %s190
        %s192 = smul.u32 %s191, %s18
        %s193 = sadd.s32 %s17, %s192
      $region20: #{_lambda_.10} parent=15 // pred_fallthru
        _
      // Predicated region
      $region21: #{_lambda_.10} parent=15 // pred_check
        %p194 = pneg %p76
      $region22: #{_lambda_.10} parent=15 // pred_check_branch
        %196 = sbr.rel (%p194) target = $region24
      $region23: #{_lambda_.10} parent=15 // pred_region
        %p197 = scmp.lt.s32.totalorder %s17, 1
        %s198 = scalar_select %p197, %s17, 1
        %s199 = smul.addr %s198, 64
        %s200 = smul.addr %s199, 4
        %s201 = scalar_lea.vmem %s1, %s200
      $region24: #{_lambda_.10} parent=15 // pred_fallthru
        _
      // Predicated region
      $region25: #{_lambda_.10} parent=15 // pred_check
        %p202 = pneg %p102
      $region26: #{_lambda_.10} parent=15 // pred_check_branch
        %204 = sbr.rel (%p202) target = $region28
      $region27: #{_lambda_.10} parent=15 // pred_region
        %p205 = scmp.lt.s32.totalorder %s17, 1
        %s206 = scalar_select %p205, %s17, 1
        %s207 = smul.addr %s206, 64
        %s208 = smul.addr %s207, 4
        %s209 = scalar_lea.vmem %s2, %s208
      $region28: #{_lambda_.10} parent=15 // pred_fallthru
        _
      // Predicated region
      $region29: #{_lambda_.10} parent=15 // pred_check
        %p210 = pneg %p128
      $region30: #{_lambda_.10} parent=15 // pred_check_branch
        %212 = sbr.rel (%p210) target = $region32
      $region31: #{_lambda_.10} parent=15 // pred_region
        %p213 = scmp.lt.s32.totalorder %s17, 1
        %s214 = scalar_select %p213, %s17, 1
        %s215 = smul.addr %s214, 4
        %s216 = scalar_lea.vmem %s3, %s215
      $region32: #{_lambda_.10} parent=15 // pred_fallthru
        _
    $region16: #{_lambda_.10} parent=5 // pred_fallthru
      _
    %p217 = scmp.le.s32.totalorder 1, %s10
    %p218 = scmp.lt.s32.totalorder %s10, 5
    %p219 = pnand %p217, %p218
    %p220 = pneg %p219
    // Predicated region
    $region33: #{_lambda_.10} parent=5 // pred_check
      _
    $region34: #{_lambda_.10} parent=5 // pred_check_branch
      %222 = sbr.rel (%p219) target = $region36
    $region35: #{_lambda_.10} parent=5 // pred_region
      %s223 = ssub.s32 %s10, 1
      %s224 = smul.u32 %s19, 2
      %s225 = ssub.s32 1, %s224
      %s226 = smul.u32 %s225, %s20
      %s227 = sadd.s32 %s19, %s226
      %p228 = scmp.lt.s32.totalorder %s227, 1
      %s229 = scalar_select %p228, %s227, 1
      %s230 = smul.addr %s229, 4
      %s231 = scalar_lea.vmem %s0, %s230
      %p232 = pneg %p56
      %p233 = pneg %p53
      %p234 = scmp.lt.s32.totalorder %s19, 1
      %s235 = scalar_select %p234, %s19, 1
      %s236 = smul.addr %s235, 64
      %s237 = smul.addr %s236, 4
      %s238 = scalar_lea.vmem %s1, %s237
      %p239 = pneg %p82
      %p240 = pneg %p79
      %p241 = scmp.lt.s32.totalorder %s19, 1
      %s242 = scalar_select %p241, %s19, 1
      %s243 = smul.addr %s242, 64
      %s244 = smul.addr %s243, 4
      %s245 = scalar_lea.vmem %s2, %s244
      %p246 = pneg %p108
      %p247 = pneg %p105
      %p248 = scmp.lt.s32.totalorder %s19, 1
      %s249 = scalar_select %p248, %s19, 1
      %s250 = smul.addr %s249, 4
      %s251 = scalar_lea.vmem %s3, %s250
      %p252 = pneg %p134
      %p253 = pneg %p131
      %p254 = pneg %p160
      %p255 = pneg %p157
      %p256 = scmp.lt.s32.totalorder %s19, 1
      %s257 = scalar_select %p256, %s19, 1
      %s258 = smul.addr %s257, 8
      %s259 = scalar_lea.vmem %s4, %s258
      %s260 = smul.u32 %s19, 2
      %s261 = ssub.s32 1, %s260
      %s262 = smul.u32 %s261, %s20
      %s263 = sadd.s32 %s19, %s262
      %p264 = scmp.lt.s32.totalorder %s263, 1
      %s265 = scalar_select %p264, %s263, 1
      %s266 = smul.addr %s265, 4
      %s267 = scalar_lea.vmem %s0, %s266
      %s268 = smul.u32 %s19, 2
      %s269 = ssub.s32 1, %s268
      %s270 = smul.u32 %s269, %s20
      %s271 = sadd.s32 %s19, %s270
      %p272 = scmp.lt.s32.totalorder %s19, 1
      %s273 = scalar_select %p272, %s19, 1
      %s274 = smul.addr %s273, 64
      %s275 = smul.addr %s274, 4
      %s276 = scalar_lea.vmem %s1, %s275
      %p277 = scmp.lt.s32.totalorder %s19, 1
      %s278 = scalar_select %p277, %s19, 1
      %s279 = smul.addr %s278, 64
      %s280 = smul.addr %s279, 4
      %s281 = scalar_lea.vmem %s2, %s280
      %p282 = scmp.lt.s32.totalorder %s19, 1
      %s283 = scalar_select %p282, %s19, 1
      %s284 = smul.addr %s283, 4
      %s285 = scalar_lea.vmem %s3, %s284
      %p286 = scmp.lt.s32.totalorder %s19, 1
      %s287 = scalar_select %p286, %s19, 1
      %s288 = smul.addr %s287, 8
      %s289 = scalar_lea.vmem %s4, %s288
      %p291 = scmp.eq.s32.totalorder %s20, 0
      // Predicated region
      $region37: #{_lambda_.10} parent=35 // pred_check
        %p292 = pneg %p291
      $region38: #{_lambda_.10} parent=35 // pred_check_branch
        %294 = sbr.rel (%p292) target = $region40
      $region39: #{_lambda_.10} parent=35 // pred_region
        %295 = vst [vmem:[#allocation2] sm:$0x3f] 0.0
        %296 = vst [vmem:[#allocation3] sm:$0x3f] 0.0
        %297 = vst [vmem:[#allocation4] sm:$0x3f] 0.0
      $region40: #{_lambda_.10} parent=35 // pred_fallthru
        _
      %v298 = vld [vmem:[%s267] sm:$0x7]
      %v299 = vld [vmem:[#allocation2] sm:$0x3f]
      %v300 = vld [vmem:[%s276] sm:$0xff]
      %v301 = vld [vmem:[%s276 + $0x8] sm:$0xff]
      %v302 = vld [vmem:[%s276 + $0x10] sm:$0xff]
      %v303 = vld [vmem:[%s276 + $0x18] sm:$0xff]
      %v304 = vld [vmem:[%s276 + $0x20] sm:$0xff]
      %v305 = vld [vmem:[%s276 + $0x28] sm:$0xff]
      %v306 = vld [vmem:[%s276 + $0x30] sm:$0xff]
      %v307 = vld [vmem:[%s276 + $0x38] sm:$0xff]
      %v308 = vld [vmem:[%s276 + $0x40] sm:$0xff]
      %v309 = vld [vmem:[%s276 + $0x48] sm:$0xff]
      %v310 = vld [vmem:[%s276 + $0x50] sm:$0xff]
      %v311 = vld [vmem:[%s276 + $0x58] sm:$0xff]
      %v312 = vld [vmem:[%s276 + $0x60] sm:$0xff]
      %v313 = vld [vmem:[%s276 + $0x68] sm:$0xff]
      %v314 = vld [vmem:[%s276 + $0x70] sm:$0xff]
      %v315 = vld [vmem:[%s276 + $0x78] sm:$0xff]
      %v316 = vld [vmem:[%s276 + $0x80] sm:$0xff]
      %v317 = vld [vmem:[%s276 + $0x88] sm:$0xff]
      %v318 = vld [vmem:[%s276 + $0x90] sm:$0xff]
      %v319 = vld [vmem:[%s276 + $0x98] sm:$0xff]
      %v320 = vld [vmem:[%s276 + $0xa0] sm:$0xff]
      %v321 = vld [vmem:[%s276 + $0xa8] sm:$0xff]
      %v322 = vld [vmem:[%s276 + $0xb0] sm:$0xff]
      %v323 = vld [vmem:[%s276 + $0xb8] sm:$0xff]
      %v324 = vld [vmem:[%s276 + $0xc0] sm:$0xff]
      %v325 = vld [vmem:[%s276 + $0xc8] sm:$0xff]
      %v326 = vld [vmem:[%s276 + $0xd0] sm:$0xff]
      %v327 = vld [vmem:[%s276 + $0xd8] sm:$0xff]
      %v328 = vld [vmem:[%s276 + $0xe0] sm:$0xff]
      %v329 = vld [vmem:[%s276 + $0xe8] sm:$0xff]
      %v330 = vld [vmem:[%s276 + $0xf0] sm:$0xff]
      %v331 = vld [vmem:[%s276 + $0xf8] sm:$0xff]
      %v332 = vpack.c.bf16 %v299, %v299
      %v333 = vld [vmem:[%s281] sm:$0xff]
      %v334 = vld [vmem:[%s281 + $0x8] sm:$0xff]
      %v335 = vld [vmem:[%s281 + $0x10] sm:$0xff]
      %v336 = vld [vmem:[%s281 + $0x18] sm:$0xff]
      %v337 = vld [vmem:[%s281 + $0x20] sm:$0xff]
      %v338 = vld [vmem:[%s281 + $0x28] sm:$0xff]
      %v339 = vld [vmem:[%s281 + $0x30] sm:$0xff]
      %v340 = vld [vmem:[%s281 + $0x38] sm:$0xff]
      %v341 = vld [vmem:[%s281 + $0x40] sm:$0xff]
      %v342 = vld [vmem:[%s281 + $0x48] sm:$0xff]
      %v343 = vld [vmem:[%s281 + $0x50] sm:$0xff]
      %v344 = vld [vmem:[%s281 + $0x58] sm:$0xff]
      %v345 = vld [vmem:[%s281 + $0x60] sm:$0xff]
      %v346 = vld [vmem:[%s281 + $0x68] sm:$0xff]
      %v347 = vld [vmem:[%s281 + $0x70] sm:$0xff]
      %v348 = vld [vmem:[%s281 + $0x78] sm:$0xff]
      %v349 = vld [vmem:[%s281 + $0x80] sm:$0xff]
      %v350 = vld [vmem:[%s281 + $0x88] sm:$0xff]
      %v351 = vld [vmem:[%s281 + $0x90] sm:$0xff]
      %v352 = vld [vmem:[%s281 + $0x98] sm:$0xff]
      %v353 = vld [vmem:[%s281 + $0xa0] sm:$0xff]
      %v354 = vld [vmem:[%s281 + $0xa8] sm:$0xff]
      %v355 = vld [vmem:[%s281 + $0xb0] sm:$0xff]
      %v356 = vld [vmem:[%s281 + $0xb8] sm:$0xff]
      %v357 = vld [vmem:[%s281 + $0xc0] sm:$0xff]
      %v358 = vld [vmem:[%s281 + $0xc8] sm:$0xff]
      %v359 = vld [vmem:[%s281 + $0xd0] sm:$0xff]
      %v360 = vld [vmem:[%s281 + $0xd8] sm:$0xff]
      %v361 = vld [vmem:[%s281 + $0xe0] sm:$0xff]
      %v362 = vld [vmem:[%s281 + $0xe8] sm:$0xff]
      %v363 = vld [vmem:[%s281 + $0xf0] sm:$0xff]
      %v364 = vld [vmem:[%s281 + $0xf8] sm:$0xff]
      %v397 = vunpack.c.l.b16 %v333
      %v398 = vunpack.c.h.b16 %v333
      %v399 = vunpack.c.l.b16 %v334
      %v400 = vunpack.c.h.b16 %v334
      %v401 = vunpack.c.l.b16 %v335
      %v402 = vunpack.c.h.b16 %v335
      %v403 = vunpack.c.l.b16 %v336
      %v404 = vunpack.c.h.b16 %v336
      %v405 = vunpack.c.l.b16 %v337
      %v406 = vunpack.c.h.b16 %v337
      %v407 = vunpack.c.l.b16 %v338
      %v408 = vunpack.c.h.b16 %v338
      %v409 = vunpack.c.l.b16 %v339
      %v410 = vunpack.c.h.b16 %v339
      %v411 = vunpack.c.l.b16 %v340
      %v412 = vunpack.c.h.b16 %v340
      %v413 = vunpack.c.l.b16 %v341
      %v414 = vunpack.c.h.b16 %v341
      %v415 = vunpack.c.l.b16 %v342
      %v416 = vunpack.c.h.b16 %v342
      %v417 = vunpack.c.l.b16 %v343
      %v418 = vunpack.c.h.b16 %v343
      %v419 = vunpack.c.l.b16 %v344
      %v420 = vunpack.c.h.b16 %v344
      %v421 = vunpack.c.l.b16 %v345
      %v422 = vunpack.c.h.b16 %v345
      %v423 = vunpack.c.l.b16 %v346
      %v424 = vunpack.c.h.b16 %v346
      %v425 = vunpack.c.l.b16 %v347
      %v426 = vunpack.c.h.b16 %v347
      %v427 = vunpack.c.l.b16 %v348
      %v428 = vunpack.c.h.b16 %v348
      %v429 = vunpack.c.l.b16 %v349
      %v430 = vunpack.c.h.b16 %v349
      %v431 = vunpack.c.l.b16 %v350
      %v432 = vunpack.c.h.b16 %v350
      %v433 = vunpack.c.l.b16 %v351
      %v434 = vunpack.c.h.b16 %v351
      %v435 = vunpack.c.l.b16 %v352
      %v436 = vunpack.c.h.b16 %v352
      %v437 = vunpack.c.l.b16 %v353
      %v438 = vunpack.c.h.b16 %v353
      %v439 = vunpack.c.l.b16 %v354
      %v440 = vunpack.c.h.b16 %v354
      %v441 = vunpack.c.l.b16 %v355
      %v442 = vunpack.c.h.b16 %v355
      %v443 = vunpack.c.l.b16 %v356
      %v444 = vunpack.c.h.b16 %v356
      %v445 = vunpack.c.l.b16 %v357
      %v446 = vunpack.c.h.b16 %v357
      %v447 = vunpack.c.l.b16 %v358
      %v448 = vunpack.c.h.b16 %v358
      %v449 = vunpack.c.l.b16 %v359
      %v450 = vunpack.c.h.b16 %v359
      %v451 = vunpack.c.l.b16 %v360
      %v452 = vunpack.c.h.b16 %v360
      %v453 = vunpack.c.l.b16 %v361
      %v454 = vunpack.c.h.b16 %v361
      %v455 = vunpack.c.l.b16 %v362
      %v456 = vunpack.c.h.b16 %v362
      %v457 = vunpack.c.l.b16 %v363
      %v458 = vunpack.c.h.b16 %v363
      %v459 = vunpack.c.l.b16 %v364
      %v460 = vunpack.c.h.b16 %v364
      %v461 = vpack.c.b16 %v401, %v397
      %v462 = vpack.c.b16 %v402, %v398
      %v463 = vpack.c.b16 %v403, %v399
      %v464 = vpack.c.b16 %v404, %v400
      %v465 = vpack.c.b16 %v409, %v405
      %v466 = vpack.c.b16 %v410, %v406
      %v467 = vpack.c.b16 %v411, %v407
      %v468 = vpack.c.b16 %v412, %v408
      %v469 = vpack.c.b16 %v417, %v413
      %v470 = vpack.c.b16 %v418, %v414
      %v471 = vpack.c.b16 %v419, %v415
      %v472 = vpack.c.b16 %v420, %v416
      %v473 = vpack.c.b16 %v425, %v421
      %v474 = vpack.c.b16 %v426, %v422
      %v475 = vpack.c.b16 %v427, %v423
      %v476 = vpack.c.b16 %v428, %v424
      %v477 = vpack.c.b16 %v433, %v429
      %v478 = vpack.c.b16 %v434, %v430
      %v479 = vpack.c.b16 %v435, %v431
      %v480 = vpack.c.b16 %v436, %v432
      %v481 = vpack.c.b16 %v441, %v437
      %v482 = vpack.c.b16 %v442, %v438
      %v483 = vpack.c.b16 %v443, %v439
      %v484 = vpack.c.b16 %v444, %v440
      %v485 = vpack.c.b16 %v449, %v445
      %v486 = vpack.c.b16 %v450, %v446
      %v487 = vpack.c.b16 %v451, %v447
      %v488 = vpack.c.b16 %v452, %v448
      %v489 = vpack.c.b16 %v457, %v453
      %v490 = vpack.c.b16 %v458, %v454
      %v491 = vpack.c.b16 %v459, %v455
      %v492 = vpack.c.b16 %v460, %v456
      %525 = vmatprep.subr.bf16.mxu0 %v462
      %526 = vmatpush1.bf16.msra.mxu0 %v461
      %527 = vmatprep.subr.bf16.mxu0 %v466
      %528 = vmatpush1.bf16.msra.mxu0 %v465
      %529 = vmatprep.subr.bf16.mxu0 %v470
      %530 = vmatpush1.bf16.msra.mxu0 %v469
      %531 = vmatprep.subr.bf16.mxu0 %v474
      %532 = vmatpush1.bf16.msra.mxu0 %v473
      %533 = vmatprep.subr.bf16.mxu0 %v478
      %534 = vmatpush1.bf16.msra.mxu0 %v477
      %535 = vmatprep.subr.bf16.mxu0 %v482
      %536 = vmatpush1.bf16.msra.mxu0 %v481
      %537 = vmatprep.subr.bf16.mxu0 %v486
      %538 = vmatpush1.bf16.msra.mxu0 %v485
      %539 = vmatprep.subr.bf16.mxu0 %v490
      %540 = vmatpush1.bf16.msra.mxu0 %v489
      %541 = vmatprep.subr.bf16.mxu0 0
      %542 = vmatpush1.bf16.msra.mxu0 0
      %543 = vmatprep.subr.bf16.mxu0 0
      %544 = vmatpush1.bf16.msra.mxu0 0
      %545 = vmatprep.subr.bf16.mxu0 0
      %546 = vmatpush1.bf16.msra.mxu0 0
      %547 = vmatprep.subr.bf16.mxu0 0
      %548 = vmatpush1.bf16.msra.mxu0 0
      %549 = vmatprep.subr.bf16.mxu0 0
      %550 = vmatpush1.bf16.msra.mxu0 0
      %551 = vmatprep.subr.bf16.mxu0 0
      %552 = vmatpush1.bf16.msra.mxu0 0
      %553 = vmatprep.subr.bf16.mxu0 0
      %554 = vmatpush1.bf16.msra.mxu0 0
      %555 = vmatprep.subr.bf16.mxu0 0
      %556 = vmatpush1.bf16.msra.mxu0 0
      %557 = vmatprep.mubr.bf16.mxu0 0
      %558 = vmatmul.mubr.bf16.gmra.mrb[0].mxu0 %v332
      %v559 = vpop.f32.mrb[0].mxu0
      %v560 = vadd.f32 0.0, %v559
      %v561 = vpop.f32.mrb[0].mxu0
      %v562 = vadd.f32 0.0, %v561
      %v563 = vpop.f32.mrb[0].mxu0
      %v564 = vpop.f32.mrb[0].mxu0
      %565 = vdwg.mxu0
      %566 = vmatprep.subr.bf16.mxu0 %v464
      %567 = vmatpush1.bf16.msra.mxu0 %v463
      %568 = vmatprep.subr.bf16.mxu0 %v468
      %569 = vmatpush1.bf16.msra.mxu0 %v467
      %570 = vmatprep.subr.bf16.mxu0 %v472
      %571 = vmatpush1.bf16.msra.mxu0 %v471
      %572 = vmatprep.subr.bf16.mxu0 %v476
      %573 = vmatpush1.bf16.msra.mxu0 %v475
      %574 = vmatprep.subr.bf16.mxu0 %v480
      %575 = vmatpush1.bf16.msra.mxu0 %v479
      %576 = vmatprep.subr.bf16.mxu0 %v484
      %577 = vmatpush1.bf16.msra.mxu0 %v483
      %578 = vmatprep.subr.bf16.mxu0 %v488
      %579 = vmatpush1.bf16.msra.mxu0 %v487
      %580 = vmatprep.subr.bf16.mxu0 %v492
      %581 = vmatpush1.bf16.msra.mxu0 %v491
      %582 = vmatprep.subr.bf16.mxu0 0
      %583 = vmatpush1.bf16.msra.mxu0 0
      %584 = vmatprep.subr.bf16.mxu0 0
      %585 = vmatpush1.bf16.msra.mxu0 0
      %586 = vmatprep.subr.bf16.mxu0 0
      %587 = vmatpush1.bf16.msra.mxu0 0
      %588 = vmatprep.subr.bf16.mxu0 0
      %589 = vmatpush1.bf16.msra.mxu0 0
      %590 = vmatprep.subr.bf16.mxu0 0
      %591 = vmatpush1.bf16.msra.mxu0 0
      %592 = vmatprep.subr.bf16.mxu0 0
      %593 = vmatpush1.bf16.msra.mxu0 0
      %594 = vmatprep.subr.bf16.mxu0 0
      %595 = vmatpush1.bf16.msra.mxu0 0
      %596 = vmatprep.subr.bf16.mxu0 0
      %597 = vmatpush1.bf16.msra.mxu0 0
      %598 = vmatprep.mubr.bf16.mxu0 0
      %599 = vmatmul.mubr.bf16.gmra.mrb[0].mxu0 %v332
      %v600 = vpop.f32.mrb[0].mxu0
      %v601 = vadd.f32 0.0, %v600
      %v602 = vpop.f32.mrb[0].mxu0
      %v603 = vadd.f32 0.0, %v602
      %v604 = vpop.f32.mrb[0].mxu0
      %v605 = vpop.f32.mrb[0].mxu0
      %606 = vdwg.mxu0
      %v639 = vunpack.c.l.b16 %v300
      %v640 = vunpack.c.h.b16 %v300
      %v641 = vunpack.c.l.b16 %v301
      %v642 = vunpack.c.h.b16 %v301
      %v643 = vunpack.c.l.b16 %v302
      %v644 = vunpack.c.h.b16 %v302
      %v645 = vunpack.c.l.b16 %v303
      %v646 = vunpack.c.h.b16 %v303
      %v647 = vunpack.c.l.b16 %v304
      %v648 = vunpack.c.h.b16 %v304
      %v649 = vunpack.c.l.b16 %v305
      %v650 = vunpack.c.h.b16 %v305
      %v651 = vunpack.c.l.b16 %v306
      %v652 = vunpack.c.h.b16 %v306
      %v653 = vunpack.c.l.b16 %v307
      %v654 = vunpack.c.h.b16 %v307
      %v655 = vunpack.c.l.b16 %v308
      %v656 = vunpack.c.h.b16 %v308
      %v657 = vunpack.c.l.b16 %v309
      %v658 = vunpack.c.h.b16 %v309
      %v659 = vunpack.c.l.b16 %v310
      %v660 = vunpack.c.h.b16 %v310
      %v661 = vunpack.c.l.b16 %v311
      %v662 = vunpack.c.h.b16 %v311
      %v663 = vunpack.c.l.b16 %v312
      %v664 = vunpack.c.h.b16 %v312
      %v665 = vunpack.c.l.b16 %v313
      %v666 = vunpack.c.h.b16 %v313
      %v667 = vunpack.c.l.b16 %v314
      %v668 = vunpack.c.h.b16 %v314
      %v669 = vunpack.c.l.b16 %v315
      %v670 = vunpack.c.h.b16 %v315
      %v671 = vunpack.c.l.b16 %v316
      %v672 = vunpack.c.h.b16 %v316
      %v673 = vunpack.c.l.b16 %v317
      %v674 = vunpack.c.h.b16 %v317
      %v675 = vunpack.c.l.b16 %v318
      %v676 = vunpack.c.h.b16 %v318
      %v677 = vunpack.c.l.b16 %v319
      %v678 = vunpack.c.h.b16 %v319
      %v679 = vunpack.c.l.b16 %v320
      %v680 = vunpack.c.h.b16 %v320
      %v681 = vunpack.c.l.b16 %v321
      %v682 = vunpack.c.h.b16 %v321
      %v683 = vunpack.c.l.b16 %v322
      %v684 = vunpack.c.h.b16 %v322
      %v685 = vunpack.c.l.b16 %v323
      %v686 = vunpack.c.h.b16 %v323
      %v687 = vunpack.c.l.b16 %v324
      %v688 = vunpack.c.h.b16 %v324
      %v689 = vunpack.c.l.b16 %v325
      %v690 = vunpack.c.h.b16 %v325
      %v691 = vunpack.c.l.b16 %v326
      %v692 = vunpack.c.h.b16 %v326
      %v693 = vunpack.c.l.b16 %v327
      %v694 = vunpack.c.h.b16 %v327
      %v695 = vunpack.c.l.b16 %v328
      %v696 = vunpack.c.h.b16 %v328
      %v697 = vunpack.c.l.b16 %v329
      %v698 = vunpack.c.h.b16 %v329
      %v699 = vunpack.c.l.b16 %v330
      %v700 = vunpack.c.h.b16 %v330
      %v701 = vunpack.c.l.b16 %v331
      %v702 = vunpack.c.h.b16 %v331
      %v703 = vpack.c.b16 %v643, %v639
      %v704 = vpack.c.b16 %v644, %v640
      %v705 = vpack.c.b16 %v645, %v641
      %v706 = vpack.c.b16 %v646, %v642
      %v707 = vpack.c.b16 %v651, %v647
      %v708 = vpack.c.b16 %v652, %v648
      %v709 = vpack.c.b16 %v653, %v649
      %v710 = vpack.c.b16 %v654, %v650
      %v711 = vpack.c.b16 %v659, %v655
      %v712 = vpack.c.b16 %v660, %v656
      %v713 = vpack.c.b16 %v661, %v657
      %v714 = vpack.c.b16 %v662, %v658
      %v715 = vpack.c.b16 %v667, %v663
      %v716 = vpack.c.b16 %v668, %v664
      %v717 = vpack.c.b16 %v669, %v665
      %v718 = vpack.c.b16 %v670, %v666
      %v719 = vpack.c.b16 %v675, %v671
      %v720 = vpack.c.b16 %v676, %v672
      %v721 = vpack.c.b16 %v677, %v673
      %v722 = vpack.c.b16 %v678, %v674
      %v723 = vpack.c.b16 %v683, %v679
      %v724 = vpack.c.b16 %v684, %v680
      %v725 = vpack.c.b16 %v685, %v681
      %v726 = vpack.c.b16 %v686, %v682
      %v727 = vpack.c.b16 %v691, %v687
      %v728 = vpack.c.b16 %v692, %v688
      %v729 = vpack.c.b16 %v693, %v689
      %v730 = vpack.c.b16 %v694, %v690
      %v731 = vpack.c.b16 %v699, %v695
      %v732 = vpack.c.b16 %v700, %v696
      %v733 = vpack.c.b16 %v701, %v697
      %v734 = vpack.c.b16 %v702, %v698
      %767 = vmatprep.subr.bf16.mxu0 %v704
      %768 = vmatpush1.bf16.msra.mxu0 %v703
      %769 = vmatprep.subr.bf16.mxu0 %v708
      %770 = vmatpush1.bf16.msra.mxu0 %v707
      %771 = vmatprep.subr.bf16.mxu0 %v712
      %772 = vmatpush1.bf16.msra.mxu0 %v711
      %773 = vmatprep.subr.bf16.mxu0 %v716
      %774 = vmatpush1.bf16.msra.mxu0 %v715
      %775 = vmatprep.subr.bf16.mxu0 %v720
      %776 = vmatpush1.bf16.msra.mxu0 %v719
      %777 = vmatprep.subr.bf16.mxu0 %v724
      %778 = vmatpush1.bf16.msra.mxu0 %v723
      %779 = vmatprep.subr.bf16.mxu0 %v728
      %780 = vmatpush1.bf16.msra.mxu0 %v727
      %781 = vmatprep.subr.bf16.mxu0 %v732
      %782 = vmatpush1.bf16.msra.mxu0 %v731
      %783 = vmatprep.subr.bf16.mxu0 0
      %784 = vmatpush1.bf16.msra.mxu0 0
      %785 = vmatprep.subr.bf16.mxu0 0
      %786 = vmatpush1.bf16.msra.mxu0 0
      %787 = vmatprep.subr.bf16.mxu0 0
      %788 = vmatpush1.bf16.msra.mxu0 0
      %789 = vmatprep.subr.bf16.mxu0 0
      %790 = vmatpush1.bf16.msra.mxu0 0
      %791 = vmatprep.subr.bf16.mxu0 0
      %792 = vmatpush1.bf16.msra.mxu0 0
      %793 = vmatprep.subr.bf16.mxu0 0
      %794 = vmatpush1.bf16.msra.mxu0 0
      %795 = vmatprep.subr.bf16.mxu0 0
      %796 = vmatpush1.bf16.msra.mxu0 0
      %797 = vmatprep.subr.bf16.mxu0 0
      %798 = vmatpush1.bf16.msra.mxu0 0
      %799 = vmatprep.mubr.bf16.mxu0 0
      %800 = vmatmul.mubr.bf16.gmra.mrb[0].mxu0 %v298
      %v801 = vpop.f32.mrb[0].mxu0
      %v802 = vadd.f32 %v560, %v801
      %v803 = vpop.f32.mrb[0].mxu0
      %v804 = vadd.f32 %v562, %v803
      %v805 = vpop.f32.mrb[0].mxu0
      %v806 = vpop.f32.mrb[0].mxu0
      %807 = vdwg.mxu0
      %808 = vmatprep.subr.bf16.mxu0 %v706
      %809 = vmatpush1.bf16.msra.mxu0 %v705
      %810 = vmatprep.subr.bf16.mxu0 %v710
      %811 = vmatpush1.bf16.msra.mxu0 %v709
      %812 = vmatprep.subr.bf16.mxu0 %v714
      %813 = vmatpush1.bf16.msra.mxu0 %v713
      %814 = vmatprep.subr.bf16.mxu0 %v718
      %815 = vmatpush1.bf16.msra.mxu0 %v717
      %816 = vmatprep.subr.bf16.mxu0 %v722
      %817 = vmatpush1.bf16.msra.mxu0 %v721
      %818 = vmatprep.subr.bf16.mxu0 %v726
      %819 = vmatpush1.bf16.msra.mxu0 %v725
      %820 = vmatprep.subr.bf16.mxu0 %v730
      %821 = vmatpush1.bf16.msra.mxu0 %v729
      %822 = vmatprep.subr.bf16.mxu0 %v734
      %823 = vmatpush1.bf16.msra.mxu0 %v733
      %824 = vmatprep.subr.bf16.mxu0 0
      %825 = vmatpush1.bf16.msra.mxu0 0
      %826 = vmatprep.subr.bf16.mxu0 0
      %827 = vmatpush1.bf16.msra.mxu0 0
      %828 = vmatprep.subr.bf16.mxu0 0
      %829 = vmatpush1.bf16.msra.mxu0 0
      %830 = vmatprep.subr.bf16.mxu0 0
      %831 = vmatpush1.bf16.msra.mxu0 0
      %832 = vmatprep.subr.bf16.mxu0 0
      %833 = vmatpush1.bf16.msra.mxu0 0
      %834 = vmatprep.subr.bf16.mxu0 0
      %835 = vmatpush1.bf16.msra.mxu0 0
      %836 = vmatprep.subr.bf16.mxu0 0
      %837 = vmatpush1.bf16.msra.mxu0 0
      %838 = vmatprep.subr.bf16.mxu0 0
      %839 = vmatpush1.bf16.msra.mxu0 0
      %840 = vmatprep.mubr.bf16.mxu0 0
      %841 = vmatmul.mubr.bf16.gmra.mrb[0].mxu0 %v298
      %v842 = vpop.f32.mrb[0].mxu0
      %v843 = vadd.f32 %v601, %v842
      %v844 = vpop.f32.mrb[0].mxu0
      %v845 = vadd.f32 %v603, %v844
      %v846 = vpop.f32.mrb[0].mxu0
      %v847 = vpop.f32.mrb[0].mxu0
      %848 = vdwg.mxu0
      %v849 = vld [vmem:[%s285] sm:$0xf]
      %v851 = vlaneseq
      %v852 = vshrl.u32 %v851, 7
      %v853 = vsub.s32 0, %v852
      %v854 = vrot.slane %v849, %v853
      %v855 = vlaneseq
      %v856 = vshrl.u32 %v855, 7
      %v857 = vsub.s32 1, %v856
      %v858 = vrot.slane %v849, %v857
      %v859 = vlaneseq
      %v860 = vshrl.u32 %v859, 7
      %v861 = vsub.s32 2, %v860
      %v862 = vrot.slane %v849, %v861
      %v863 = vlaneseq
      %v864 = vshrl.u32 %v863, 7
      %v865 = vsub.s32 3, %v864
      %v866 = vrot.slane %v849, %v865
      %v871 = vadd.f32 %v802, %v854
      %v872 = vadd.f32 %v804, %v858
      %v873 = vadd.f32 %v843, %v862
      %v874 = vadd.f32 %v845, %v866
      %v875 = vxor.u32 %v871, 2147483648
      %v876 = vmul.f32 %v875, 1.442695
      %v877 = vpow.pop %v876
      %v878 = vadd.f32 %v877, 1.0
      %v879 = vrcp.pop %v878
      %v880 = vmul.f32 1.0, %v879
      %v881 = vxor.u32 %v872, 2147483648
      %v882 = vmul.f32 %v881, 1.442695
      %v883 = vpow.pop %v882
      %v884 = vadd.f32 %v883, 1.0
      %v885 = vrcp.pop %v884
      %v886 = vmul.f32 1.0, %v885
      %v887 = vtanh.pop %v873
      %v888 = vxor.u32 %v874, 2147483648
      %v889 = vmul.f32 %v888, 1.442695
      %v890 = vpow.pop %v889
      %v891 = vadd.f32 %v890, 1.0
      %v892 = vrcp.pop %v891
      %v893 = vmul.f32 1.0, %v892
      %v894 = vld [vmem:[#allocation3] sm:$0x3f]
      %v895 = vmul.f32 %v886, %v894
      %v896 = vmul.f32 %v880, %v887
      %v897 = vadd.f32 %v895, %v896
      %v898 = vtanh.pop %v897
      %v899 = vmul.f32 %v893, %v898
      %900 = vst [vmem:[#allocation3] sm:$0x3f] %v897
      %901 = vst [vmem:[#allocation2] sm:$0x3f] %v899
      %v902 = vld [vmem:[#allocation4] sm:$0x3f]
      %v903 = vadd.f32 %v902, %v899
      %904 = vst [vmem:[#allocation4] sm:$0x3f] %v903
      %p905 = scmp.eq.s32.totalorder %s20, 1
      // Predicated region
      $region41: #{_lambda_.10} parent=35 // pred_check
        %p906 = pneg %p905
      $region42: #{_lambda_.10} parent=35 // pred_check_branch
        %908 = sbr.rel (%p906) target = $region44
      $region43: #{_lambda_.10} parent=35 // pred_region
        %v909 = vld [vmem:[#allocation4] sm:$0x3f]
        %v910 = vmul.f32 %v909, 0.5
        %911 = vst [vmem:[%s289] sm:$0x3f] %v910
      $region44: #{_lambda_.10} parent=35 // pred_fallthru
        _
      %p912 = scmp.lt.s32.totalorder %s19, 1
      %s913 = scalar_select %p912, %s19, 1
      %s914 = smul.addr %s913, 8
      %s915 = scalar_lea.vmem %s4, %s914
      // Predicated region
      $region45: #{_lambda_.10} parent=35 // pred_check
        %p916 = pneg %p157
      $region46: #{_lambda_.10} parent=35 // pred_check_branch
        %918 = sbr.rel (%p916) target = $region48
      $region47: #{_lambda_.10} parent=35 // pred_region
        _
      $region48: #{_lambda_.10} parent=35 // pred_fallthru
        _
    $region36: #{_lambda_.10} parent=5 // pred_fallthru
      _
    %p919 = scmp.le.s32.totalorder 2, %s10
    // Predicated region
    $region49: #{_lambda_.10} parent=5 // pred_check
      %p920 = pneg %p919
    $region50: #{_lambda_.10} parent=5 // pred_check_branch
      %922 = sbr.rel (%p920) target = $region52
    $region51: #{_lambda_.10} parent=5 // pred_region
      %s923 = ssub.s32 %s10, 2
      // Predicated region
      $region53: #{_lambda_.10} parent=51 // pred_check
        %p924 = pneg %p163
      $region54: #{_lambda_.10} parent=51 // pred_check_branch
        %926 = sbr.rel (%p924) target = $region56
      $region55: #{_lambda_.10} parent=51 // pred_region
        %p927 = scmp.lt.s32.totalorder %s21, 1
        %s928 = scalar_select %p927, %s21, 1
        %s929 = smul.addr %s928, 8
        %s930 = scalar_lea.vmem %s4, %s929
      $region56: #{_lambda_.10} parent=51 // pred_fallthru
        _
    $region52: #{_lambda_.10} parent=5 // pred_fallthru
      _
  $region6: #{_lambda_.10} parent=0 // loop_footer
    %s14 = sadd.s32 1, %s10
  $region7: #{_lambda_.10} parent=0 // loop_footer_branch
    %9 = sbr.rel target = $region3
  $region8: #{_lambda_.10} parent=0 // loop_exit
    _

// kernel: _lambda_.11
$region0: #{_lambda_.11}
  #allocation0 [shape = 'u32[]', space=smem, size = 0x4, offset = 0x4, fixed_abs, tag = 'smem constant byte address 0x4 - core index']
  #allocation1 [shape = 'u32[144,128]{1,0:T(1,128)}', space=vmem, size = 0x12000, scoped, tag = 'internal scratch']
  %s0 = inlined_call_operand.vmem [shape: bf16[8,384], index: 0, kind: input, shape index: {}]
  %s1 = inlined_call_operand.vmem [shape: bf16[384,128], index: 1, kind: input, shape index: {}]
  %s2 = inlined_call_operand.vmem [shape: f32[1,128], index: 2, kind: input, shape index: {}]
  %s3 = inlined_call_operand.vmem [shape: f32[1,128], index: 3, kind: input, shape index: {}]
  %s4 = inlined_call_operand.vmem [shape: f32[8,128], index: 4, kind: output, shape index: {}]
  %s5 = sld [smem:[#allocation0]]
  $region26: #{_lambda_.11} parent=0
    _
  %s7 = ssub.s32 1, %s5
  %s8 = scalar_select 0, %s7, %s5
  // Predicated region
  $region2: #{_lambda_.11} parent=0 // pred_check
    _
  $region3: #{_lambda_.11} parent=0 // pred_check_branch
    %10 = sbr.rel (0) target = $region5
  $region4: #{_lambda_.11} parent=0 // pred_region
    _
  $region5: #{_lambda_.11} parent=0 // pred_fallthru
    _
  // Predicated region
  $region6: #{_lambda_.11} parent=0 // pred_check
    _
  $region7: #{_lambda_.11} parent=0 // pred_check_branch
    %12 = sbr.rel (0) target = $region9
  $region8: #{_lambda_.11} parent=0 // pred_region
    _
  $region9: #{_lambda_.11} parent=0 // pred_fallthru
    _
  // Predicated region
  $region10: #{_lambda_.11} parent=0 // pred_check
    _
  $region11: #{_lambda_.11} parent=0 // pred_check_branch
    %14 = sbr.rel (0) target = $region13
  $region12: #{_lambda_.11} parent=0 // pred_region
    _
  $region13: #{_lambda_.11} parent=0 // pred_fallthru
    _
  // Predicated region
  $region14: #{_lambda_.11} parent=0 // pred_check
    _
  $region15: #{_lambda_.11} parent=0 // pred_check_branch
    %16 = sbr.rel (0) target = $region17
  $region16: #{_lambda_.11} parent=0 // pred_region
    _
  $region17: #{_lambda_.11} parent=0 // pred_fallthru
    _
  %v18 = vld [vmem:[%s0] sm:$0xff]
  %v19 = vld [vmem:[%s0 + $0x8] sm:$0xf]
  %v20 = vld [vmem:[%s1] sm:$0xf]
  %v21 = vld [vmem:[%s1 + $0x4] sm:$0xf]
  %v22 = vld [vmem:[%s1 + $0x8] sm:$0xf]
  %v23 = vld [vmem:[%s1 + $0xc] sm:$0xf]
  %v24 = vld [vmem:[%s1 + $0x10] sm:$0xf]
  %v25 = vld [vmem:[%s1 + $0x14] sm:$0xf]
  %v26 = vld [vmem:[%s1 + $0x18] sm:$0xf]
  %v27 = vld [vmem:[%s1 + $0x1c] sm:$0xf]
  %v28 = vld [vmem:[%s1 + $0x20] sm:$0xf]
  %v29 = vld [vmem:[%s1 + $0x24] sm:$0xf]
  %v30 = vld [vmem:[%s1 + $0x28] sm:$0xf]
  %v31 = vld [vmem:[%s1 + $0x2c] sm:$0xf]
  %v32 = vld [vmem:[%s1 + $0x30] sm:$0xf]
  %v33 = vld [vmem:[%s1 + $0x34] sm:$0xf]
  %v34 = vld [vmem:[%s1 + $0x38] sm:$0xf]
  %v35 = vld [vmem:[%s1 + $0x3c] sm:$0xf]
  %v36 = vld [vmem:[%s1 + $0x40] sm:$0xf]
  %v37 = vld [vmem:[%s1 + $0x44] sm:$0xf]
  %v38 = vld [vmem:[%s1 + $0x48] sm:$0xf]
  %v39 = vld [vmem:[%s1 + $0x4c] sm:$0xf]
  %v40 = vld [vmem:[%s1 + $0x50] sm:$0xf]
  %v41 = vld [vmem:[%s1 + $0x54] sm:$0xf]
  %v42 = vld [vmem:[%s1 + $0x58] sm:$0xf]
  %v43 = vld [vmem:[%s1 + $0x5c] sm:$0xf]
  %v44 = vld [vmem:[%s1 + $0x60] sm:$0xf]
  %v45 = vld [vmem:[%s1 + $0x64] sm:$0xf]
  %v46 = vld [vmem:[%s1 + $0x68] sm:$0xf]
  %v47 = vld [vmem:[%s1 + $0x6c] sm:$0xf]
  %v48 = vld [vmem:[%s1 + $0x70] sm:$0xf]
  %v49 = vld [vmem:[%s1 + $0x74] sm:$0xf]
  %v50 = vld [vmem:[%s1 + $0x78] sm:$0xf]
  %v51 = vld [vmem:[%s1 + $0x7c] sm:$0xf]
  %v52 = vld [vmem:[%s1 + $0x80] sm:$0xf]
  %v53 = vld [vmem:[%s1 + $0x84] sm:$0xf]
  %v54 = vld [vmem:[%s1 + $0x88] sm:$0xf]
  %v55 = vld [vmem:[%s1 + $0x8c] sm:$0xf]
  %v56 = vld [vmem:[%s1 + $0x90] sm:$0xf]
  %v57 = vld [vmem:[%s1 + $0x94] sm:$0xf]
  %v58 = vld [vmem:[%s1 + $0x98] sm:$0xf]
  %v59 = vld [vmem:[%s1 + $0x9c] sm:$0xf]
  %v60 = vld [vmem:[%s1 + $0xa0] sm:$0xf]
  %v61 = vld [vmem:[%s1 + $0xa4] sm:$0xf]
  %v62 = vld [vmem:[%s1 + $0xa8] sm:$0xf]
  %v63 = vld [vmem:[%s1 + $0xac] sm:$0xf]
  %v64 = vld [vmem:[%s1 + $0xb0] sm:$0xf]
  %v65 = vld [vmem:[%s1 + $0xb4] sm:$0xf]
  %v66 = vld [vmem:[%s1 + $0xb8] sm:$0xf]
  %v67 = vld [vmem:[%s1 + $0xbc] sm:$0xf]
  %v70 = vunpack.c.l.b16 %v18
  %v71 = vunpack.c.h.b16 %v18
  %v72 = vunpack.c.l.b16 %v19
  %v73 = vpack.c.b16 %v70, %v70
  %v74 = vpack.c.b16 %v71, %v71
  %v75 = vpack.c.b16 %v72, %v72
  %v127 = vunpack.c.l.b16 %v20
  %v128 = vunpack.c.l.b16 %v21
  %v129 = vunpack.c.l.b16 %v22
  %v130 = vunpack.c.l.b16 %v23
  %v131 = vunpack.c.l.b16 %v24
  %v132 = vunpack.c.l.b16 %v25
  %v133 = vunpack.c.l.b16 %v26
  %v134 = vunpack.c.l.b16 %v27
  %v135 = vunpack.c.l.b16 %v28
  %v136 = vunpack.c.l.b16 %v29
  %v137 = vunpack.c.l.b16 %v30
  %v138 = vunpack.c.l.b16 %v31
  %v139 = vunpack.c.l.b16 %v32
  %v140 = vunpack.c.l.b16 %v33
  %v141 = vunpack.c.l.b16 %v34
  %v142 = vunpack.c.l.b16 %v35
  %v143 = vunpack.c.l.b16 %v36
  %v144 = vunpack.c.l.b16 %v37
  %v145 = vunpack.c.l.b16 %v38
  %v146 = vunpack.c.l.b16 %v39
  %v147 = vunpack.c.l.b16 %v40
  %v148 = vunpack.c.l.b16 %v41
  %v149 = vunpack.c.l.b16 %v42
  %v150 = vunpack.c.l.b16 %v43
  %v151 = vunpack.c.l.b16 %v44
  %v152 = vunpack.c.l.b16 %v45
  %v153 = vunpack.c.l.b16 %v46
  %v154 = vunpack.c.l.b16 %v47
  %v155 = vunpack.c.l.b16 %v48
  %v156 = vunpack.c.l.b16 %v49
  %v157 = vunpack.c.l.b16 %v50
  %v158 = vunpack.c.l.b16 %v51
  %v159 = vunpack.c.l.b16 %v52
  %v160 = vunpack.c.l.b16 %v53
  %v161 = vunpack.c.l.b16 %v54
  %v162 = vunpack.c.l.b16 %v55
  %v163 = vunpack.c.l.b16 %v56
  %v164 = vunpack.c.l.b16 %v57
  %v165 = vunpack.c.l.b16 %v58
  %v166 = vunpack.c.l.b16 %v59
  %v167 = vunpack.c.l.b16 %v60
  %v168 = vunpack.c.l.b16 %v61
  %v169 = vunpack.c.l.b16 %v62
  %v170 = vunpack.c.l.b16 %v63
  %v171 = vunpack.c.l.b16 %v64
  %v172 = vunpack.c.l.b16 %v65
  %v173 = vunpack.c.l.b16 %v66
  %v174 = vunpack.c.l.b16 %v67
  %v175 = vpack.c.b16 %v128, %v127
  %v176 = vpack.c.b16 %v130, %v129
  %v177 = vpack.c.b16 %v132, %v131
  %v178 = vpack.c.b16 %v134, %v133
  %v179 = vpack.c.b16 %v136, %v135
  %v180 = vpack.c.b16 %v138, %v137
  %v181 = vpack.c.b16 %v140, %v139
  %v182 = vpack.c.b16 %v142, %v141
  %v183 = vpack.c.b16 %v144, %v143
  %v184 = vpack.c.b16 %v146, %v145
  %v185 = vpack.c.b16 %v148, %v147
  %v186 = vpack.c.b16 %v150, %v149
  %v187 = vpack.c.b16 %v152, %v151
  %v188 = vpack.c.b16 %v154, %v153
  %v189 = vpack.c.b16 %v156, %v155
  %v190 = vpack.c.b16 %v158, %v157
  %v191 = vpack.c.b16 %v160, %v159
  %v192 = vpack.c.b16 %v162, %v161
  %v193 = vpack.c.b16 %v164, %v163
  %v194 = vpack.c.b16 %v166, %v165
  %v195 = vpack.c.b16 %v168, %v167
  %v196 = vpack.c.b16 %v170, %v169
  %v197 = vpack.c.b16 %v172, %v171
  %v198 = vpack.c.b16 %v174, %v173
  %223 = vmatprep.subr.bf16.mxu0 0
  %224 = vmatpush1.bf16.msra.mxu0 %v175
  %225 = vmatprep.subr.bf16.mxu0 0
  %226 = vmatpush1.bf16.msra.mxu0 %v176
  %227 = vmatprep.subr.bf16.mxu0 0
  %228 = vmatpush1.bf16.msra.mxu0 %v177
  %229 = vmatprep.subr.bf16.mxu0 0
  %230 = vmatpush1.bf16.msra.mxu0 %v178
  %231 = vmatprep.subr.bf16.mxu0 0
  %232 = vmatpush1.bf16.msra.mxu0 %v179
  %233 = vmatprep.subr.bf16.mxu0 0
  %234 = vmatpush1.bf16.msra.mxu0 %v180
  %235 = vmatprep.subr.bf16.mxu0 0
  %236 = vmatpush1.bf16.msra.mxu0 %v181
  %237 = vmatprep.subr.bf16.mxu0 0
  %238 = vmatpush1.bf16.msra.mxu0 %v182
  %239 = vmatprep.subr.bf16.mxu0 0
  %240 = vmatpush1.bf16.msra.mxu0 %v183
  %241 = vmatprep.subr.bf16.mxu0 0
  %242 = vmatpush1.bf16.msra.mxu0 %v184
  %243 = vmatprep.subr.bf16.mxu0 0
  %244 = vmatpush1.bf16.msra.mxu0 %v185
  %245 = vmatprep.subr.bf16.mxu0 0
  %246 = vmatpush1.bf16.msra.mxu0 %v186
  %247 = vmatprep.subr.bf16.mxu0 0
  %248 = vmatpush1.bf16.msra.mxu0 %v187
  %249 = vmatprep.subr.bf16.mxu0 0
  %250 = vmatpush1.bf16.msra.mxu0 %v188
  %251 = vmatprep.subr.bf16.mxu0 0
  %252 = vmatpush1.bf16.msra.mxu0 %v189
  %253 = vmatprep.subr.bf16.mxu0 0
  %254 = vmatpush1.bf16.msra.mxu0 %v190
  %255 = vmatprep.mubr.bf16.mxu0 %v74
  %256 = vmatmul.mubr.bf16.gmra.mrb[0].mxu0 %v73
  %v257 = vpop.f32.mrb[0].mxu0
  %v258 = vadd.f32 0.0, %v257
  %v259 = vpop.f32.mrb[0].mxu0
  %v260 = vpop.f32.mrb[0].mxu0
  %v261 = vpop.f32.mrb[0].mxu0
  %262 = vdwg.mxu0
  %263 = vmatprep.subr.bf16.mxu0 0
  %264 = vmatpush1.bf16.msra.mxu0 %v191
  %265 = vmatprep.subr.bf16.mxu0 0
  %266 = vmatpush1.bf16.msra.mxu0 %v192
  %267 = vmatprep.subr.bf16.mxu0 0
  %268 = vmatpush1.bf16.msra.mxu0 %v193
  %269 = vmatprep.subr.bf16.mxu0 0
  %270 = vmatpush1.bf16.msra.mxu0 %v194
  %271 = vmatprep.subr.bf16.mxu0 0
  %272 = vmatpush1.bf16.msra.mxu0 %v195
  %273 = vmatprep.subr.bf16.mxu0 0
  %274 = vmatpush1.bf16.msra.mxu0 %v196
  %275 = vmatprep.subr.bf16.mxu0 0
  %276 = vmatpush1.bf16.msra.mxu0 %v197
  %277 = vmatprep.subr.bf16.mxu0 0
  %278 = vmatpush1.bf16.msra.mxu0 %v198
  %279 = vmatprep.subr.bf16.mxu0 0
  %280 = vmatpush1.bf16.msra.mxu0 0
  %281 = vmatprep.subr.bf16.mxu0 0
  %282 = vmatpush1.bf16.msra.mxu0 0
  %283 = vmatprep.subr.bf16.mxu0 0
  %284 = vmatpush1.bf16.msra.mxu0 0
  %285 = vmatprep.subr.bf16.mxu0 0
  %286 = vmatpush1.bf16.msra.mxu0 0
  %287 = vmatprep.subr.bf16.mxu0 0
  %288 = vmatpush1.bf16.msra.mxu0 0
  %289 = vmatprep.subr.bf16.mxu0 0
  %290 = vmatpush1.bf16.msra.mxu0 0
  %291 = vmatprep.subr.bf16.mxu0 0
  %292 = vmatpush1.bf16.msra.mxu0 0
  %293 = vmatprep.subr.bf16.mxu0 0
  %294 = vmatpush1.bf16.msra.mxu0 0
  %295 = vmatprep.mubr.bf16.mxu0 0
  %296 = vmatmul.mubr.bf16.gmra.mrb[0].mxu0 %v75
  %v297 = vpop.f32.mrb[0].mxu0
  %v298 = vadd.f32 %v258, %v297
  %v299 = vpop.f32.mrb[0].mxu0
  %v300 = vpop.f32.mrb[0].mxu0
  %v301 = vpop.f32.mrb[0].mxu0
  %302 = vdwg.mxu0
  %v303 = vld [vmem:[%s2] sm:$0x1]
  %v305 = vlaneseq
  %v306 = vshrl.u32 %v305, 7
  %v307 = vsub.s32 0, %v306
  %v308 = vrot.slane %v303, %v307
  %v310 = vmul.f32 %v298, %v308
  %v311 = vld [vmem:[%s3] sm:$0x1]
  %v313 = vlaneseq
  %v314 = vshrl.u32 %v313, 7
  %v315 = vsub.s32 0, %v314
  %v316 = vrot.slane %v311, %v315
  %v318 = vadd.f32 %v310, %v316
  %319 = vst [vmem:[%s4] sm:$0xff] %v318
  // Predicated region
  $region18: #{_lambda_.11} parent=0 // pred_check
    _
  $region19: #{_lambda_.11} parent=0 // pred_check_branch
    %321 = sbr.rel (0) target = $region21
  $region20: #{_lambda_.11} parent=0 // pred_region
    _
  $region21: #{_lambda_.11} parent=0 // pred_fallthru
    _
  // Predicated region
  $region22: #{_lambda_.11} parent=0 // pred_check
    _
  $region23: #{_lambda_.11} parent=0 // pred_check_branch
    %323 = sbr.rel (0) target = $region25
  $region24: #{_lambda_.11} parent=0 // pred_region
    _
  $region25: #{_lambda_.11} parent=0 // pred_fallthru
    _

</llo_original>
